<compile_context>
chip_gen: v6e
topology: v6e:2x2x1
jax: 0.10.0
libtpu: 0.0.40
codegen_flags: <defaults>
</compile_context>

<pallas_src>
import functools

import jax
import jax.numpy as jnp
from jax import lax
from jax.experimental import pallas as pl
from jax.experimental.pallas import tpu as pltpu

BN_EPS = 1e-3
LANE = 128  # channel dims are lane-padded to a multiple of this


# ----------------------------------------------------------------------------
# small helpers
# ----------------------------------------------------------------------------
def _make_divisible(ch, divisor=8, min_ch=None):
    if min_ch is None:
        min_ch = divisor
    new_ch = max(min_ch, int(ch + divisor / 2) // divisor * divisor)
    if new_ch < 0.9 * ch:
        new_ch += divisor
    return new_ch


def _round_up(x, m):
    return (x + m - 1) // m * m


def _cp(c):
    return _round_up(c, LANE)


def _relu(x):
    return jnp.maximum(x, 0.0)


def _hardswish(x):
    return x * jnp.clip(x + 3.0, 0.0, 6.0) * (1.0 / 6.0)


def _hardsigmoid(x):
    return jnp.clip(x + 3.0, 0.0, 6.0) * (1.0 / 6.0)


def _pad_axis(x, axis, size):
    pad = size - x.shape[axis]
    if pad <= 0:
        return x
    widths = [(0, 0)] * x.ndim
    widths[axis] = (0, pad)
    return jnp.pad(x, widths)


def _phase_split(x):
    # (B, H, W, C) -> 4 stride-2 spatial phases, index = ph*2 + pw.
    return [x[:, ph::2, pw::2, :] for ph in (0, 1) for pw in (0, 1)]


_COMPILER_PARAMS = pltpu.CompilerParams(
    dimension_semantics=("parallel",),
    vmem_limit_bytes=32 * 1024 * 1024,
)


# ----------------------------------------------------------------------------
# Pallas kernels
# ----------------------------------------------------------------------------
def _stem_kernel(x00_ref, x01_ref, x10_ref, x11_ref, w_ref, b_ref, o_ref,
                 xpad_ref, *, k):
    """Fused 3x3 stride-2 conv + folded BN + hardswish for one image.

    Phase inputs: (1, H/2, W/2, Cin_p) bf16; w: (k*k, Cin_p, Cout_p) bf16;
    b: (1, Cout_p) f32; xpad scratch: (4, H/2+2, W/2+2, Cin_p) f32.
    """
    p = (k - 1) // 2
    _, hh, wh, cin = xpad_ref.shape
    hh, wh = hh - 2, wh - 2          # per-phase interior (halo of 1 on each side)
    ho, wo = hh, wh                  # 'same'-padded stride-2 output size
    cout = o_ref.shape[-1]

    xpad_ref[...] = jnp.zeros_like(xpad_ref)
    phases = (x00_ref, x01_ref, x10_ref, x11_ref)
    for idx in range(4):
        xpad_ref[idx, pl.ds(1, hh), pl.ds(1, wh), :] = (
            phases[idx][0].astype(jnp.float32))

    acc = jnp.zeros((ho * wo, cout), jnp.float32)
    for kh in range(k):
        for kw in range(k):
            ph, pw = (kh - p) % 2, (kw - p) % 2
            oh = (kh - p - ph) // 2 + 1
            ow = (kw - p - pw) // 2 + 1
            tap = xpad_ref[ph * 2 + pw, pl.ds(oh, ho), pl.ds(ow, wo), :]
            acc = acc + jnp.dot(
                tap.reshape(ho * wo, cin).astype(jnp.bfloat16),
                w_ref[kh * k + kw], preferred_element_type=jnp.float32)
    y = _hardswish(acc + b_ref[...])
    o_ref[0] = y.reshape(ho, wo, cout).astype(o_ref.dtype)


def _block_kernel(*refs, k, stride, has_expand, use_se, use_res, use_hs):
    """Fused inverted-residual block for one image.

    refs = (x phases..., [we, be], wdw, bdw, [w1, b1, w2, b2], wp, bp,
            out, xpad_scratch)
    The expanded activation stays in the VMEM scratch; only the small block
    input and output touch HBM.
    """
    act = _hardswish if use_hs else _relu
    p = (k - 1) // 2

    xpad_ref = refs[-1]
    o_ref = refs[-2]
    it = iter(refs[:-2])
    n_phase = 4 if stride == 2 else 1
    x_refs = [next(it) for _ in range(n_phase)]
    if has_expand:
        we_ref, be_ref = next(it), next(it)
    wdw_ref, bdw_ref = next(it), next(it)
    if use_se:
        w1_ref, b1_ref, w2_ref, b2_ref = next(it), next(it), next(it), next(it)
    wp_ref, bp_ref = next(it), next(it)

    _, hpad, wpad, cexp = xpad_ref.shape
    halo = p if stride == 1 else 1
    hh, wh = hpad - 2 * halo, wpad - 2 * halo       # per-phase spatial extent
    ho, wo = o_ref.shape[1], o_ref.shape[2]
    cin = x_refs[0].shape[-1]

    # ---- expand 1x1 (+BN+act), written straight into the padded scratch ----
    xpad_ref[...] = jnp.zeros_like(xpad_ref)
    for idx in range(n_phase):
        xph = x_refs[idx][0]                        # (hh, wh, cin) bf16
        if has_expand:
            e = jnp.dot(xph.reshape(hh * wh, cin), we_ref[...],
                        preferred_element_type=jnp.float32) + be_ref[...]
            e = act(e).reshape(hh, wh, cexp)
        else:
            e = xph.astype(jnp.float32)
        xpad_ref[idx, pl.ds(halo, hh), pl.ds(halo, wh), :] = e

    # ---- depthwise KxK (+BN+act); f32 MAC on the VPU, no tap stack ----
    acc = jnp.zeros((ho, wo, cexp), jnp.float32)
    for kh in range(k):
        for kw in range(k):
            if stride == 1:
                tap = xpad_ref[0, pl.ds(kh, ho), pl.ds(kw, wo), :]
            else:
                ph, pw = (kh - p) % 2, (kw - p) % 2
                oh = (kh - p - ph) // 2 + halo
                ow = (kw - p - pw) // 2 + halo
                tap = xpad_ref[ph * 2 + pw, pl.ds(oh, ho), pl.ds(ow, wo), :]
            acc = acc + tap * wdw_ref[kh * k + kw]
    dw = act(acc + bdw_ref[...])                    # (ho, wo, cexp) f32

    # ---- fused squeeze-excitation gate (tiny M=1 matmuls) ----
    if use_se:
        pooled = jnp.sum(jnp.sum(dw, axis=0), axis=0, keepdims=True)
        pooled = pooled * (1.0 / (ho * wo))         # (1, cexp) f32
        s = jnp.dot(pooled.astype(jnp.bfloat16), w1_ref[...],
                    preferred_element_type=jnp.float32) + b1_ref[...]
        s = _relu(s)
        s = jnp.dot(s.astype(jnp.bfloat16), w2_ref[...],
                    preferred_element_type=jnp.float32) + b2_ref[...]
        s = _hardsigmoid(s)
        dw = dw * s

    # ---- project 1x1 (+BN) and residual add (f32), then bf16 store ----
    g = dw.reshape(ho * wo, cexp).astype(jnp.bfloat16)
    y = jnp.dot(g, wp_ref[...], preferred_element_type=jnp.float32) + bp_ref[...]
    if use_res:
        y = y + x_refs[0][0].reshape(ho * wo, cin).astype(jnp.float32)
    o_ref[0] = y.reshape(ho, wo, y.shape[-1]).astype(o_ref.dtype)


def _head_kernel(x_ref, wl_ref, bl_ref, w1_ref, b1_ref, w2_ref, b2_ref, o_ref,
                 *, hw):
    """Fused lastconv 1x1 + hardswish + avgpool + Linear + hardswish + Linear."""
    y = jnp.dot(x_ref[0], wl_ref[...],
                preferred_element_type=jnp.float32) + bl_ref[...]
    y = _hardswish(y)                               # (HW, Clast_p) f32
    pooled = jnp.sum(y, axis=0, keepdims=True) * (1.0 / hw)
    h = jnp.dot(pooled.astype(jnp.bfloat16), w1_ref[...],
                preferred_element_type=jnp.float32) + b1_ref[...]
    h = _hardswish(h)
    # TODO(synk): Dropout(p=0.2) is identity at inference.
    o = jnp.dot(h.astype(jnp.bfloat16), w2_ref[...],
                preferred_element_type=jnp.float32) + b2_ref[...]
    o_ref[0] = o.astype(o_ref.dtype)


# ----------------------------------------------------------------------------
# Pallas wrappers
# ----------------------------------------------------------------------------
def stem_conv(x, w, b):
    B, H, W, cin = x.shape
    k = 3
    hh, wh = H // 2, W // 2
    cout = w.shape[-1]
    phases = _phase_split(x)
    return pl.pallas_call(
        functools.partial(_stem_kernel, k=k),
        out_shape=jax.ShapeDtypeStruct((B, hh, wh, cout), jnp.bfloat16),
        grid_spec=pltpu.PrefetchScalarGridSpec(
            num_scalar_prefetch=0,
            grid=(B,),
            in_specs=[pl.BlockSpec((1, hh, wh, cin), lambda i: (i, 0, 0, 0))] * 4
            + [pl.BlockSpec((k * k, cin, cout), lambda i: (0, 0, 0)),
               pl.BlockSpec((1, cout), lambda i: (0, 0))],
            out_specs=pl.BlockSpec((1, hh, wh, cout), lambda i: (i, 0, 0, 0)),
            scratch_shapes=[pltpu.VMEM((4, hh + 2, wh + 2, cin), jnp.float32)],
        ),
        compiler_params=_COMPILER_PARAMS,
    )(*phases, w, b)


def inverted_residual(x, blk):
    cnf = blk["cfg"]
    B, H, W, cin = x.shape
    k, stride = cnf.kernel, cnf.stride
    p = (k - 1) // 2
    has_expand = "expand" in blk
    use_se = "se" in blk
    use_res = (stride == 1 and cnf.input_c == cnf.out_c)
    cexp = blk["dw"][0].shape[-1]
    cout = blk["project"][0].shape[-1]

    if stride == 2:
        assert H % 2 == 0 and W % 2 == 0  # TODO(synk): odd spatial stride-2 sizes
        xs = _phase_split(x)
        hh, wh, halo = H // 2, W // 2, 1
    else:
        xs = [x]
        hh, wh, halo = H, W, p
    ho = (H + 2 * p - k) // stride + 1
    wo = (W + 2 * p - k) // stride + 1

    inputs = list(xs)
    in_specs = [pl.BlockSpec((1, hh, wh, cin), lambda i: (i, 0, 0, 0))] * len(xs)
    if has_expand:
        we, be = blk["expand"]
        inputs += [we, be]
        in_specs += [pl.BlockSpec(we.shape, lambda i: (0, 0)),
                     pl.BlockSpec(be.shape, lambda i: (0, 0))]
    wdw, bdw = blk["dw"]
    inputs += [wdw, bdw]
    in_specs += [pl.BlockSpec(wdw.shape, lambda i: (0, 0, 0)),
                 pl.BlockSpec(bdw.shape, lambda i: (0, 0))]
    if use_se:
        w1, b1, w2, b2 = blk["se"]
        inputs += [w1, b1, w2, b2]
        in_specs += [pl.BlockSpec(w1.shape, lambda i: (0, 0)),
                     pl.BlockSpec(b1.shape, lambda i: (0, 0)),
                     pl.BlockSpec(w2.shape, lambda i: (0, 0)),
                     pl.BlockSpec(b2.shape, lambda i: (0, 0))]
    wp, bp = blk["project"]
    inputs += [wp, bp]
    in_specs += [pl.BlockSpec(wp.shape, lambda i: (0, 0)),
                 pl.BlockSpec(bp.shape, lambda i: (0, 0))]

    kernel = functools.partial(
        _block_kernel, k=k, stride=stride, has_expand=has_expand,
        use_se=use_se, use_res=use_res, use_hs=cnf.use_hs)
    return pl.pallas_call(
        kernel,
        out_shape=jax.ShapeDtypeStruct((B, ho, wo, cout), jnp.bfloat16),
        grid_spec=pltpu.PrefetchScalarGridSpec(
            num_scalar_prefetch=0,
            grid=(B,),
            in_specs=in_specs,
            out_specs=pl.BlockSpec((1, ho, wo, cout), lambda i: (i, 0, 0, 0)),
            scratch_shapes=[pltpu.VMEM(
                (4 if stride == 2 else 1, hh + 2 * halo, wh + 2 * halo, cexp),
                jnp.float32)],
        ),
        compiler_params=_COMPILER_PARAMS,
    )(*inputs)


def classifier_head(x, lastconv, fc1, fc2):
    B, H, W, c = x.shape
    hw = H * W
    wl, bl = lastconv
    w1, b1 = fc1
    w2, b2 = fc2
    ncls = w2.shape[-1]
    x3 = x.reshape(B, hw, c)
    out = pl.pallas_call(
        functools.partial(_head_kernel, hw=hw),
        out_shape=jax.ShapeDtypeStruct((B, 1, ncls), jnp.float32),
        grid_spec=pltpu.PrefetchScalarGridSpec(
            num_scalar_prefetch=0,
            grid=(B,),
            in_specs=[pl.BlockSpec((1, hw, c), lambda i: (i, 0, 0)),
                      pl.BlockSpec(wl.shape, lambda i: (0, 0)),
                      pl.BlockSpec(bl.shape, lambda i: (0, 0)),
                      pl.BlockSpec(w1.shape, lambda i: (0, 0)),
                      pl.BlockSpec(b1.shape, lambda i: (0, 0)),
                      pl.BlockSpec(w2.shape, lambda i: (0, 0)),
                      pl.BlockSpec(b2.shape, lambda i: (0, 0))],
            out_specs=pl.BlockSpec((1, 1, ncls), lambda i: (i, 0, 0)),
        ),
        compiler_params=_COMPILER_PARAMS,
    )(x3, wl, bl, w1, b1, w2, b2)
    return out.reshape(B, ncls)


def mobilenet_v3_forward(pp, x_nchw):
    """Pallas forward pass on padded/bf16 params; returns (B, num_classes) f32."""
    x = jnp.transpose(x_nchw, (0, 2, 3, 1)).astype(jnp.bfloat16)
    x = _pad_axis(x, 3, _cp(x.shape[3]))        # lane-pad channels once
    w, b = pp["stem"]
    x = stem_conv(x, w, b)
    for blk in pp["blocks"]:
        x = inverted_residual(x, blk)
    logits = classifier_head(x, pp["lastconv"], pp["fc1"], pp["fc2"])
    return logits[:, :pp["num_classes"]]


# ----------------------------------------------------------------------------
# Model definition / parameters (mirrors the PyTorch MobileNetV3 constructor)
# ----------------------------------------------------------------------------
class BneckCfg:
    def __init__(self, input_c, kernel, expanded_c, out_c, use_se, activation,
                 stride, width_multi=1.0):
        self.input_c = _make_divisible(input_c * width_multi, 8)
        self.kernel = kernel
        self.expanded_c = _make_divisible(expanded_c * width_multi, 8)
        self.out_c = _make_divisible(out_c * width_multi, 8)
        self.use_se = use_se
        self.use_hs = activation == "HS"
        self.stride = stride


def _fold_bn(key, w, c_out):
    """Synthesize BN stats and fold into (w, b); BN channel is the LAST axis."""
    k1, k2, k3, k4 = jax.random.split(key, 4)
    gamma = 1.0 + 0.1 * jax.random.normal(k1, (c_out,), jnp.float32)
    beta = 0.05 * jax.random.normal(k2, (c_out,), jnp.float32)
    mean = 0.05 * jax.random.normal(k3, (c_out,), jnp.float32)
    var = 1.0 + 0.1 * jax.random.uniform(k4, (c_out,), jnp.float32)
    scale = gamma * lax.rsqrt(var + BN_EPS)
    return w * scale, beta - mean * scale


def _conv_w(key, shape, fan_out):
    return jax.random.normal(key, shape, jnp.float32) * (2.0 / fan_out) ** 0.5


def _lin_w(key, shape):
    return jax.random.normal(key, shape, jnp.float32) * (1.0 / shape[0]) ** 0.5


def init_params(key, cfgs, input_channel, last_channel, num_classes):
    """Unpadded f32 parameters with BatchNorm folded in (reference layout)."""
    keys = iter(jax.random.split(key, 256))
    p = {"num_classes": num_classes}

    first_c = cfgs[0].input_c
    w = _conv_w(next(keys), (3, 3, input_channel, first_c), 9 * first_c)
    p["stem"] = _fold_bn(next(keys), w, first_c)

    blocks = []
    for cnf in cfgs:
        blk = {"cfg": cnf}
        if cnf.expanded_c != cnf.input_c:
            w = _conv_w(next(keys), (cnf.input_c, cnf.expanded_c), cnf.expanded_c)
            blk["expand"] = _fold_bn(next(keys), w, cnf.expanded_c)
        w = _conv_w(next(keys), (cnf.kernel, cnf.kernel, cnf.expanded_c),
                    cnf.kernel * cnf.kernel)
        blk["dw"] = _fold_bn(next(keys), w, cnf.expanded_c)
        if cnf.use_se:
            c = cnf.expanded_c
            cs = _make_divisible(c // 4, 8)
            blk["se"] = (
                _conv_w(next(keys), (c, cs), cs), jnp.zeros((cs,), jnp.float32),
                _conv_w(next(keys), (cs, c), c), jnp.zeros((c,), jnp.float32),
            )
        w = _conv_w(next(keys), (cnf.expanded_c, cnf.out_c), cnf.out_c)
        blk["project"] = _fold_bn(next(keys), w, cnf.out_c)
        blocks.append(blk)
    p["blocks"] = blocks

    last_in = cfgs[-1].out_c
    last_out = 6 * last_in
    w = _conv_w(next(keys), (last_in, last_out), last_out)
    p["lastconv"] = _fold_bn(next(keys), w, last_out)
    p["fc1"] = (_lin_w(next(keys), (last_out, last_channel)),
                jnp.zeros((last_channel,), jnp.float32))
    p["fc2"] = (_lin_w(next(keys), (last_channel, num_classes)),
                jnp.zeros((num_classes,), jnp.float32))
    return p


def _prep_mm(w, b):
    """(K, N) weight + (N,) bias -> lane-padded bf16 weight, (1, Np) f32 bias."""
    kp, np_ = _cp(w.shape[0]), _cp(w.shape[1])
    w = _pad_axis(_pad_axis(w, 0, kp), 1, np_).astype(jnp.bfloat16)
    b = _pad_axis(b, 0, np_).reshape(1, np_).astype(jnp.float32)
    return w, b


def prepare_params(params):
    """Pad channel dims to multiples of 128 and pre-cast MXU weights to bf16."""
    pp = {"num_classes": params["num_classes"]}
    w, b = params["stem"]
    k, _, cin, cout = w.shape
    cin_p, cout_p = _cp(cin), _cp(cout)
    w = _pad_axis(_pad_axis(w, 2, cin_p), 3, cout_p)
    pp["stem"] = (w.reshape(k * k, cin_p, cout_p).astype(jnp.bfloat16),
                  _pad_axis(b, 0, cout_p).reshape(1, cout_p).astype(jnp.float32))

    blocks = []
    for blk in params["blocks"]:
        nb = {"cfg": blk["cfg"]}
        if "expand" in blk:
            nb["expand"] = _prep_mm(*blk["expand"])
        wdw, bdw = blk["dw"]
        kk = wdw.shape[0]
        cexp_p = _cp(wdw.shape[2])
        nb["dw"] = (_pad_axis(wdw, 2, cexp_p).reshape(kk * kk, 1, cexp_p)
                    .astype(jnp.float32),
                    _pad_axis(bdw, 0, cexp_p).reshape(1, cexp_p)
                    .astype(jnp.float32))
        if "se" in blk:
            w1, b1, w2, b2 = blk["se"]
            nb["se"] = _prep_mm(w1, b1) + _prep_mm(w2, b2)
        nb["project"] = _prep_mm(*blk["project"])
        blocks.append(nb)
    pp["blocks"] = blocks
    pp["lastconv"] = _prep_mm(*params["lastconv"])
    pp["fc1"] = _prep_mm(*params["fc1"])
    pp["fc2"] = _prep_mm(*params["fc2"])
    return pp


# ----------------------------------------------------------------------------
# pure-JAX reference (same bf16-storage / f32-accumulate boundaries)
# ----------------------------------------------------------------------------
def _ref_forward(params, x_nchw):
    dn = ("NHWC", "HWIO", "NHWC")
    bf = jnp.bfloat16

    def pw(x2, w, b):
        return jnp.dot(x2.astype(bf), w.astype(bf),
                       preferred_element_type=jnp.float32) + b

    x = jnp.transpose(x_nchw, (0, 2, 3, 1)).astype(bf)
    w, b = params["stem"]
    x = _hardswish(lax.conv_general_dilated(
        x, w.astype(bf), (2, 2), ((1, 1), (1, 1)),
        dimension_numbers=dn, preferred_element_type=jnp.float32) + b)
    x = x.astype(bf)

    for blk in params["blocks"]:
        cnf = blk["cfg"]
        act = _hardswish if cnf.use_hs else _relu
        B, H, W, _ = x.shape
        if "expand" in blk:
            we, be = blk["expand"]
            y = act(pw(x.reshape(-1, cnf.input_c), we, be)).reshape(B, H, W, -1)
        else:
            y = x.astype(jnp.float32)
        wdw, bdw = blk["dw"]
        k, p, c = cnf.kernel, (cnf.kernel - 1) // 2, cnf.expanded_c
        y = act(lax.conv_general_dilated(
            y, wdw.reshape(k, k, 1, c), (cnf.stride, cnf.stride),
            ((p, p), (p, p)), dimension_numbers=dn, feature_group_count=c,
            preferred_element_type=jnp.float32) + bdw)
        if cnf.use_se:
            w1, b1, w2, b2 = blk["se"]
            pooled = jnp.mean(y, axis=(1, 2))
            s = _relu(pw(pooled, w1, b1))
            s = _hardsigmoid(pw(s, w2, b2))
            y = y * s[:, None, None, :]
        wp, bp = blk["project"]
        Ho, Wo = y.shape[1], y.shape[2]
        y = pw(y.reshape(-1, c), wp, bp).reshape(B, Ho, Wo, -1)
        if cnf.stride == 1 and cnf.input_c == cnf.out_c:
            y = y + x.astype(jnp.float32)
        x = y.astype(bf)

    wl, bl = params["lastconv"]
    B, H, W, c = x.shape
    y = _hardswish(pw(x.reshape(-1, c), wl, bl)).reshape(B, H * W, -1)
    pooled = jnp.mean(y, axis=1)
    w1, b1 = params["fc1"]
    w2, b2 = params["fc2"]
    h = _hardswish(pw(pooled, w1, b1))
    return pw(h, w2, b2)


if __name__ == "__main__":
    key = jax.random.PRNGKey(0)
    k_x, k_p = jax.random.split(key)

    B, C_in, H, W = 2, 3, 32, 32
    num_classes = 10
    last_channel = 128

    # Small MobileNetV3-small-style inverted residual setting
    # (input_c, kernel, expanded_c, out_c, use_se, activation, stride).
    cfgs = [
        BneckCfg(16, 3, 16, 16, True, "RE", 2),
        BneckCfg(16, 3, 72, 24, False, "RE", 2),
        BneckCfg(24, 3, 88, 24, False, "RE", 1),
        BneckCfg(24, 5, 96, 40, True, "HS", 2),
    ]

    x = jax.random.normal(k_x, (B, C_in, H, W), jnp.float32)
    params = init_params(k_p, cfgs, C_in, last_channel, num_classes)
    pallas_params = prepare_params(params)

    out = jax.block_until_ready(mobilenet_v3_forward(pallas_params, x))
    ref = jax.block_until_ready(_ref_forward(params, x))

    assert out.shape == (B, num_classes), out.shape
    err = float(jnp.max(jnp.abs(out - ref)))
    assert jnp.allclose(out, ref, atol=5e-3, rtol=5e-3), err
    print("KERNEL_OK")
</pallas_src>

<mosaic_0001>
module attributes {stable_mosaic.version = 11 : i64} {
  func.func @_stem_kernel(%arg0: i32, %arg1: memref<1x16x16x128xbf16, #tpu.memory_space<vmem>>, %arg2: memref<1x16x16x128xbf16, #tpu.memory_space<vmem>>, %arg3: memref<1x16x16x128xbf16, #tpu.memory_space<vmem>>, %arg4: memref<1x16x16x128xbf16, #tpu.memory_space<vmem>>, %arg5: memref<9x128x128xbf16, #tpu.memory_space<vmem>>, %arg6: memref<1x128xf32, #tpu.memory_space<vmem>>, %arg7: memref<1x16x16x128xbf16, #tpu.memory_space<vmem>>, %arg8: memref<4x18x18x128xf32, #tpu.memory_space<vmem>>) attributes {dimension_semantics = [#tpu.dimension_semantics<parallel>], iteration_bounds = array<i64: 2>, scalar_prefetch = 0 : i64, scratch_operands = 1 : i64, tpu.core_type = #tpu.core_type<tc>, window_params = [{transform_indices = @transform_0, window_bounds = array<i64: 1, 16, 16, 128>}, {transform_indices = @transform_1, window_bounds = array<i64: 1, 16, 16, 128>}, {transform_indices = @transform_2, window_bounds = array<i64: 1, 16, 16, 128>}, {transform_indices = @transform_3, window_bounds = array<i64: 1, 16, 16, 128>}, {pipeline_mode = #tpu.pipeline_mode<synchronous>, transform_indices = @transform_4, window_bounds = array<i64: 9, 128, 128>}, {pipeline_mode = #tpu.pipeline_mode<synchronous>, transform_indices = @transform_5, window_bounds = array<i64: 1, 128>}, {transform_indices = @transform_6, window_bounds = array<i64: 1, 16, 16, 128>}]} {
    %cst = arith.constant 0.000000e+00 : f32
    %0 = vector.broadcast %cst : f32 to vector<4x18x18x128xf32>
    %c0 = arith.constant 0 : index
    %c0_0 = arith.constant 0 : index
    %c0_1 = arith.constant 0 : index
    %c0_2 = arith.constant 0 : index
    %1 = vector.load %arg8[%c0, %c0_0, %c0_1, %c0_2] : memref<4x18x18x128xf32, #tpu.memory_space<vmem>>, vector<4x18x18x128xf32>
    tpu.vector_store %arg8[%c0, %c0_0, %c0_1, %c0_2], %0 {strides = array<i32>} : memref<4x18x18x128xf32, #tpu.memory_space<vmem>>, vector<4x18x18x128xf32>,
    %c0_3 = arith.constant 0 : index
    %c0_4 = arith.constant 0 : index
    %c0_5 = arith.constant 0 : index
    %c0_6 = arith.constant 0 : index
    %2 = vector.load %arg1[%c0_3, %c0_4, %c0_5, %c0_6] : memref<1x16x16x128xbf16, #tpu.memory_space<vmem>>, vector<1x16x16x128xbf16>
    %3 = vector.shape_cast %2 : vector<1x16x16x128xbf16> to vector<16x16x128xbf16>
    %4 = arith.extf %3 : vector<16x16x128xbf16> to vector<16x16x128xf32>
    %c0_7 = arith.constant 0 : index
    %c1 = arith.constant 1 : index
    %c1_8 = arith.constant 1 : index
    %c0_9 = arith.constant 0 : index
    %5 = vector.load %arg8[%c0_7, %c1, %c1_8, %c0_9] : memref<4x18x18x128xf32, #tpu.memory_space<vmem>>, vector<1x16x16x128xf32>
    %6 = vector.shape_cast %5 : vector<1x16x16x128xf32> to vector<16x16x128xf32>
    %7 = vector.shape_cast %4 : vector<16x16x128xf32> to vector<1x16x16x128xf32>
    tpu.vector_store %arg8[%c0_7, %c1, %c1_8, %c0_9], %7 {strides = array<i32>} : memref<4x18x18x128xf32, #tpu.memory_space<vmem>>, vector<1x16x16x128xf32>,
    %c0_10 = arith.constant 0 : index
    %c0_11 = arith.constant 0 : index
    %c0_12 = arith.constant 0 : index
    %c0_13 = arith.constant 0 : index
    %8 = vector.load %arg2[%c0_10, %c0_11, %c0_12, %c0_13] : memref<1x16x16x128xbf16, #tpu.memory_space<vmem>>, vector<1x16x16x128xbf16>
    %9 = vector.shape_cast %8 : vector<1x16x16x128xbf16> to vector<16x16x128xbf16>
    %10 = arith.extf %9 : vector<16x16x128xbf16> to vector<16x16x128xf32>
    %c1_14 = arith.constant 1 : index
    %c1_15 = arith.constant 1 : index
    %c1_16 = arith.constant 1 : index
    %c0_17 = arith.constant 0 : index
    %11 = vector.load %arg8[%c1_14, %c1_15, %c1_16, %c0_17] : memref<4x18x18x128xf32, #tpu.memory_space<vmem>>, vector<1x16x16x128xf32>
    %12 = vector.shape_cast %11 : vector<1x16x16x128xf32> to vector<16x16x128xf32>
    %13 = vector.shape_cast %10 : vector<16x16x128xf32> to vector<1x16x16x128xf32>
    tpu.vector_store %arg8[%c1_14, %c1_15, %c1_16, %c0_17], %13 {strides = array<i32>} : memref<4x18x18x128xf32, #tpu.memory_space<vmem>>, vector<1x16x16x128xf32>,
    %c0_18 = arith.constant 0 : index
    %c0_19 = arith.constant 0 : index
    %c0_20 = arith.constant 0 : index
    %c0_21 = arith.constant 0 : index
    %14 = vector.load %arg3[%c0_18, %c0_19, %c0_20, %c0_21] : memref<1x16x16x128xbf16, #tpu.memory_space<vmem>>, vector<1x16x16x128xbf16>
    %15 = vector.shape_cast %14 : vector<1x16x16x128xbf16> to vector<16x16x128xbf16>
    %16 = arith.extf %15 : vector<16x16x128xbf16> to vector<16x16x128xf32>
    %c2 = arith.constant 2 : index
    %c1_22 = arith.constant 1 : index
    %c1_23 = arith.constant 1 : index
    %c0_24 = arith.constant 0 : index
    %17 = vector.load %arg8[%c2, %c1_22, %c1_23, %c0_24] : memref<4x18x18x128xf32, #tpu.memory_space<vmem>>, vector<1x16x16x128xf32>
    %18 = vector.shape_cast %17 : vector<1x16x16x128xf32> to vector<16x16x128xf32>
    %19 = vector.shape_cast %16 : vector<16x16x128xf32> to vector<1x16x16x128xf32>
    tpu.vector_store %arg8[%c2, %c1_22, %c1_23, %c0_24], %19 {strides = array<i32>} : memref<4x18x18x128xf32, #tpu.memory_space<vmem>>, vector<1x16x16x128xf32>,
    %c0_25 = arith.constant 0 : index
    %c0_26 = arith.constant 0 : index
    %c0_27 = arith.constant 0 : index
    %c0_28 = arith.constant 0 : index
    %20 = vector.load %arg4[%c0_25, %c0_26, %c0_27, %c0_28] : memref<1x16x16x128xbf16, #tpu.memory_space<vmem>>, vector<1x16x16x128xbf16>
    %21 = vector.shape_cast %20 : vector<1x16x16x128xbf16> to vector<16x16x128xbf16>
    %22 = arith.extf %21 : vector<16x16x128xbf16> to vector<16x16x128xf32>
    %c3 = arith.constant 3 : index
    %c1_29 = arith.constant 1 : index
    %c1_30 = arith.constant 1 : index
    %c0_31 = arith.constant 0 : index
    %23 = vector.load %arg8[%c3, %c1_29, %c1_30, %c0_31] : memref<4x18x18x128xf32, #tpu.memory_space<vmem>>, vector<1x16x16x128xf32>
    %24 = vector.shape_cast %23 : vector<1x16x16x128xf32> to vector<16x16x128xf32>
    %25 = vector.shape_cast %22 : vector<16x16x128xf32> to vector<1x16x16x128xf32>
    tpu.vector_store %arg8[%c3, %c1_29, %c1_30, %c0_31], %25 {strides = array<i32>} : memref<4x18x18x128xf32, #tpu.memory_space<vmem>>, vector<1x16x16x128xf32>,
    %cst_32 = arith.constant 0.000000e+00 : f32
    %26 = vector.broadcast %cst_32 : f32 to vector<256x128xf32>
    %c3_33 = arith.constant 3 : index
    %c0_34 = arith.constant 0 : index
    %c0_35 = arith.constant 0 : index
    %c0_36 = arith.constant 0 : index
    %27 = vector.load %arg8[%c3_33, %c0_34, %c0_35, %c0_36] : memref<4x18x18x128xf32, #tpu.memory_space<vmem>>, vector<1x16x16x128xf32>
    %28 = vector.shape_cast %27 : vector<1x16x16x128xf32> to vector<16x16x128xf32>
    %29 = vector.shape_cast %28 : vector<16x16x128xf32> to vector<256x128xf32>
    %30 = arith.truncf %29 : vector<256x128xf32> to vector<256x128xbf16>
    %c0_37 = arith.constant 0 : index
    %c0_38 = arith.constant 0 : index
    %c0_39 = arith.constant 0 : index
    %31 = vector.load %arg5[%c0_37, %c0_38, %c0_39] : memref<9x128x128xbf16, #tpu.memory_space<vmem>>, vector<1x128x128xbf16>
    %32 = vector.shape_cast %31 : vector<1x128x128xbf16> to vector<128x128xbf16>
    %cst_40 = arith.constant dense<0.000000e+00> : vector<256x128xf32>
    %33 = tpu.matmul %30, %32, %cst_40 {dimension_numbers = #tpu.dot_dimension_numbers<[1], [0], [0], [1], [0, 0, 1, 1], [], []>} : vector<256x128xbf16>, vector<128x128xbf16>, vector<256x128xf32> -> vector<256x128xf32>
    %34 = arith.addf %26, %33 : vector<256x128xf32>
    %c2_41 = arith.constant 2 : index
    %c0_42 = arith.constant 0 : index
    %c1_43 = arith.constant 1 : index
    %c0_44 = arith.constant 0 : index
    %35 = vector.load %arg8[%c2_41, %c0_42, %c1_43, %c0_44] : memref<4x18x18x128xf32, #tpu.memory_space<vmem>>, vector<1x16x16x128xf32>
    %36 = vector.shape_cast %35 : vector<1x16x16x128xf32> to vector<16x16x128xf32>
    %37 = vector.shape_cast %36 : vector<16x16x128xf32> to vector<256x128xf32>
    %38 = arith.truncf %37 : vector<256x128xf32> to vector<256x128xbf16>
    %c1_45 = arith.constant 1 : index
    %c0_46 = arith.constant 0 : index
    %c0_47 = arith.constant 0 : index
    %39 = vector.load %arg5[%c1_45, %c0_46, %c0_47] : memref<9x128x128xbf16, #tpu.memory_space<vmem>>, vector<1x128x128xbf16>
    %40 = vector.shape_cast %39 : vector<1x128x128xbf16> to vector<128x128xbf16>
    %cst_48 = arith.constant dense<0.000000e+00> : vector<256x128xf32>
    %41 = tpu.matmul %38, %40, %cst_48 {dimension_numbers = #tpu.dot_dimension_numbers<[1], [0], [0], [1], [0, 0, 1, 1], [], []>} : vector<256x128xbf16>, vector<128x128xbf16>, vector<256x128xf32> -> vector<256x128xf32>
    %42 = arith.addf %34, %41 : vector<256x128xf32>
    %c3_49 = arith.constant 3 : index
    %c0_50 = arith.constant 0 : index
    %c1_51 = arith.constant 1 : index
    %c0_52 = arith.constant 0 : index
    %43 = vector.load %arg8[%c3_49, %c0_50, %c1_51, %c0_52] : memref<4x18x18x128xf32, #tpu.memory_space<vmem>>, vector<1x16x16x128xf32>
    %44 = vector.shape_cast %43 : vector<1x16x16x128xf32> to vector<16x16x128xf32>
    %45 = vector.shape_cast %44 : vector<16x16x128xf32> to vector<256x128xf32>
    %46 = arith.truncf %45 : vector<256x128xf32> to vector<256x128xbf16>
    %c2_53 = arith.constant 2 : index
    %c0_54 = arith.constant 0 : index
    %c0_55 = arith.constant 0 : index
    %47 = vector.load %arg5[%c2_53, %c0_54, %c0_55] : memref<9x128x128xbf16, #tpu.memory_space<vmem>>, vector<1x128x128xbf16>
    %48 = vector.shape_cast %47 : vector<1x128x128xbf16> to vector<128x128xbf16>
    %cst_56 = arith.constant dense<0.000000e+00> : vector<256x128xf32>
    %49 = tpu.matmul %46, %48, %cst_56 {dimension_numbers = #tpu.dot_dimension_numbers<[1], [0], [0], [1], [0, 0, 1, 1], [], []>} : vector<256x128xbf16>, vector<128x128xbf16>, vector<256x128xf32> -> vector<256x128xf32>
    %50 = arith.addf %42, %49 : vector<256x128xf32>
    %c1_57 = arith.constant 1 : index
    %c1_58 = arith.constant 1 : index
    %c0_59 = arith.constant 0 : index
    %c0_60 = arith.constant 0 : index
    %51 = vector.load %arg8[%c1_57, %c1_58, %c0_59, %c0_60] : memref<4x18x18x128xf32, #tpu.memory_space<vmem>>, vector<1x16x16x128xf32>
    %52 = vector.shape_cast %51 : vector<1x16x16x128xf32> to vector<16x16x128xf32>
    %53 = vector.shape_cast %52 : vector<16x16x128xf32> to vector<256x128xf32>
    %54 = arith.truncf %53 : vector<256x128xf32> to vector<256x128xbf16>
    %c3_61 = arith.constant 3 : index
    %c0_62 = arith.constant 0 : index
    %c0_63 = arith.constant 0 : index
    %55 = vector.load %arg5[%c3_61, %c0_62, %c0_63] : memref<9x128x128xbf16, #tpu.memory_space<vmem>>, vector<1x128x128xbf16>
    %56 = vector.shape_cast %55 : vector<1x128x128xbf16> to vector<128x128xbf16>
    %cst_64 = arith.constant dense<0.000000e+00> : vector<256x128xf32>
    %57 = tpu.matmul %54, %56, %cst_64 {dimension_numbers = #tpu.dot_dimension_numbers<[1], [0], [0], [1], [0, 0, 1, 1], [], []>} : vector<256x128xbf16>, vector<128x128xbf16>, vector<256x128xf32> -> vector<256x128xf32>
    %58 = arith.addf %50, %57 : vector<256x128xf32>
    %c0_65 = arith.constant 0 : index
    %c1_66 = arith.constant 1 : index
    %c1_67 = arith.constant 1 : index
    %c0_68 = arith.constant 0 : index
    %59 = vector.load %arg8[%c0_65, %c1_66, %c1_67, %c0_68] : memref<4x18x18x128xf32, #tpu.memory_space<vmem>>, vector<1x16x16x128xf32>
    %60 = vector.shape_cast %59 : vector<1x16x16x128xf32> to vector<16x16x128xf32>
    %61 = vector.shape_cast %60 : vector<16x16x128xf32> to vector<256x128xf32>
    %62 = arith.truncf %61 : vector<256x128xf32> to vector<256x128xbf16>
    %c4 = arith.constant 4 : index
    %c0_69 = arith.constant 0 : index
    %c0_70 = arith.constant 0 : index
    %63 = vector.load %arg5[%c4, %c0_69, %c0_70] : memref<9x128x128xbf16, #tpu.memory_space<vmem>>, vector<1x128x128xbf16>
    %64 = vector.shape_cast %63 : vector<1x128x128xbf16> to vector<128x128xbf16>
    %cst_71 = arith.constant dense<0.000000e+00> : vector<256x128xf32>
    %65 = tpu.matmul %62, %64, %cst_71 {dimension_numbers = #tpu.dot_dimension_numbers<[1], [0], [0], [1], [0, 0, 1, 1], [], []>} : vector<256x128xbf16>, vector<128x128xbf16>, vector<256x128xf32> -> vector<256x128xf32>
    %66 = arith.addf %58, %65 : vector<256x128xf32>
    %c1_72 = arith.constant 1 : index
    %c1_73 = arith.constant 1 : index
    %c1_74 = arith.constant 1 : index
    %c0_75 = arith.constant 0 : index
    %67 = vector.load %arg8[%c1_72, %c1_73, %c1_74, %c0_75] : memref<4x18x18x128xf32, #tpu.memory_space<vmem>>, vector<1x16x16x128xf32>
    %68 = vector.shape_cast %67 : vector<1x16x16x128xf32> to vector<16x16x128xf32>
    %69 = vector.shape_cast %68 : vector<16x16x128xf32> to vector<256x128xf32>
    %70 = arith.truncf %69 : vector<256x128xf32> to vector<256x128xbf16>
    %c5 = arith.constant 5 : index
    %c0_76 = arith.constant 0 : index
    %c0_77 = arith.constant 0 : index
    %71 = vector.load %arg5[%c5, %c0_76, %c0_77] : memref<9x128x128xbf16, #tpu.memory_space<vmem>>, vector<1x128x128xbf16>
    %72 = vector.shape_cast %71 : vector<1x128x128xbf16> to vector<128x128xbf16>
    %cst_78 = arith.constant dense<0.000000e+00> : vector<256x128xf32>
    %73 = tpu.matmul %70, %72, %cst_78 {dimension_numbers = #tpu.dot_dimension_numbers<[1], [0], [0], [1], [0, 0, 1, 1], [], []>} : vector<256x128xbf16>, vector<128x128xbf16>, vector<256x128xf32> -> vector<256x128xf32>
    %74 = arith.addf %66, %73 : vector<256x128xf32>
    %c3_79 = arith.constant 3 : index
    %c1_80 = arith.constant 1 : index
    %c0_81 = arith.constant 0 : index
    %c0_82 = arith.constant 0 : index
    %75 = vector.load %arg8[%c3_79, %c1_80, %c0_81, %c0_82] : memref<4x18x18x128xf32, #tpu.memory_space<vmem>>, vector<1x16x16x128xf32>
    %76 = vector.shape_cast %75 : vector<1x16x16x128xf32> to vector<16x16x128xf32>
    %77 = vector.shape_cast %76 : vector<16x16x128xf32> to vector<256x128xf32>
    %78 = arith.truncf %77 : vector<256x128xf32> to vector<256x128xbf16>
    %c6 = arith.constant 6 : index
    %c0_83 = arith.constant 0 : index
    %c0_84 = arith.constant 0 : index
    %79 = vector.load %arg5[%c6, %c0_83, %c0_84] : memref<9x128x128xbf16, #tpu.memory_space<vmem>>, vector<1x128x128xbf16>
    %80 = vector.shape_cast %79 : vector<1x128x128xbf16> to vector<128x128xbf16>
    %cst_85 = arith.constant dense<0.000000e+00> : vector<256x128xf32>
    %81 = tpu.matmul %78, %80, %cst_85 {dimension_numbers = #tpu.dot_dimension_numbers<[1], [0], [0], [1], [0, 0, 1, 1], [], []>} : vector<256x128xbf16>, vector<128x128xbf16>, vector<256x128xf32> -> vector<256x128xf32>
    %82 = arith.addf %74, %81 : vector<256x128xf32>
    %c2_86 = arith.constant 2 : index
    %c1_87 = arith.constant 1 : index
    %c1_88 = arith.constant 1 : index
    %c0_89 = arith.constant 0 : index
    %83 = vector.load %arg8[%c2_86, %c1_87, %c1_88, %c0_89] : memref<4x18x18x128xf32, #tpu.memory_space<vmem>>, vector<1x16x16x128xf32>
    %84 = vector.shape_cast %83 : vector<1x16x16x128xf32> to vector<16x16x128xf32>
    %85 = vector.shape_cast %84 : vector<16x16x128xf32> to vector<256x128xf32>
    %86 = arith.truncf %85 : vector<256x128xf32> to vector<256x128xbf16>
    %c7 = arith.constant 7 : index
    %c0_90 = arith.constant 0 : index
    %c0_91 = arith.constant 0 : index
    %87 = vector.load %arg5[%c7, %c0_90, %c0_91] : memref<9x128x128xbf16, #tpu.memory_space<vmem>>, vector<1x128x128xbf16>
    %88 = vector.shape_cast %87 : vector<1x128x128xbf16> to vector<128x128xbf16>
    %cst_92 = arith.constant dense<0.000000e+00> : vector<256x128xf32>
    %89 = tpu.matmul %86, %88, %cst_92 {dimension_numbers = #tpu.dot_dimension_numbers<[1], [0], [0], [1], [0, 0, 1, 1], [], []>} : vector<256x128xbf16>, vector<128x128xbf16>, vector<256x128xf32> -> vector<256x128xf32>
    %90 = arith.addf %82, %89 : vector<256x128xf32>
    %c3_93 = arith.constant 3 : index
    %c1_94 = arith.constant 1 : index
    %c1_95 = arith.constant 1 : index
    %c0_96 = arith.constant 0 : index
    %91 = vector.load %arg8[%c3_93, %c1_94, %c1_95, %c0_96] : memref<4x18x18x128xf32, #tpu.memory_space<vmem>>, vector<1x16x16x128xf32>
    %92 = vector.shape_cast %91 : vector<1x16x16x128xf32> to vector<16x16x128xf32>
    %93 = vector.shape_cast %92 : vector<16x16x128xf32> to vector<256x128xf32>
    %94 = arith.truncf %93 : vector<256x128xf32> to vector<256x128xbf16>
    %c8 = arith.constant 8 : index
    %c0_97 = arith.constant 0 : index
    %c0_98 = arith.constant 0 : index
    %95 = vector.load %arg5[%c8, %c0_97, %c0_98] : memref<9x128x128xbf16, #tpu.memory_space<vmem>>, vector<1x128x128xbf16>
    %96 = vector.shape_cast %95 : vector<1x128x128xbf16> to vector<128x128xbf16>
    %cst_99 = arith.constant dense<0.000000e+00> : vector<256x128xf32>
    %97 = tpu.matmul %94, %96, %cst_99 {dimension_numbers = #tpu.dot_dimension_numbers<[1], [0], [0], [1], [0, 0, 1, 1], [], []>} : vector<256x128xbf16>, vector<128x128xbf16>, vector<256x128xf32> -> vector<256x128xf32>
    %98 = arith.addf %90, %97 : vector<256x128xf32>
    %c0_100 = arith.constant 0 : index
    %c0_101 = arith.constant 0 : index
    %99 = vector.load %arg6[%c0_100, %c0_101] : memref<1x128xf32, #tpu.memory_space<vmem>>, vector<1x128xf32>
    %100 = vector.broadcast %99 : vector<1x128xf32> to vector<256x128xf32>
    %101 = arith.addf %98, %100 : vector<256x128xf32>
    %cst_102 = arith.constant 3.000000e+00 : f32
    %102 = vector.broadcast %cst_102 : f32 to vector<256x128xf32>
    %103 = arith.addf %101, %102 : vector<256x128xf32>
    %cst_103 = arith.constant 0.000000e+00 : f32
    %cst_104 = arith.constant 6.000000e+00 : f32
    %104 = vector.broadcast %cst_103 : f32 to vector<256x128xf32>
    %105 = arith.maximumf %104, %103 : vector<256x128xf32>
    %106 = vector.broadcast %cst_104 : f32 to vector<256x128xf32>
    %107 = arith.minimumf %106, %105 : vector<256x128xf32>
    %108 = arith.mulf %101, %107 : vector<256x128xf32>
    %cst_105 = arith.constant 0.166666672 : f32
    %109 = vector.broadcast %cst_105 : f32 to vector<256x128xf32>
    %110 = arith.mulf %108, %109 : vector<256x128xf32>
    %111 = vector.shape_cast %110 : vector<256x128xf32> to vector<16x16x128xf32>
    %112 = arith.truncf %111 : vector<16x16x128xf32> to vector<16x16x128xbf16>
    %c0_106 = arith.constant 0 : index
    %c0_107 = arith.constant 0 : index
    %c0_108 = arith.constant 0 : index
    %c0_109 = arith.constant 0 : index
    %113 = vector.load %arg7[%c0_106, %c0_107, %c0_108, %c0_109] : memref<1x16x16x128xbf16, #tpu.memory_space<vmem>>, vector<1x16x16x128xbf16>
    %114 = vector.shape_cast %113 : vector<1x16x16x128xbf16> to vector<16x16x128xbf16>
    %115 = vector.shape_cast %112 : vector<16x16x128xbf16> to vector<1x16x16x128xbf16>
    tpu.vector_store %arg7[%c0_106, %c0_107, %c0_108, %c0_109], %115 {strides = array<i32>} : memref<1x16x16x128xbf16, #tpu.memory_space<vmem>>, vector<1x16x16x128xbf16>,
    return
  }
  func.func @transform_0(%arg0: i32) -> (i32, i32, i32, i32) {
    %c0_i32 = arith.constant 0 : i32
    %c0_i32_0 = arith.constant 0 : i32
    %c0_i32_1 = arith.constant 0 : i32
    %c0_i32_2 = arith.constant 0 : i32
    return %arg0, %c0_i32, %c0_i32_0, %c0_i32_1 : i32, i32, i32, i32
  }
  func.func @transform_1(%arg0: i32) -> (i32, i32, i32, i32) {
    %c0_i32 = arith.constant 0 : i32
    %c0_i32_0 = arith.constant 0 : i32
    %c0_i32_1 = arith.constant 0 : i32
    %c0_i32_2 = arith.constant 0 : i32
    return %arg0, %c0_i32, %c0_i32_0, %c0_i32_1 : i32, i32, i32, i32
  }
  func.func @transform_2(%arg0: i32) -> (i32, i32, i32, i32) {
    %c0_i32 = arith.constant 0 : i32
    %c0_i32_0 = arith.constant 0 : i32
    %c0_i32_1 = arith.constant 0 : i32
    %c0_i32_2 = arith.constant 0 : i32
    return %arg0, %c0_i32, %c0_i32_0, %c0_i32_1 : i32, i32, i32, i32
  }
  func.func @transform_3(%arg0: i32) -> (i32, i32, i32, i32) {
    %c0_i32 = arith.constant 0 : i32
    %c0_i32_0 = arith.constant 0 : i32
    %c0_i32_1 = arith.constant 0 : i32
    %c0_i32_2 = arith.constant 0 : i32
    return %arg0, %c0_i32, %c0_i32_0, %c0_i32_1 : i32, i32, i32, i32
  }
  func.func @transform_4(%arg0: i32) -> (i32, i32, i32) {
    %c0_i32 = arith.constant 0 : i32
    %c0_i32_0 = arith.constant 0 : i32
    %c0_i32_1 = arith.constant 0 : i32
    %c0_i32_2 = arith.constant 0 : i32
    return %c0_i32, %c0_i32_0, %c0_i32_1 : i32, i32, i32
  }
  func.func @transform_5(%arg0: i32) -> (i32, i32) {
    %c0_i32 = arith.constant 0 : i32
    %c0_i32_0 = arith.constant 0 : i32
    %c0_i32_1 = arith.constant 0 : i32
    return %c0_i32, %c0_i32_0 : i32, i32
  }
  func.func @transform_6(%arg0: i32) -> (i32, i32, i32, i32) {
    %c0_i32 = arith.constant 0 : i32
    %c0_i32_0 = arith.constant 0 : i32
    %c0_i32_1 = arith.constant 0 : i32
    %c0_i32_2 = arith.constant 0 : i32
    return %arg0, %c0_i32, %c0_i32_0, %c0_i32_1 : i32, i32, i32, i32
  }
}

</mosaic_0001>

<llo_original>
// kernel: tpu_custom_call.1
$region0: #{tpu_custom_call.1}
  #allocation0 [shape = 'u32[]', space=smem, size = 0x4, offset = 0x4, fixed_abs, tag = 'smem constant byte address 0x4 - core index']
  #allocation1 [shape = 'u32[144,128]{1,0:T(1,128)}', space=vmem, size = 0x12000, scoped, tag = 'internal scratch']
  #allocation2 [shape = 'f32[4,18,18,128]{3,2,1,0:T(8,128)}', space=vmem, size = 0xd8000, scoped, tag = 'scratch operand']
  %s0 = inlined_call_operand.hbm [shape: bf16[2,16,16,128], index: 0, kind: input, shape index: {}]
  %s1 = inlined_call_operand.hbm [shape: bf16[2,16,16,128], index: 1, kind: input, shape index: {}]
  %s2 = inlined_call_operand.hbm [shape: bf16[2,16,16,128], index: 2, kind: input, shape index: {}]
  %s3 = inlined_call_operand.hbm [shape: bf16[2,16,16,128], index: 3, kind: input, shape index: {}]
  %s4 = inlined_call_operand.hbm [shape: bf16[9,128,128], index: 4, kind: input, shape index: {}]
  %s5 = inlined_call_operand.vmem [shape: f32[1,128], index: 5, kind: input, shape index: {}]
  %s6 = inlined_call_operand.hbm [shape: bf16[2,16,16,128], index: 6, kind: output, shape index: {}]
  %s7 = sld [smem:[#allocation0]]
  $region77: #{tpu_custom_call.1} parent=0
    _
  %s9 = ssub.s32 1, %s7
  %s10 = scalar_select 0, %s9, %s7
  $region1: #{tpu_custom_call.1} parent=0
    #allocation3 [shape = 'u8[131072]{0}', space=vmem, size = 0x20000, scoped, tag = 'input window, operand 0']
    #allocation4 [shape = 's32[2]{0}', space=sflag, size = 0x8, scoped, tag = 'scoped memory for tpu_custom_call.1']
    #allocation5 [shape = 's32[2]{0}', space=sflag, size = 0x8, scoped, tag = 'scoped memory for tpu_custom_call.1']
    #allocation6 [shape = 'u8[131072]{0}', space=vmem, size = 0x20000, scoped, tag = 'input window, operand 1']
    #allocation7 [shape = 's32[2]{0}', space=sflag, size = 0x8, scoped, tag = 'scoped memory for tpu_custom_call.1']
    #allocation8 [shape = 'u8[131072]{0}', space=vmem, size = 0x20000, scoped, tag = 'input window, operand 2']
    #allocation9 [shape = 'u8[131072]{0}', space=vmem, size = 0x20000, scoped, tag = 'input window, operand 3']
    #allocation10 [shape = 's32[2]{0}', space=sflag, size = 0x8, scoped, tag = 'scoped memory for tpu_custom_call.1']
    #allocation11 [shape = 'u8[294912]{0}', space=vmem, size = 0x48000, scoped, tag = 'input window, operand 4, single buffered']
    #allocation12 [shape = 'u8[131072]{0}', space=vmem, size = 0x20000, scoped, tag = 'output window, operand 0']
    %11 = vsyncpa [#allocation4], 0
    %s12 = scalar_lea.sflag [#allocation4], 1
    %13 = vsyncpa %s12, 0
    %14 = vsyncpa [#allocation7], 0
    %s15 = scalar_lea.sflag [#allocation7], 1
    %16 = vsyncpa %s15, 0
    %17 = vsyncpa [#allocation10], 0
    %s18 = scalar_lea.sflag [#allocation10], 1
    %19 = vsyncpa %s18, 0
    %20 = vsyncpa [#allocation5], 0
    %s21 = scalar_lea.sflag [#allocation5], 1
    %22 = vsyncpa %s21, 0
    loop: start=0, step=1, limit=4
    $region2: #{tpu_custom_call.1} parent=1 // loop_pre_header
      _
    $region3: #{tpu_custom_call.1} parent=1 // loop_header
      %s24 = sphi 0, %s28
      %p25 = scmp.ge.s32.totalorder %s24, 4
      %s34 = sphi 0, %s36
      %s37 = sphi 0, %s34
      %s38 = sphi 0, %s37
      %s54 = sphi 0, %s38
      %s60 = sphi 0, %s62
      %s63 = sphi 0, %s60
      %s64 = sphi 0, %s63
      %s80 = sphi 0, %s64
      %s86 = sphi 0, %s88
      %s89 = sphi 0, %s86
      %s90 = sphi 0, %s89
      %s106 = sphi 0, %s90
      %s112 = sphi 0, %s114
      %s115 = sphi 0, %s112
      %s116 = sphi 0, %s115
      %s132 = sphi 0, %s116
      %s136 = sphi 0, %s136
      %s138 = sphi 0, %s136
      %s139 = sphi 0, %s138
      %s153 = sphi 0, %s139
      %s157 = sphi 0, %s157
      %s159 = sphi 0, %s157
      %s160 = sphi 0, %s159
      %s174 = sphi 0, %s160
      %s180 = sphi 0, %s182
      %s183 = sphi 0, %s180
      %s184 = sphi 0, %s183
      %s200 = sphi 0, %s184
    $region4: #{tpu_custom_call.1} parent=1 // loop_header_branch
      %27 = sbr.rel (%p25) target = $region8
    $region5: #{tpu_custom_call.1} parent=1 // loop_body
      %s29 = ssub.s32 %s24, 1
      %s30 = ssub.s32 %s24, 2
      %s31 = sadd.s32 %s24, 1
      %s32 = ssub.s32 %s24, %s31
      %p33 = scmp.eq.s32.totalorder %s32, 0
      %s35 = sadd.s32 %s34, 1
      %s36 = scalar_select %p33, %s34, %s35
      %p39 = pneg %p33
      %p40 = scmp.eq.s32.totalorder %s24, 1
      %p41 = por %p39, %p40
      %p42 = scmp.ne.s32.totalorder %s34, %s37
      %p43 = scmp.eq.s32.totalorder %s24, 0
      %p44 = por %p42, %p43
      %p45 = scmp.ne.s32.totalorder %s34, %s37
      %p46 = scmp.eq.s32.totalorder %s29, 1
      %p47 = por %p45, %p46
      %p48 = scmp.ne.s32.totalorder %s37, %s38
      %p49 = scmp.eq.s32.totalorder %s29, 0
      %p50 = por %p48, %p49
      %p51 = scmp.ne.s32.totalorder %s37, %s38
      %p52 = scmp.eq.s32.totalorder %s30, 1
      %p53 = por %p51, %p52
      %p55 = scmp.ne.s32.totalorder %s38, %s54
      %p56 = scmp.eq.s32.totalorder %s30, 0
      %p57 = por %p55, %p56
      %s58 = ssub.s32 %s24, %s31
      %p59 = scmp.eq.s32.totalorder %s58, 0
      %s61 = sadd.s32 %s60, 1
      %s62 = scalar_select %p59, %s60, %s61
      %p65 = pneg %p59
      %p66 = scmp.eq.s32.totalorder %s24, 1
      %p67 = por %p65, %p66
      %p68 = scmp.ne.s32.totalorder %s60, %s63
      %p69 = scmp.eq.s32.totalorder %s24, 0
      %p70 = por %p68, %p69
      %p71 = scmp.ne.s32.totalorder %s60, %s63
      %p72 = scmp.eq.s32.totalorder %s29, 1
      %p73 = por %p71, %p72
      %p74 = scmp.ne.s32.totalorder %s63, %s64
      %p75 = scmp.eq.s32.totalorder %s29, 0
      %p76 = por %p74, %p75
      %p77 = scmp.ne.s32.totalorder %s63, %s64
      %p78 = scmp.eq.s32.totalorder %s30, 1
      %p79 = por %p77, %p78
      %p81 = scmp.ne.s32.totalorder %s64, %s80
      %p82 = scmp.eq.s32.totalorder %s30, 0
      %p83 = por %p81, %p82
      %s84 = ssub.s32 %s24, %s31
      %p85 = scmp.eq.s32.totalorder %s84, 0
      %s87 = sadd.s32 %s86, 1
      %s88 = scalar_select %p85, %s86, %s87
      %p91 = pneg %p85
      %p92 = scmp.eq.s32.totalorder %s24, 1
      %p93 = por %p91, %p92
      %p94 = scmp.ne.s32.totalorder %s86, %s89
      %p95 = scmp.eq.s32.totalorder %s24, 0
      %p96 = por %p94, %p95
      %p97 = scmp.ne.s32.totalorder %s86, %s89
      %p98 = scmp.eq.s32.totalorder %s29, 1
      %p99 = por %p97, %p98
      %p100 = scmp.ne.s32.totalorder %s89, %s90
      %p101 = scmp.eq.s32.totalorder %s29, 0
      %p102 = por %p100, %p101
      %p103 = scmp.ne.s32.totalorder %s89, %s90
      %p104 = scmp.eq.s32.totalorder %s30, 1
      %p105 = por %p103, %p104
      %p107 = scmp.ne.s32.totalorder %s90, %s106
      %p108 = scmp.eq.s32.totalorder %s30, 0
      %p109 = por %p107, %p108
      %s110 = ssub.s32 %s24, %s31
      %p111 = scmp.eq.s32.totalorder %s110, 0
      %s113 = sadd.s32 %s112, 1
      %s114 = scalar_select %p111, %s112, %s113
      %p117 = pneg %p111
      %p118 = scmp.eq.s32.totalorder %s24, 1
      %p119 = por %p117, %p118
      %p120 = scmp.ne.s32.totalorder %s112, %s115
      %p121 = scmp.eq.s32.totalorder %s24, 0
      %p122 = por %p120, %p121
      %p123 = scmp.ne.s32.totalorder %s112, %s115
      %p124 = scmp.eq.s32.totalorder %s29, 1
      %p125 = por %p123, %p124
      %p126 = scmp.ne.s32.totalorder %s115, %s116
      %p127 = scmp.eq.s32.totalorder %s29, 0
      %p128 = por %p126, %p127
      %p129 = scmp.ne.s32.totalorder %s115, %s116
      %p130 = scmp.eq.s32.totalorder %s30, 1
      %p131 = por %p129, %p130
      %p133 = scmp.ne.s32.totalorder %s116, %s132
      %p134 = scmp.eq.s32.totalorder %s30, 0
      %p135 = por %p133, %p134
      %s137 = sadd.s32 %s136, 1
      %p140 = scmp.eq.s32.totalorder %s24, 1
      %p141 = scmp.ne.s32.totalorder %s136, %s138
      %p142 = scmp.eq.s32.totalorder %s24, 0
      %p143 = por %p141, %p142
      %p144 = scmp.ne.s32.totalorder %s136, %s138
      %p145 = scmp.eq.s32.totalorder %s29, 1
      %p146 = por %p144, %p145
      %p147 = scmp.ne.s32.totalorder %s138, %s139
      %p148 = scmp.eq.s32.totalorder %s29, 0
      %p149 = por %p147, %p148
      %p150 = scmp.ne.s32.totalorder %s138, %s139
      %p151 = scmp.eq.s32.totalorder %s30, 1
      %p152 = por %p150, %p151
      %p154 = scmp.ne.s32.totalorder %s139, %s153
      %p155 = scmp.eq.s32.totalorder %s30, 0
      %p156 = por %p154, %p155
      %s158 = sadd.s32 %s157, 1
      %p161 = scmp.eq.s32.totalorder %s24, 1
      %p162 = scmp.ne.s32.totalorder %s157, %s159
      %p163 = scmp.eq.s32.totalorder %s24, 0
      %p164 = por %p162, %p163
      %p165 = scmp.ne.s32.totalorder %s157, %s159
      %p166 = scmp.eq.s32.totalorder %s29, 1
      %p167 = por %p165, %p166
      %p168 = scmp.ne.s32.totalorder %s159, %s160
      %p169 = scmp.eq.s32.totalorder %s29, 0
      %p170 = por %p168, %p169
      %p171 = scmp.ne.s32.totalorder %s159, %s160
      %p172 = scmp.eq.s32.totalorder %s30, 1
      %p173 = por %p171, %p172
      %p175 = scmp.ne.s32.totalorder %s160, %s174
      %p176 = scmp.eq.s32.totalorder %s30, 0
      %p177 = por %p175, %p176
      %s178 = ssub.s32 %s24, %s31
      %p179 = scmp.eq.s32.totalorder %s178, 0
      %s181 = sadd.s32 %s180, 1
      %s182 = scalar_select %p179, %s180, %s181
      %p185 = pneg %p179
      %p186 = scmp.eq.s32.totalorder %s24, 1
      %p187 = por %p185, %p186
      %p188 = scmp.ne.s32.totalorder %s180, %s183
      %p189 = scmp.eq.s32.totalorder %s24, 0
      %p190 = por %p188, %p189
      %p191 = scmp.ne.s32.totalorder %s180, %s183
      %p192 = scmp.eq.s32.totalorder %s29, 1
      %p193 = por %p191, %p192
      %p194 = scmp.ne.s32.totalorder %s183, %s184
      %p195 = scmp.eq.s32.totalorder %s29, 0
      %p196 = por %p194, %p195
      %p197 = scmp.ne.s32.totalorder %s183, %s184
      %p198 = scmp.eq.s32.totalorder %s30, 1
      %p199 = por %p197, %p198
      %p201 = scmp.ne.s32.totalorder %s184, %s200
      %p202 = scmp.eq.s32.totalorder %s30, 0
      %p203 = por %p201, %p202
      %p204 = scmp.le.s32.totalorder 1, %s24
      %p205 = scmp.lt.s32.totalorder %s24, 3
      %p206 = pnand %p204, %p205
      %p207 = pneg %p206
      // Predicated region
      $region9: #{tpu_custom_call.1} parent=5 // pred_check
        _
      $region10: #{tpu_custom_call.1} parent=5 // pred_check_branch
        %209 = sbr.rel (%p206) target = $region12
      $region11: #{tpu_custom_call.1} parent=5 // pred_region
        %s210 = ssub.s32 %s24, 1
        // Predicated region
        $region13: #{tpu_custom_call.1} parent=11 // pred_check
          %p211 = pneg %p149
        $region14: #{tpu_custom_call.1} parent=11 // pred_check_branch
          %213 = sbr.rel (%p211) target = $region16
        $region15: #{tpu_custom_call.1} parent=11 // pred_region
          %s215 = ssub.s32 9216, 9216
          %216 = vsyncadd [#allocation10], %s215
          %s217 = sshll.u32 [#allocation11], 4
          %s218 = int_to_ptr.vmem [resolvable:$true] %s217
          %223 = dma.hbm_to_vmem [thread:$0]  %s4, 9216, %s218, [#allocation10], 64, 64, 4
        $region16: #{tpu_custom_call.1} parent=11 // pred_fallthru
          _
        // Predicated region
        $region17: #{tpu_custom_call.1} parent=11 // pred_check
          %p224 = pneg %p170
        $region18: #{tpu_custom_call.1} parent=11 // pred_check_branch
          %226 = sbr.rel (%p224) target = $region20
        $region19: #{tpu_custom_call.1} parent=11 // pred_region
          _
        $region20: #{tpu_custom_call.1} parent=11 // pred_fallthru
          _
      $region12: #{tpu_custom_call.1} parent=5 // pred_fallthru
        _
      %p227 = scmp.lt.s32.totalorder %s24, 2
      // Predicated region
      $region21: #{tpu_custom_call.1} parent=5 // pred_check
        %p228 = pneg %p227
      $region22: #{tpu_custom_call.1} parent=5 // pred_check_branch
        %230 = sbr.rel (%p228) target = $region24
      $region23: #{tpu_custom_call.1} parent=5 // pred_region
        // Predicated region
        $region25: #{tpu_custom_call.1} parent=23 // pred_check
          %p231 = pneg %p44
        $region26: #{tpu_custom_call.1} parent=23 // pred_check_branch
          %233 = sbr.rel (%p231) target = $region28
        $region27: #{tpu_custom_call.1} parent=23 // pred_region
          %s234 = sand.u32 %s34, 1
          %s235 = scalar_lea.sflag [#allocation4], %s234
          %s236 = sand.u32 %s34, 1
          %s237 = smul.addr %s236, 128
          %s238 = scalar_lea.vmem [#allocation3], %s237
          %s240 = ssub.s32 2048, 2048
          %241 = vsyncadd %s235, %s240
          %s242 = smul.addr %s24, 32
          %s243 = smul.addr %s242, 64
          %s244 = scalar_lea.hbm %s0, %s243
          %s245 = sshll.u32 %s238, 4
          %s246 = int_to_ptr.vmem [resolvable:$true] %s245
          %251 = dma.hbm_to_vmem [thread:$0]  %s244, 2048, %s246, %s235, 64, 64, 4
        $region28: #{tpu_custom_call.1} parent=23 // pred_fallthru
          _
        // Predicated region
        $region29: #{tpu_custom_call.1} parent=23 // pred_check
          %p252 = pneg %p70
        $region30: #{tpu_custom_call.1} parent=23 // pred_check_branch
          %254 = sbr.rel (%p252) target = $region32
        $region31: #{tpu_custom_call.1} parent=23 // pred_region
          %s255 = sand.u32 %s24, 1
          %s256 = scalar_lea.sflag [#allocation7], %s255
          %s257 = sand.u32 %s60, 1
          %s258 = smul.addr %s257, 128
          %s259 = scalar_lea.vmem [#allocation6], %s258
          %s261 = ssub.s32 2048, 2048
          %262 = vsyncadd %s256, %s261
          %s263 = smul.addr %s24, 32
          %s264 = smul.addr %s263, 64
          %s265 = scalar_lea.hbm %s1, %s264
          %s266 = sshll.u32 %s259, 4
          %s267 = int_to_ptr.vmem [resolvable:$true] %s266
          %272 = dma.hbm_to_vmem [thread:$0]  %s265, 2048, %s267, %s256, 64, 64, 4
        $region32: #{tpu_custom_call.1} parent=23 // pred_fallthru
          _
        // Predicated region
        $region33: #{tpu_custom_call.1} parent=23 // pred_check
          %p273 = pneg %p96
        $region34: #{tpu_custom_call.1} parent=23 // pred_check_branch
          %275 = sbr.rel (%p273) target = $region36
        $region35: #{tpu_custom_call.1} parent=23 // pred_region
          %s276 = sand.u32 %s24, 1
          %s277 = scalar_lea.sflag [#allocation7], %s276
          %s278 = sand.u32 %s86, 1
          %s279 = smul.addr %s278, 128
          %s280 = scalar_lea.vmem [#allocation8], %s279
          %s282 = ssub.s32 2048, 2048
          %283 = vsyncadd %s277, %s282
          %s284 = smul.addr %s24, 32
          %s285 = smul.addr %s284, 64
          %s286 = scalar_lea.hbm %s2, %s285
          %s287 = sshll.u32 %s280, 4
          %s288 = int_to_ptr.vmem [resolvable:$true] %s287
          %293 = dma.hbm_to_vmem [thread:$0]  %s286, 2048, %s288, %s277, 64, 64, 4
        $region36: #{tpu_custom_call.1} parent=23 // pred_fallthru
          _
        // Predicated region
        $region37: #{tpu_custom_call.1} parent=23 // pred_check
          %p294 = pneg %p122
        $region38: #{tpu_custom_call.1} parent=23 // pred_check_branch
          %296 = sbr.rel (%p294) target = $region40
        $region39: #{tpu_custom_call.1} parent=23 // pred_region
          %s297 = sand.u32 %s24, 1
          %s298 = scalar_lea.sflag [#allocation10], %s297
          %s299 = sand.u32 %s112, 1
          %s300 = smul.addr %s299, 128
          %s301 = scalar_lea.vmem [#allocation9], %s300
          %s303 = ssub.s32 2048, 2048
          %304 = vsyncadd %s298, %s303
          %s305 = smul.addr %s24, 32
          %s306 = smul.addr %s305, 64
          %s307 = scalar_lea.hbm %s3, %s306
          %s308 = sshll.u32 %s301, 4
          %s309 = int_to_ptr.vmem [resolvable:$true] %s308
          %314 = dma.hbm_to_vmem [thread:$0]  %s307, 2048, %s309, %s298, 64, 64, 4
        $region40: #{tpu_custom_call.1} parent=23 // pred_fallthru
          _
      $region24: #{tpu_custom_call.1} parent=5 // pred_fallthru
        _
      %p315 = scmp.le.s32.totalorder 1, %s24
      %p316 = scmp.lt.s32.totalorder %s24, 3
      %p317 = pnand %p315, %p316
      %p318 = pneg %p317
      // Predicated region
      $region41: #{tpu_custom_call.1} parent=5 // pred_check
        _
      $region42: #{tpu_custom_call.1} parent=5 // pred_check_branch
        %320 = sbr.rel (%p317) target = $region44
      $region43: #{tpu_custom_call.1} parent=5 // pred_region
        %s321 = ssub.s32 %s24, 1
        %s322 = sand.u32 %s37, 1
        %s323 = scalar_lea.sflag [#allocation4], %s322
        %s324 = sand.u32 %s37, 1
        %s325 = smul.addr %s324, 128
        %s326 = scalar_lea.vmem [#allocation3], %s325
        // Predicated region
        $region45: #{tpu_custom_call.1} parent=43 // pred_check
          %p327 = pneg %p50
        $region46: #{tpu_custom_call.1} parent=43 // pred_check_branch
          %329 = sbr.rel (%p327) target = $region48
        $region47: #{tpu_custom_call.1} parent=43 // pred_region
          %330 = dma.done %s323, 2048
        $region48: #{tpu_custom_call.1} parent=43 // pred_fallthru
          _
        %s331 = sand.u32 %s29, 1
        %s332 = scalar_lea.sflag [#allocation7], %s331
        %s333 = sand.u32 %s63, 1
        %s334 = smul.addr %s333, 128
        %s335 = scalar_lea.vmem [#allocation6], %s334
        // Predicated region
        $region49: #{tpu_custom_call.1} parent=43 // pred_check
          %p336 = pneg %p76
        $region50: #{tpu_custom_call.1} parent=43 // pred_check_branch
          %338 = sbr.rel (%p336) target = $region52
        $region51: #{tpu_custom_call.1} parent=43 // pred_region
          %339 = dma.done %s332, 2048
        $region52: #{tpu_custom_call.1} parent=43 // pred_fallthru
          _
        %s340 = sand.u32 %s29, 1
        %s341 = scalar_lea.sflag [#allocation7], %s340
        %s342 = sand.u32 %s89, 1
        %s343 = smul.addr %s342, 128
        %s344 = scalar_lea.vmem [#allocation8], %s343
        // Predicated region
        $region53: #{tpu_custom_call.1} parent=43 // pred_check
          %p345 = pneg %p102
        $region54: #{tpu_custom_call.1} parent=43 // pred_check_branch
          %347 = sbr.rel (%p345) target = $region56
        $region55: #{tpu_custom_call.1} parent=43 // pred_region
          %348 = dma.done %s341, 2048
        $region56: #{tpu_custom_call.1} parent=43 // pred_fallthru
          _
        %s349 = sand.u32 %s29, 1
        %s350 = scalar_lea.sflag [#allocation10], %s349
        %s351 = sand.u32 %s115, 1
        %s352 = smul.addr %s351, 128
        %s353 = scalar_lea.vmem [#allocation9], %s352
        // Predicated region
        $region57: #{tpu_custom_call.1} parent=43 // pred_check
          %p354 = pneg %p128
        $region58: #{tpu_custom_call.1} parent=43 // pred_check_branch
          %356 = sbr.rel (%p354) target = $region60
        $region59: #{tpu_custom_call.1} parent=43 // pred_region
          %357 = dma.done %s350, 2048
        $region60: #{tpu_custom_call.1} parent=43 // pred_fallthru
          _
        // Predicated region
        $region61: #{tpu_custom_call.1} parent=43 // pred_check
          %p358 = pneg %p149
        $region62: #{tpu_custom_call.1} parent=43 // pred_check_branch
          %360 = sbr.rel (%p358) target = $region64
        $region63: #{tpu_custom_call.1} parent=43 // pred_region
          %361 = dma.done [#allocation10], 9216
        $region64: #{tpu_custom_call.1} parent=43 // pred_fallthru
          _
        %s362 = sand.u32 %s37, 1
        %s363 = scalar_lea.sflag [#allocation4], %s362
        %s364 = sand.u32 %s37, 1
        %s365 = smul.addr %s364, 128
        %s366 = scalar_lea.vmem [#allocation3], %s365
        %p367 = pneg %p50
        %p368 = pneg %p47
        %s369 = sand.u32 %s29, 1
        %s370 = scalar_lea.sflag [#allocation7], %s369
        %s371 = sand.u32 %s63, 1
        %s372 = smul.addr %s371, 128
        %s373 = scalar_lea.vmem [#allocation6], %s372
        %p374 = pneg %p76
        %p375 = pneg %p73
        %s376 = sand.u32 %s29, 1
        %s377 = scalar_lea.sflag [#allocation7], %s376
        %s378 = sand.u32 %s89, 1
        %s379 = smul.addr %s378, 128
        %s380 = scalar_lea.vmem [#allocation8], %s379
        %p381 = pneg %p102
        %p382 = pneg %p99
        %s383 = sand.u32 %s29, 1
        %s384 = scalar_lea.sflag [#allocation10], %s383
        %s385 = sand.u32 %s115, 1
        %s386 = smul.addr %s385, 128
        %s387 = scalar_lea.vmem [#allocation9], %s386
        %p388 = pneg %p128
        %p389 = pneg %p125
        %p390 = pneg %p149
        %p391 = pneg %p146
        %p392 = pneg %p170
        %p393 = pneg %p167
        %p394 = pneg %p196
        %p395 = pneg %p193
        %s396 = sand.u32 %s183, 1
        %s397 = scalar_lea.sflag [#allocation5], %s396
        %s398 = sand.u32 %s183, 1
        %s399 = smul.addr %s398, 128
        %s400 = scalar_lea.vmem [#allocation12], %s399
        %402 = vst [vmem:[#allocation2] sm:$0xff] 0.0
        %403 = vst [vmem:[#allocation2 + $0x8] sm:$0xff] 0.0
        %404 = vst [vmem:[#allocation2 + $0x10] sm:$0x3] 0.0
        %405 = vst [vmem:[#allocation2 + $0x18] sm:$0xff] 0.0
        %406 = vst [vmem:[#allocation2 + $0x20] sm:$0xff] 0.0
        %407 = vst [vmem:[#allocation2 + $0x28] sm:$0x3] 0.0
        %408 = vst [vmem:[#allocation2 + $0x30] sm:$0xff] 0.0
        %409 = vst [vmem:[#allocation2 + $0x38] sm:$0xff] 0.0
        %410 = vst [vmem:[#allocation2 + $0x40] sm:$0x3] 0.0
        %411 = vst [vmem:[#allocation2 + $0x48] sm:$0xff] 0.0
        %412 = vst [vmem:[#allocation2 + $0x50] sm:$0xff] 0.0
        %413 = vst [vmem:[#allocation2 + $0x58] sm:$0x3] 0.0
        %414 = vst [vmem:[#allocation2 + $0x60] sm:$0xff] 0.0
        %415 = vst [vmem:[#allocation2 + $0x68] sm:$0xff] 0.0
        %416 = vst [vmem:[#allocation2 + $0x70] sm:$0x3] 0.0
        %417 = vst [vmem:[#allocation2 + $0x78] sm:$0xff] 0.0
        %418 = vst [vmem:[#allocation2 + $0x80] sm:$0xff] 0.0
        %419 = vst [vmem:[#allocation2 + $0x88] sm:$0x3] 0.0
        %420 = vst [vmem:[#allocation2 + $0x90] sm:$0xff] 0.0
        %421 = vst [vmem:[#allocation2 + $0x98] sm:$0xff] 0.0
        %422 = vst [vmem:[#allocation2 + $0xa0] sm:$0x3] 0.0
        %423 = vst [vmem:[#allocation2 + $0xa8] sm:$0xff] 0.0
        %424 = vst [vmem:[#allocation2 + $0xb0] sm:$0xff] 0.0
        %425 = vst [vmem:[#allocation2 + $0xb8] sm:$0x3] 0.0
        %426 = vst [vmem:[#allocation2 + $0xc0] sm:$0xff] 0.0
        %427 = vst [vmem:[#allocation2 + $0xc8] sm:$0xff] 0.0
        %428 = vst [vmem:[#allocation2 + $0xd0] sm:$0x3] 0.0
        %429 = vst [vmem:[#allocation2 + $0xd8] sm:$0xff] 0.0
        %430 = vst [vmem:[#allocation2 + $0xe0] sm:$0xff] 0.0
        %431 = vst [vmem:[#allocation2 + $0xe8] sm:$0x3] 0.0
        %432 = vst [vmem:[#allocation2 + $0xf0] sm:$0xff] 0.0
        %433 = vst [vmem:[#allocation2 + $0xf8] sm:$0xff] 0.0
        %434 = vst [vmem:[#allocation2 + $0x100] sm:$0x3] 0.0
        %435 = vst [vmem:[#allocation2 + $0x108] sm:$0xff] 0.0
        %436 = vst [vmem:[#allocation2 + $0x110] sm:$0xff] 0.0
        %437 = vst [vmem:[#allocation2 + $0x118] sm:$0x3] 0.0
        %438 = vst [vmem:[#allocation2 + $0x120] sm:$0xff] 0.0
        %439 = vst [vmem:[#allocation2 + $0x128] sm:$0xff] 0.0
        %440 = vst [vmem:[#allocation2 + $0x130] sm:$0x3] 0.0
        %441 = vst [vmem:[#allocation2 + $0x138] sm:$0xff] 0.0
        %442 = vst [vmem:[#allocation2 + $0x140] sm:$0xff] 0.0
        %443 = vst [vmem:[#allocation2 + $0x148] sm:$0x3] 0.0
        %444 = vst [vmem:[#allocation2 + $0x150] sm:$0xff] 0.0
        %445 = vst [vmem:[#allocation2 + $0x158] sm:$0xff] 0.0
        %446 = vst [vmem:[#allocation2 + $0x160] sm:$0x3] 0.0
        %447 = vst [vmem:[#allocation2 + $0x168] sm:$0xff] 0.0
        %448 = vst [vmem:[#allocation2 + $0x170] sm:$0xff] 0.0
        %449 = vst [vmem:[#allocation2 + $0x178] sm:$0x3] 0.0
        %450 = vst [vmem:[#allocation2 + $0x180] sm:$0xff] 0.0
        %451 = vst [vmem:[#allocation2 + $0x188] sm:$0xff] 0.0
        %452 = vst [vmem:[#allocation2 + $0x190] sm:$0x3] 0.0
        %453 = vst [vmem:[#allocation2 + $0x198] sm:$0xff] 0.0
        %454 = vst [vmem:[#allocation2 + $0x1a0] sm:$0xff] 0.0
        %455 = vst [vmem:[#allocation2 + $0x1a8] sm:$0x3] 0.0
        %456 = vst [vmem:[#allocation2 + $0x1b0] sm:$0xff] 0.0
        %457 = vst [vmem:[#allocation2 + $0x1b8] sm:$0xff] 0.0
        %458 = vst [vmem:[#allocation2 + $0x1c0] sm:$0x3] 0.0
        %459 = vst [vmem:[#allocation2 + $0x1c8] sm:$0xff] 0.0
        %460 = vst [vmem:[#allocation2 + $0x1d0] sm:$0xff] 0.0
        %461 = vst [vmem:[#allocation2 + $0x1d8] sm:$0x3] 0.0
        %462 = vst [vmem:[#allocation2 + $0x1e0] sm:$0xff] 0.0
        %463 = vst [vmem:[#allocation2 + $0x1e8] sm:$0xff] 0.0
        %464 = vst [vmem:[#allocation2 + $0x1f0] sm:$0x3] 0.0
        %465 = vst [vmem:[#allocation2 + $0x1f8] sm:$0xff] 0.0
        %466 = vst [vmem:[#allocation2 + $0x200] sm:$0xff] 0.0
        %467 = vst [vmem:[#allocation2 + $0x208] sm:$0x3] 0.0
        %468 = vst [vmem:[#allocation2 + $0x210] sm:$0xff] 0.0
        %469 = vst [vmem:[#allocation2 + $0x218] sm:$0xff] 0.0
        %470 = vst [vmem:[#allocation2 + $0x220] sm:$0x3] 0.0
        %471 = vst [vmem:[#allocation2 + $0x228] sm:$0xff] 0.0
        %472 = vst [vmem:[#allocation2 + $0x230] sm:$0xff] 0.0
        %473 = vst [vmem:[#allocation2 + $0x238] sm:$0x3] 0.0
        %474 = vst [vmem:[#allocation2 + $0x240] sm:$0xff] 0.0
        %475 = vst [vmem:[#allocation2 + $0x248] sm:$0xff] 0.0
        %476 = vst [vmem:[#allocation2 + $0x250] sm:$0x3] 0.0
        %477 = vst [vmem:[#allocation2 + $0x258] sm:$0xff] 0.0
        %478 = vst [vmem:[#allocation2 + $0x260] sm:$0xff] 0.0
        %479 = vst [vmem:[#allocation2 + $0x268] sm:$0x3] 0.0
        %480 = vst [vmem:[#allocation2 + $0x270] sm:$0xff] 0.0
        %481 = vst [vmem:[#allocation2 + $0x278] sm:$0xff] 0.0
        %482 = vst [vmem:[#allocation2 + $0x280] sm:$0x3] 0.0
        %483 = vst [vmem:[#allocation2 + $0x288] sm:$0xff] 0.0
        %484 = vst [vmem:[#allocation2 + $0x290] sm:$0xff] 0.0
        %485 = vst [vmem:[#allocation2 + $0x298] sm:$0x3] 0.0
        %486 = vst [vmem:[#allocation2 + $0x2a0] sm:$0xff] 0.0
        %487 = vst [vmem:[#allocation2 + $0x2a8] sm:$0xff] 0.0
        %488 = vst [vmem:[#allocation2 + $0x2b0] sm:$0x3] 0.0
        %489 = vst [vmem:[#allocation2 + $0x2b8] sm:$0xff] 0.0
        %490 = vst [vmem:[#allocation2 + $0x2c0] sm:$0xff] 0.0
        %491 = vst [vmem:[#allocation2 + $0x2c8] sm:$0x3] 0.0
        %492 = vst [vmem:[#allocation2 + $0x2d0] sm:$0xff] 0.0
        %493 = vst [vmem:[#allocation2 + $0x2d8] sm:$0xff] 0.0
        %494 = vst [vmem:[#allocation2 + $0x2e0] sm:$0x3] 0.0
        %495 = vst [vmem:[#allocation2 + $0x2e8] sm:$0xff] 0.0
        %496 = vst [vmem:[#allocation2 + $0x2f0] sm:$0xff] 0.0
        %497 = vst [vmem:[#allocation2 + $0x2f8] sm:$0x3] 0.0
        %498 = vst [vmem:[#allocation2 + $0x300] sm:$0xff] 0.0
        %499 = vst [vmem:[#allocation2 + $0x308] sm:$0xff] 0.0
        %500 = vst [vmem:[#allocation2 + $0x310] sm:$0x3] 0.0
        %501 = vst [vmem:[#allocation2 + $0x318] sm:$0xff] 0.0
        %502 = vst [vmem:[#allocation2 + $0x320] sm:$0xff] 0.0
        %503 = vst [vmem:[#allocation2 + $0x328] sm:$0x3] 0.0
        %504 = vst [vmem:[#allocation2 + $0x330] sm:$0xff] 0.0
        %505 = vst [vmem:[#allocation2 + $0x338] sm:$0xff] 0.0
        %506 = vst [vmem:[#allocation2 + $0x340] sm:$0x3] 0.0
        %507 = vst [vmem:[#allocation2 + $0x348] sm:$0xff] 0.0
        %508 = vst [vmem:[#allocation2 + $0x350] sm:$0xff] 0.0
        %509 = vst [vmem:[#allocation2 + $0x358] sm:$0x3] 0.0
        %510 = vst [vmem:[#allocation2 + $0x360] sm:$0xff] 0.0
        %511 = vst [vmem:[#allocation2 + $0x368] sm:$0xff] 0.0
        %512 = vst [vmem:[#allocation2 + $0x370] sm:$0x3] 0.0
        %513 = vst [vmem:[#allocation2 + $0x378] sm:$0xff] 0.0
        %514 = vst [vmem:[#allocation2 + $0x380] sm:$0xff] 0.0
        %515 = vst [vmem:[#allocation2 + $0x388] sm:$0x3] 0.0
        %516 = vst [vmem:[#allocation2 + $0x390] sm:$0xff] 0.0
        %517 = vst [vmem:[#allocation2 + $0x398] sm:$0xff] 0.0
        %518 = vst [vmem:[#allocation2 + $0x3a0] sm:$0x3] 0.0
        %519 = vst [vmem:[#allocation2 + $0x3a8] sm:$0xff] 0.0
        %520 = vst [vmem:[#allocation2 + $0x3b0] sm:$0xff] 0.0
        %521 = vst [vmem:[#allocation2 + $0x3b8] sm:$0x3] 0.0
        %522 = vst [vmem:[#allocation2 + $0x3c0] sm:$0xff] 0.0
        %523 = vst [vmem:[#allocation2 + $0x3c8] sm:$0xff] 0.0
        %524 = vst [vmem:[#allocation2 + $0x3d0] sm:$0x3] 0.0
        %525 = vst [vmem:[#allocation2 + $0x3d8] sm:$0xff] 0.0
        %526 = vst [vmem:[#allocation2 + $0x3e0] sm:$0xff] 0.0
        %527 = vst [vmem:[#allocation2 + $0x3e8] sm:$0x3] 0.0
        %528 = vst [vmem:[#allocation2 + $0x3f0] sm:$0xff] 0.0
        %529 = vst [vmem:[#allocation2 + $0x3f8] sm:$0xff] 0.0
        %530 = vst [vmem:[#allocation2 + $0x400] sm:$0x3] 0.0
        %531 = vst [vmem:[#allocation2 + $0x408] sm:$0xff] 0.0
        %532 = vst [vmem:[#allocation2 + $0x410] sm:$0xff] 0.0
        %533 = vst [vmem:[#allocation2 + $0x418] sm:$0x3] 0.0
        %534 = vst [vmem:[#allocation2 + $0x420] sm:$0xff] 0.0
        %535 = vst [vmem:[#allocation2 + $0x428] sm:$0xff] 0.0
        %536 = vst [vmem:[#allocation2 + $0x430] sm:$0x3] 0.0
        %537 = vst [vmem:[#allocation2 + $0x438] sm:$0xff] 0.0
        %538 = vst [vmem:[#allocation2 + $0x440] sm:$0xff] 0.0
        %539 = vst [vmem:[#allocation2 + $0x448] sm:$0x3] 0.0
        %540 = vst [vmem:[#allocation2 + $0x450] sm:$0xff] 0.0
        %541 = vst [vmem:[#allocation2 + $0x458] sm:$0xff] 0.0
        %542 = vst [vmem:[#allocation2 + $0x460] sm:$0x3] 0.0
        %543 = vst [vmem:[#allocation2 + $0x468] sm:$0xff] 0.0
        %544 = vst [vmem:[#allocation2 + $0x470] sm:$0xff] 0.0
        %545 = vst [vmem:[#allocation2 + $0x478] sm:$0x3] 0.0
        %546 = vst [vmem:[#allocation2 + $0x480] sm:$0xff] 0.0
        %547 = vst [vmem:[#allocation2 + $0x488] sm:$0xff] 0.0
        %548 = vst [vmem:[#allocation2 + $0x490] sm:$0x3] 0.0
        %549 = vst [vmem:[#allocation2 + $0x498] sm:$0xff] 0.0
        %550 = vst [vmem:[#allocation2 + $0x4a0] sm:$0xff] 0.0
        %551 = vst [vmem:[#allocation2 + $0x4a8] sm:$0x3] 0.0
        %552 = vst [vmem:[#allocation2 + $0x4b0] sm:$0xff] 0.0
        %553 = vst [vmem:[#allocation2 + $0x4b8] sm:$0xff] 0.0
        %554 = vst [vmem:[#allocation2 + $0x4c0] sm:$0x3] 0.0
        %555 = vst [vmem:[#allocation2 + $0x4c8] sm:$0xff] 0.0
        %556 = vst [vmem:[#allocation2 + $0x4d0] sm:$0xff] 0.0
        %557 = vst [vmem:[#allocation2 + $0x4d8] sm:$0x3] 0.0
        %558 = vst [vmem:[#allocation2 + $0x4e0] sm:$0xff] 0.0
        %559 = vst [vmem:[#allocation2 + $0x4e8] sm:$0xff] 0.0
        %560 = vst [vmem:[#allocation2 + $0x4f0] sm:$0x3] 0.0
        %561 = vst [vmem:[#allocation2 + $0x4f8] sm:$0xff] 0.0
        %562 = vst [vmem:[#allocation2 + $0x500] sm:$0xff] 0.0
        %563 = vst [vmem:[#allocation2 + $0x508] sm:$0x3] 0.0
        %564 = vst [vmem:[#allocation2 + $0x510] sm:$0xff] 0.0
        %565 = vst [vmem:[#allocation2 + $0x518] sm:$0xff] 0.0
        %566 = vst [vmem:[#allocation2 + $0x520] sm:$0x3] 0.0
        %567 = vst [vmem:[#allocation2 + $0x528] sm:$0xff] 0.0
        %568 = vst [vmem:[#allocation2 + $0x530] sm:$0xff] 0.0
        %569 = vst [vmem:[#allocation2 + $0x538] sm:$0x3] 0.0
        %570 = vst [vmem:[#allocation2 + $0x540] sm:$0xff] 0.0
        %571 = vst [vmem:[#allocation2 + $0x548] sm:$0xff] 0.0
        %572 = vst [vmem:[#allocation2 + $0x550] sm:$0x3] 0.0
        %573 = vst [vmem:[#allocation2 + $0x558] sm:$0xff] 0.0
        %574 = vst [vmem:[#allocation2 + $0x560] sm:$0xff] 0.0
        %575 = vst [vmem:[#allocation2 + $0x568] sm:$0x3] 0.0
        %576 = vst [vmem:[#allocation2 + $0x570] sm:$0xff] 0.0
        %577 = vst [vmem:[#allocation2 + $0x578] sm:$0xff] 0.0
        %578 = vst [vmem:[#allocation2 + $0x580] sm:$0x3] 0.0
        %579 = vst [vmem:[#allocation2 + $0x588] sm:$0xff] 0.0
        %580 = vst [vmem:[#allocation2 + $0x590] sm:$0xff] 0.0
        %581 = vst [vmem:[#allocation2 + $0x598] sm:$0x3] 0.0
        %582 = vst [vmem:[#allocation2 + $0x5a0] sm:$0xff] 0.0
        %583 = vst [vmem:[#allocation2 + $0x5a8] sm:$0xff] 0.0
        %584 = vst [vmem:[#allocation2 + $0x5b0] sm:$0x3] 0.0
        %585 = vst [vmem:[#allocation2 + $0x5b8] sm:$0xff] 0.0
        %586 = vst [vmem:[#allocation2 + $0x5c0] sm:$0xff] 0.0
        %587 = vst [vmem:[#allocation2 + $0x5c8] sm:$0x3] 0.0
        %588 = vst [vmem:[#allocation2 + $0x5d0] sm:$0xff] 0.0
        %589 = vst [vmem:[#allocation2 + $0x5d8] sm:$0xff] 0.0
        %590 = vst [vmem:[#allocation2 + $0x5e0] sm:$0x3] 0.0
        %591 = vst [vmem:[#allocation2 + $0x5e8] sm:$0xff] 0.0
        %592 = vst [vmem:[#allocation2 + $0x5f0] sm:$0xff] 0.0
        %593 = vst [vmem:[#allocation2 + $0x5f8] sm:$0x3] 0.0
        %594 = vst [vmem:[#allocation2 + $0x600] sm:$0xff] 0.0
        %595 = vst [vmem:[#allocation2 + $0x608] sm:$0xff] 0.0
        %596 = vst [vmem:[#allocation2 + $0x610] sm:$0x3] 0.0
        %597 = vst [vmem:[#allocation2 + $0x618] sm:$0xff] 0.0
        %598 = vst [vmem:[#allocation2 + $0x620] sm:$0xff] 0.0
        %599 = vst [vmem:[#allocation2 + $0x628] sm:$0x3] 0.0
        %600 = vst [vmem:[#allocation2 + $0x630] sm:$0xff] 0.0
        %601 = vst [vmem:[#allocation2 + $0x638] sm:$0xff] 0.0
        %602 = vst [vmem:[#allocation2 + $0x640] sm:$0x3] 0.0
        %603 = vst [vmem:[#allocation2 + $0x648] sm:$0xff] 0.0
        %604 = vst [vmem:[#allocation2 + $0x650] sm:$0xff] 0.0
        %605 = vst [vmem:[#allocation2 + $0x658] sm:$0x3] 0.0
        %606 = vst [vmem:[#allocation2 + $0x660] sm:$0xff] 0.0
        %607 = vst [vmem:[#allocation2 + $0x668] sm:$0xff] 0.0
        %608 = vst [vmem:[#allocation2 + $0x670] sm:$0x3] 0.0
        %609 = vst [vmem:[#allocation2 + $0x678] sm:$0xff] 0.0
        %610 = vst [vmem:[#allocation2 + $0x680] sm:$0xff] 0.0
        %611 = vst [vmem:[#allocation2 + $0x688] sm:$0x3] 0.0
        %612 = vst [vmem:[#allocation2 + $0x690] sm:$0xff] 0.0
        %613 = vst [vmem:[#allocation2 + $0x698] sm:$0xff] 0.0
        %614 = vst [vmem:[#allocation2 + $0x6a0] sm:$0x3] 0.0
        %615 = vst [vmem:[#allocation2 + $0x6a8] sm:$0xff] 0.0
        %616 = vst [vmem:[#allocation2 + $0x6b0] sm:$0xff] 0.0
        %617 = vst [vmem:[#allocation2 + $0x6b8] sm:$0x3] 0.0
        %v618 = vld [vmem:[%s326] sm:$0xf]
        %v619 = vld [vmem:[%s326 + $0x4] sm:$0xf]
        %v620 = vld [vmem:[%s326 + $0x8] sm:$0xf]
        %v621 = vld [vmem:[%s326 + $0xc] sm:$0xf]
        %v622 = vld [vmem:[%s326 + $0x10] sm:$0xf]
        %v623 = vld [vmem:[%s326 + $0x14] sm:$0xf]
        %v624 = vld [vmem:[%s326 + $0x18] sm:$0xf]
        %v625 = vld [vmem:[%s326 + $0x1c] sm:$0xf]
        %v626 = vld [vmem:[%s326 + $0x20] sm:$0xf]
        %v627 = vld [vmem:[%s326 + $0x24] sm:$0xf]
        %v628 = vld [vmem:[%s326 + $0x28] sm:$0xf]
        %v629 = vld [vmem:[%s326 + $0x2c] sm:$0xf]
        %v630 = vld [vmem:[%s326 + $0x30] sm:$0xf]
        %v631 = vld [vmem:[%s326 + $0x34] sm:$0xf]
        %v632 = vld [vmem:[%s326 + $0x38] sm:$0xf]
        %v633 = vld [vmem:[%s326 + $0x3c] sm:$0xf]
        %v634 = vld [vmem:[%s326 + $0x40] sm:$0xf]
        %v635 = vld [vmem:[%s326 + $0x44] sm:$0xf]
        %v636 = vld [vmem:[%s326 + $0x48] sm:$0xf]
        %v637 = vld [vmem:[%s326 + $0x4c] sm:$0xf]
        %v638 = vld [vmem:[%s326 + $0x50] sm:$0xf]
        %v639 = vld [vmem:[%s326 + $0x54] sm:$0xf]
        %v640 = vld [vmem:[%s326 + $0x58] sm:$0xf]
        %v641 = vld [vmem:[%s326 + $0x5c] sm:$0xf]
        %v642 = vld [vmem:[%s326 + $0x60] sm:$0xf]
        %v643 = vld [vmem:[%s326 + $0x64] sm:$0xf]
        %v644 = vld [vmem:[%s326 + $0x68] sm:$0xf]
        %v645 = vld [vmem:[%s326 + $0x6c] sm:$0xf]
        %v646 = vld [vmem:[%s326 + $0x70] sm:$0xf]
        %v647 = vld [vmem:[%s326 + $0x74] sm:$0xf]
        %v648 = vld [vmem:[%s326 + $0x78] sm:$0xf]
        %v649 = vld [vmem:[%s326 + $0x7c] sm:$0xf]
        %v650 = vunpack.c.l.bf16 %v618
        %v651 = vunpack.c.l.bf16 %v619
        %v652 = vunpack.c.l.bf16 %v620
        %v653 = vunpack.c.l.bf16 %v621
        %v654 = vunpack.c.l.bf16 %v622
        %v655 = vunpack.c.l.bf16 %v623
        %v656 = vunpack.c.l.bf16 %v624
        %v657 = vunpack.c.l.bf16 %v625
        %v658 = vunpack.c.l.bf16 %v626
        %v659 = vunpack.c.l.bf16 %v627
        %v660 = vunpack.c.l.bf16 %v628
        %v661 = vunpack.c.l.bf16 %v629
        %v662 = vunpack.c.l.bf16 %v630
        %v663 = vunpack.c.l.bf16 %v631
        %v664 = vunpack.c.l.bf16 %v632
        %v665 = vunpack.c.l.bf16 %v633
        %v666 = vunpack.c.l.bf16 %v634
        %v667 = vunpack.c.l.bf16 %v635
        %v668 = vunpack.c.l.bf16 %v636
        %v669 = vunpack.c.l.bf16 %v637
        %v670 = vunpack.c.l.bf16 %v638
        %v671 = vunpack.c.l.bf16 %v639
        %v672 = vunpack.c.l.bf16 %v640
        %v673 = vunpack.c.l.bf16 %v641
        %v674 = vunpack.c.l.bf16 %v642
        %v675 = vunpack.c.l.bf16 %v643
        %v676 = vunpack.c.l.bf16 %v644
        %v677 = vunpack.c.l.bf16 %v645
        %v678 = vunpack.c.l.bf16 %v646
        %v679 = vunpack.c.l.bf16 %v647
        %v680 = vunpack.c.l.bf16 %v648
        %v681 = vunpack.c.l.bf16 %v649
        %s682 = scalar_lea.vmem [#allocation2], 24
        %683 = vst [vmem:[%s682 + $0x1] sm:$0xff] %v650
        %684 = vst [vmem:[%s682 + $0x9] sm:$0xff] %v651
        %685 = vst [vmem:[%s682 + $0x19] sm:$0xff] %v652
        %686 = vst [vmem:[%s682 + $0x21] sm:$0xff] %v653
        %687 = vst [vmem:[%s682 + $0x31] sm:$0xff] %v654
        %688 = vst [vmem:[%s682 + $0x39] sm:$0xff] %v655
        %689 = vst [vmem:[%s682 + $0x49] sm:$0xff] %v656
        %690 = vst [vmem:[%s682 + $0x51] sm:$0xff] %v657
        %691 = vst [vmem:[%s682 + $0x61] sm:$0xff] %v658
        %692 = vst [vmem:[%s682 + $0x69] sm:$0xff] %v659
        %693 = vst [vmem:[%s682 + $0x79] sm:$0xff] %v660
        %694 = vst [vmem:[%s682 + $0x81] sm:$0xff] %v661
        %695 = vst [vmem:[%s682 + $0x91] sm:$0xff] %v662
        %696 = vst [vmem:[%s682 + $0x99] sm:$0xff] %v663
        %697 = vst [vmem:[%s682 + $0xa9] sm:$0xff] %v664
        %698 = vst [vmem:[%s682 + $0xb1] sm:$0xff] %v665
        %699 = vst [vmem:[%s682 + $0xc1] sm:$0xff] %v666
        %700 = vst [vmem:[%s682 + $0xc9] sm:$0xff] %v667
        %701 = vst [vmem:[%s682 + $0xd9] sm:$0xff] %v668
        %702 = vst [vmem:[%s682 + $0xe1] sm:$0xff] %v669
        %703 = vst [vmem:[%s682 + $0xf1] sm:$0xff] %v670
        %704 = vst [vmem:[%s682 + $0xf9] sm:$0xff] %v671
        %705 = vst [vmem:[%s682 + $0x109] sm:$0xff] %v672
        %706 = vst [vmem:[%s682 + $0x111] sm:$0xff] %v673
        %707 = vst [vmem:[%s682 + $0x121] sm:$0xff] %v674
        %708 = vst [vmem:[%s682 + $0x129] sm:$0xff] %v675
        %709 = vst [vmem:[%s682 + $0x139] sm:$0xff] %v676
        %710 = vst [vmem:[%s682 + $0x141] sm:$0xff] %v677
        %711 = vst [vmem:[%s682 + $0x151] sm:$0xff] %v678
        %712 = vst [vmem:[%s682 + $0x159] sm:$0xff] %v679
        %713 = vst [vmem:[%s682 + $0x169] sm:$0xff] %v680
        %714 = vst [vmem:[%s682 + $0x171] sm:$0xff] %v681
        %v715 = vld [vmem:[%s335] sm:$0xf]
        %v716 = vld [vmem:[%s335 + $0x4] sm:$0xf]
        %v717 = vld [vmem:[%s335 + $0x8] sm:$0xf]
        %v718 = vld [vmem:[%s335 + $0xc] sm:$0xf]
        %v719 = vld [vmem:[%s335 + $0x10] sm:$0xf]
        %v720 = vld [vmem:[%s335 + $0x14] sm:$0xf]
        %v721 = vld [vmem:[%s335 + $0x18] sm:$0xf]
        %v722 = vld [vmem:[%s335 + $0x1c] sm:$0xf]
        %v723 = vld [vmem:[%s335 + $0x20] sm:$0xf]
        %v724 = vld [vmem:[%s335 + $0x24] sm:$0xf]
        %v725 = vld [vmem:[%s335 + $0x28] sm:$0xf]
        %v726 = vld [vmem:[%s335 + $0x2c] sm:$0xf]
        %v727 = vld [vmem:[%s335 + $0x30] sm:$0xf]
        %v728 = vld [vmem:[%s335 + $0x34] sm:$0xf]
        %v729 = vld [vmem:[%s335 + $0x38] sm:$0xf]
        %v730 = vld [vmem:[%s335 + $0x3c] sm:$0xf]
        %v731 = vld [vmem:[%s335 + $0x40] sm:$0xf]
        %v732 = vld [vmem:[%s335 + $0x44] sm:$0xf]
        %v733 = vld [vmem:[%s335 + $0x48] sm:$0xf]
        %v734 = vld [vmem:[%s335 + $0x4c] sm:$0xf]
        %v735 = vld [vmem:[%s335 + $0x50] sm:$0xf]
        %v736 = vld [vmem:[%s335 + $0x54] sm:$0xf]
        %v737 = vld [vmem:[%s335 + $0x58] sm:$0xf]
        %v738 = vld [vmem:[%s335 + $0x5c] sm:$0xf]
        %v739 = vld [vmem:[%s335 + $0x60] sm:$0xf]
        %v740 = vld [vmem:[%s335 + $0x64] sm:$0xf]
        %v741 = vld [vmem:[%s335 + $0x68] sm:$0xf]
        %v742 = vld [vmem:[%s335 + $0x6c] sm:$0xf]
        %v743 = vld [vmem:[%s335 + $0x70] sm:$0xf]
        %v744 = vld [vmem:[%s335 + $0x74] sm:$0xf]
        %v745 = vld [vmem:[%s335 + $0x78] sm:$0xf]
        %v746 = vld [vmem:[%s335 + $0x7c] sm:$0xf]
        %v747 = vunpack.c.l.bf16 %v715
        %v748 = vunpack.c.l.bf16 %v716
        %v749 = vunpack.c.l.bf16 %v717
        %v750 = vunpack.c.l.bf16 %v718
        %v751 = vunpack.c.l.bf16 %v719
        %v752 = vunpack.c.l.bf16 %v720
        %v753 = vunpack.c.l.bf16 %v721
        %v754 = vunpack.c.l.bf16 %v722
        %v755 = vunpack.c.l.bf16 %v723
        %v756 = vunpack.c.l.bf16 %v724
        %v757 = vunpack.c.l.bf16 %v725
        %v758 = vunpack.c.l.bf16 %v726
        %v759 = vunpack.c.l.bf16 %v727
        %v760 = vunpack.c.l.bf16 %v728
        %v761 = vunpack.c.l.bf16 %v729
        %v762 = vunpack.c.l.bf16 %v730
        %v763 = vunpack.c.l.bf16 %v731
        %v764 = vunpack.c.l.bf16 %v732
        %v765 = vunpack.c.l.bf16 %v733
        %v766 = vunpack.c.l.bf16 %v734
        %v767 = vunpack.c.l.bf16 %v735
        %v768 = vunpack.c.l.bf16 %v736
        %v769 = vunpack.c.l.bf16 %v737
        %v770 = vunpack.c.l.bf16 %v738
        %v771 = vunpack.c.l.bf16 %v739
        %v772 = vunpack.c.l.bf16 %v740
        %v773 = vunpack.c.l.bf16 %v741
        %v774 = vunpack.c.l.bf16 %v742
        %v775 = vunpack.c.l.bf16 %v743
        %v776 = vunpack.c.l.bf16 %v744
        %v777 = vunpack.c.l.bf16 %v745
        %v778 = vunpack.c.l.bf16 %v746
        %s779 = scalar_lea.vmem [#allocation2], 456
        %780 = vst [vmem:[%s779 + $0x1] sm:$0xff] %v747
        %781 = vst [vmem:[%s779 + $0x9] sm:$0xff] %v748
        %782 = vst [vmem:[%s779 + $0x19] sm:$0xff] %v749
        %783 = vst [vmem:[%s779 + $0x21] sm:$0xff] %v750
        %784 = vst [vmem:[%s779 + $0x31] sm:$0xff] %v751
        %785 = vst [vmem:[%s779 + $0x39] sm:$0xff] %v752
        %786 = vst [vmem:[%s779 + $0x49] sm:$0xff] %v753
        %787 = vst [vmem:[%s779 + $0x51] sm:$0xff] %v754
        %788 = vst [vmem:[%s779 + $0x61] sm:$0xff] %v755
        %789 = vst [vmem:[%s779 + $0x69] sm:$0xff] %v756
        %790 = vst [vmem:[%s779 + $0x79] sm:$0xff] %v757
        %791 = vst [vmem:[%s779 + $0x81] sm:$0xff] %v758
        %792 = vst [vmem:[%s779 + $0x91] sm:$0xff] %v759
        %793 = vst [vmem:[%s779 + $0x99] sm:$0xff] %v760
        %794 = vst [vmem:[%s779 + $0xa9] sm:$0xff] %v761
        %795 = vst [vmem:[%s779 + $0xb1] sm:$0xff] %v762
        %796 = vst [vmem:[%s779 + $0xc1] sm:$0xff] %v763
        %797 = vst [vmem:[%s779 + $0xc9] sm:$0xff] %v764
        %798 = vst [vmem:[%s779 + $0xd9] sm:$0xff] %v765
        %799 = vst [vmem:[%s779 + $0xe1] sm:$0xff] %v766
        %800 = vst [vmem:[%s779 + $0xf1] sm:$0xff] %v767
        %801 = vst [vmem:[%s779 + $0xf9] sm:$0xff] %v768
        %802 = vst [vmem:[%s779 + $0x109] sm:$0xff] %v769
        %803 = vst [vmem:[%s779 + $0x111] sm:$0xff] %v770
        %804 = vst [vmem:[%s779 + $0x121] sm:$0xff] %v771
        %805 = vst [vmem:[%s779 + $0x129] sm:$0xff] %v772
        %806 = vst [vmem:[%s779 + $0x139] sm:$0xff] %v773
        %807 = vst [vmem:[%s779 + $0x141] sm:$0xff] %v774
        %808 = vst [vmem:[%s779 + $0x151] sm:$0xff] %v775
        %809 = vst [vmem:[%s779 + $0x159] sm:$0xff] %v776
        %810 = vst [vmem:[%s779 + $0x169] sm:$0xff] %v777
        %811 = vst [vmem:[%s779 + $0x171] sm:$0xff] %v778
        %v812 = vld [vmem:[%s344] sm:$0xf]
        %v813 = vld [vmem:[%s344 + $0x4] sm:$0xf]
        %v814 = vld [vmem:[%s344 + $0x8] sm:$0xf]
        %v815 = vld [vmem:[%s344 + $0xc] sm:$0xf]
        %v816 = vld [vmem:[%s344 + $0x10] sm:$0xf]
        %v817 = vld [vmem:[%s344 + $0x14] sm:$0xf]
        %v818 = vld [vmem:[%s344 + $0x18] sm:$0xf]
        %v819 = vld [vmem:[%s344 + $0x1c] sm:$0xf]
        %v820 = vld [vmem:[%s344 + $0x20] sm:$0xf]
        %v821 = vld [vmem:[%s344 + $0x24] sm:$0xf]
        %v822 = vld [vmem:[%s344 + $0x28] sm:$0xf]
        %v823 = vld [vmem:[%s344 + $0x2c] sm:$0xf]
        %v824 = vld [vmem:[%s344 + $0x30] sm:$0xf]
        %v825 = vld [vmem:[%s344 + $0x34] sm:$0xf]
        %v826 = vld [vmem:[%s344 + $0x38] sm:$0xf]
        %v827 = vld [vmem:[%s344 + $0x3c] sm:$0xf]
        %v828 = vld [vmem:[%s344 + $0x40] sm:$0xf]
        %v829 = vld [vmem:[%s344 + $0x44] sm:$0xf]
        %v830 = vld [vmem:[%s344 + $0x48] sm:$0xf]
        %v831 = vld [vmem:[%s344 + $0x4c] sm:$0xf]
        %v832 = vld [vmem:[%s344 + $0x50] sm:$0xf]
        %v833 = vld [vmem:[%s344 + $0x54] sm:$0xf]
        %v834 = vld [vmem:[%s344 + $0x58] sm:$0xf]
        %v835 = vld [vmem:[%s344 + $0x5c] sm:$0xf]
        %v836 = vld [vmem:[%s344 + $0x60] sm:$0xf]
        %v837 = vld [vmem:[%s344 + $0x64] sm:$0xf]
        %v838 = vld [vmem:[%s344 + $0x68] sm:$0xf]
        %v839 = vld [vmem:[%s344 + $0x6c] sm:$0xf]
        %v840 = vld [vmem:[%s344 + $0x70] sm:$0xf]
        %v841 = vld [vmem:[%s344 + $0x74] sm:$0xf]
        %v842 = vld [vmem:[%s344 + $0x78] sm:$0xf]
        %v843 = vld [vmem:[%s344 + $0x7c] sm:$0xf]
        %v844 = vunpack.c.l.bf16 %v812
        %v845 = vunpack.c.l.bf16 %v813
        %v846 = vunpack.c.l.bf16 %v814
        %v847 = vunpack.c.l.bf16 %v815
        %v848 = vunpack.c.l.bf16 %v816
        %v849 = vunpack.c.l.bf16 %v817
        %v850 = vunpack.c.l.bf16 %v818
        %v851 = vunpack.c.l.bf16 %v819
        %v852 = vunpack.c.l.bf16 %v820
        %v853 = vunpack.c.l.bf16 %v821
        %v854 = vunpack.c.l.bf16 %v822
        %v855 = vunpack.c.l.bf16 %v823
        %v856 = vunpack.c.l.bf16 %v824
        %v857 = vunpack.c.l.bf16 %v825
        %v858 = vunpack.c.l.bf16 %v826
        %v859 = vunpack.c.l.bf16 %v827
        %v860 = vunpack.c.l.bf16 %v828
        %v861 = vunpack.c.l.bf16 %v829
        %v862 = vunpack.c.l.bf16 %v830
        %v863 = vunpack.c.l.bf16 %v831
        %v864 = vunpack.c.l.bf16 %v832
        %v865 = vunpack.c.l.bf16 %v833
        %v866 = vunpack.c.l.bf16 %v834
        %v867 = vunpack.c.l.bf16 %v835
        %v868 = vunpack.c.l.bf16 %v836
        %v869 = vunpack.c.l.bf16 %v837
        %v870 = vunpack.c.l.bf16 %v838
        %v871 = vunpack.c.l.bf16 %v839
        %v872 = vunpack.c.l.bf16 %v840
        %v873 = vunpack.c.l.bf16 %v841
        %v874 = vunpack.c.l.bf16 %v842
        %v875 = vunpack.c.l.bf16 %v843
        %s876 = scalar_lea.vmem [#allocation2], 888
        %877 = vst [vmem:[%s876 + $0x1] sm:$0xff] %v844
        %878 = vst [vmem:[%s876 + $0x9] sm:$0xff] %v845
        %879 = vst [vmem:[%s876 + $0x19] sm:$0xff] %v846
        %880 = vst [vmem:[%s876 + $0x21] sm:$0xff] %v847
        %881 = vst [vmem:[%s876 + $0x31] sm:$0xff] %v848
        %882 = vst [vmem:[%s876 + $0x39] sm:$0xff] %v849
        %883 = vst [vmem:[%s876 + $0x49] sm:$0xff] %v850
        %884 = vst [vmem:[%s876 + $0x51] sm:$0xff] %v851
        %885 = vst [vmem:[%s876 + $0x61] sm:$0xff] %v852
        %886 = vst [vmem:[%s876 + $0x69] sm:$0xff] %v853
        %887 = vst [vmem:[%s876 + $0x79] sm:$0xff] %v854
        %888 = vst [vmem:[%s876 + $0x81] sm:$0xff] %v855
        %889 = vst [vmem:[%s876 + $0x91] sm:$0xff] %v856
        %890 = vst [vmem:[%s876 + $0x99] sm:$0xff] %v857
        %891 = vst [vmem:[%s876 + $0xa9] sm:$0xff] %v858
        %892 = vst [vmem:[%s876 + $0xb1] sm:$0xff] %v859
        %893 = vst [vmem:[%s876 + $0xc1] sm:$0xff] %v860
        %894 = vst [vmem:[%s876 + $0xc9] sm:$0xff] %v861
        %895 = vst [vmem:[%s876 + $0xd9] sm:$0xff] %v862
        %896 = vst [vmem:[%s876 + $0xe1] sm:$0xff] %v863
        %897 = vst [vmem:[%s876 + $0xf1] sm:$0xff] %v864
        %898 = vst [vmem:[%s876 + $0xf9] sm:$0xff] %v865
        %899 = vst [vmem:[%s876 + $0x109] sm:$0xff] %v866
        %900 = vst [vmem:[%s876 + $0x111] sm:$0xff] %v867
        %901 = vst [vmem:[%s876 + $0x121] sm:$0xff] %v868
        %902 = vst [vmem:[%s876 + $0x129] sm:$0xff] %v869
        %903 = vst [vmem:[%s876 + $0x139] sm:$0xff] %v870
        %904 = vst [vmem:[%s876 + $0x141] sm:$0xff] %v871
        %905 = vst [vmem:[%s876 + $0x151] sm:$0xff] %v872
        %906 = vst [vmem:[%s876 + $0x159] sm:$0xff] %v873
        %907 = vst [vmem:[%s876 + $0x169] sm:$0xff] %v874
        %908 = vst [vmem:[%s876 + $0x171] sm:$0xff] %v875
        %v909 = vld [vmem:[%s353] sm:$0xf]
        %v910 = vld [vmem:[%s353 + $0x4] sm:$0xf]
        %v911 = vld [vmem:[%s353 + $0x8] sm:$0xf]
        %v912 = vld [vmem:[%s353 + $0xc] sm:$0xf]
        %v913 = vld [vmem:[%s353 + $0x10] sm:$0xf]
        %v914 = vld [vmem:[%s353 + $0x14] sm:$0xf]
        %v915 = vld [vmem:[%s353 + $0x18] sm:$0xf]
        %v916 = vld [vmem:[%s353 + $0x1c] sm:$0xf]
        %v917 = vld [vmem:[%s353 + $0x20] sm:$0xf]
        %v918 = vld [vmem:[%s353 + $0x24] sm:$0xf]
        %v919 = vld [vmem:[%s353 + $0x28] sm:$0xf]
        %v920 = vld [vmem:[%s353 + $0x2c] sm:$0xf]
        %v921 = vld [vmem:[%s353 + $0x30] sm:$0xf]
        %v922 = vld [vmem:[%s353 + $0x34] sm:$0xf]
        %v923 = vld [vmem:[%s353 + $0x38] sm:$0xf]
        %v924 = vld [vmem:[%s353 + $0x3c] sm:$0xf]
        %v925 = vld [vmem:[%s353 + $0x40] sm:$0xf]
        %v926 = vld [vmem:[%s353 + $0x44] sm:$0xf]
        %v927 = vld [vmem:[%s353 + $0x48] sm:$0xf]
        %v928 = vld [vmem:[%s353 + $0x4c] sm:$0xf]
        %v929 = vld [vmem:[%s353 + $0x50] sm:$0xf]
        %v930 = vld [vmem:[%s353 + $0x54] sm:$0xf]
        %v931 = vld [vmem:[%s353 + $0x58] sm:$0xf]
        %v932 = vld [vmem:[%s353 + $0x5c] sm:$0xf]
        %v933 = vld [vmem:[%s353 + $0x60] sm:$0xf]
        %v934 = vld [vmem:[%s353 + $0x64] sm:$0xf]
        %v935 = vld [vmem:[%s353 + $0x68] sm:$0xf]
        %v936 = vld [vmem:[%s353 + $0x6c] sm:$0xf]
        %v937 = vld [vmem:[%s353 + $0x70] sm:$0xf]
        %v938 = vld [vmem:[%s353 + $0x74] sm:$0xf]
        %v939 = vld [vmem:[%s353 + $0x78] sm:$0xf]
        %v940 = vld [vmem:[%s353 + $0x7c] sm:$0xf]
        %v941 = vunpack.c.l.bf16 %v909
        %v942 = vunpack.c.l.bf16 %v910
        %v943 = vunpack.c.l.bf16 %v911
        %v944 = vunpack.c.l.bf16 %v912
        %v945 = vunpack.c.l.bf16 %v913
        %v946 = vunpack.c.l.bf16 %v914
        %v947 = vunpack.c.l.bf16 %v915
        %v948 = vunpack.c.l.bf16 %v916
        %v949 = vunpack.c.l.bf16 %v917
        %v950 = vunpack.c.l.bf16 %v918
        %v951 = vunpack.c.l.bf16 %v919
        %v952 = vunpack.c.l.bf16 %v920
        %v953 = vunpack.c.l.bf16 %v921
        %v954 = vunpack.c.l.bf16 %v922
        %v955 = vunpack.c.l.bf16 %v923
        %v956 = vunpack.c.l.bf16 %v924
        %v957 = vunpack.c.l.bf16 %v925
        %v958 = vunpack.c.l.bf16 %v926
        %v959 = vunpack.c.l.bf16 %v927
        %v960 = vunpack.c.l.bf16 %v928
        %v961 = vunpack.c.l.bf16 %v929
        %v962 = vunpack.c.l.bf16 %v930
        %v963 = vunpack.c.l.bf16 %v931
        %v964 = vunpack.c.l.bf16 %v932
        %v965 = vunpack.c.l.bf16 %v933
        %v966 = vunpack.c.l.bf16 %v934
        %v967 = vunpack.c.l.bf16 %v935
        %v968 = vunpack.c.l.bf16 %v936
        %v969 = vunpack.c.l.bf16 %v937
        %v970 = vunpack.c.l.bf16 %v938
        %v971 = vunpack.c.l.bf16 %v939
        %v972 = vunpack.c.l.bf16 %v940
        %s973 = scalar_lea.vmem [#allocation2], 1320
        %974 = vst [vmem:[%s973 + $0x1] sm:$0xff] %v941
        %975 = vst [vmem:[%s973 + $0x9] sm:$0xff] %v942
        %976 = vst [vmem:[%s973 + $0x19] sm:$0xff] %v943
        %977 = vst [vmem:[%s973 + $0x21] sm:$0xff] %v944
        %978 = vst [vmem:[%s973 + $0x31] sm:$0xff] %v945
        %979 = vst [vmem:[%s973 + $0x39] sm:$0xff] %v946
        %980 = vst [vmem:[%s973 + $0x49] sm:$0xff] %v947
        %981 = vst [vmem:[%s973 + $0x51] sm:$0xff] %v948
        %982 = vst [vmem:[%s973 + $0x61] sm:$0xff] %v949
        %983 = vst [vmem:[%s973 + $0x69] sm:$0xff] %v950
        %984 = vst [vmem:[%s973 + $0x79] sm:$0xff] %v951
        %985 = vst [vmem:[%s973 + $0x81] sm:$0xff] %v952
        %986 = vst [vmem:[%s973 + $0x91] sm:$0xff] %v953
        %987 = vst [vmem:[%s973 + $0x99] sm:$0xff] %v954
        %988 = vst [vmem:[%s973 + $0xa9] sm:$0xff] %v955
        %989 = vst [vmem:[%s973 + $0xb1] sm:$0xff] %v956
        %990 = vst [vmem:[%s973 + $0xc1] sm:$0xff] %v957
        %991 = vst [vmem:[%s973 + $0xc9] sm:$0xff] %v958
        %992 = vst [vmem:[%s973 + $0xd9] sm:$0xff] %v959
        %993 = vst [vmem:[%s973 + $0xe1] sm:$0xff] %v960
        %994 = vst [vmem:[%s973 + $0xf1] sm:$0xff] %v961
        %995 = vst [vmem:[%s973 + $0xf9] sm:$0xff] %v962
        %996 = vst [vmem:[%s973 + $0x109] sm:$0xff] %v963
        %997 = vst [vmem:[%s973 + $0x111] sm:$0xff] %v964
        %998 = vst [vmem:[%s973 + $0x121] sm:$0xff] %v965
        %999 = vst [vmem:[%s973 + $0x129] sm:$0xff] %v966
        %1000 = vst [vmem:[%s973 + $0x139] sm:$0xff] %v967
        %1001 = vst [vmem:[%s973 + $0x141] sm:$0xff] %v968
        %1002 = vst [vmem:[%s973 + $0x151] sm:$0xff] %v969
        %1003 = vst [vmem:[%s973 + $0x159] sm:$0xff] %v970
        %1004 = vst [vmem:[%s973 + $0x169] sm:$0xff] %v971
        %1005 = vst [vmem:[%s973 + $0x171] sm:$0xff] %v972
        %s1006 = scalar_lea.vmem [#allocation2], 1296
        %v1007 = vld [vmem:[%s1006] sm:$0xff]
        %v1008 = vld [vmem:[%s1006 + $0x8] sm:$0xff]
        %v1009 = vld [vmem:[%s1006 + $0x18] sm:$0xff]
        %v1010 = vld [vmem:[%s1006 + $0x20] sm:$0xff]
        %v1011 = vld [vmem:[%s1006 + $0x30] sm:$0xff]
        %v1012 = vld [vmem:[%s1006 + $0x38] sm:$0xff]
        %v1013 = vld [vmem:[%s1006 + $0x48] sm:$0xff]
        %v1014 = vld [vmem:[%s1006 + $0x50] sm:$0xff]
        %v1015 = vld [vmem:[%s1006 + $0x60] sm:$0xff]
        %v1016 = vld [vmem:[%s1006 + $0x68] sm:$0xff]
        %v1017 = vld [vmem:[%s1006 + $0x78] sm:$0xff]
        %v1018 = vld [vmem:[%s1006 + $0x80] sm:$0xff]
        %v1019 = vld [vmem:[%s1006 + $0x90] sm:$0xff]
        %v1020 = vld [vmem:[%s1006 + $0x98] sm:$0xff]
        %v1021 = vld [vmem:[%s1006 + $0xa8] sm:$0xff]
        %v1022 = vld [vmem:[%s1006 + $0xb0] sm:$0xff]
        %v1023 = vld [vmem:[%s1006 + $0xc0] sm:$0xff]
        %v1024 = vld [vmem:[%s1006 + $0xc8] sm:$0xff]
        %v1025 = vld [vmem:[%s1006 + $0xd8] sm:$0xff]
        %v1026 = vld [vmem:[%s1006 + $0xe0] sm:$0xff]
        %v1027 = vld [vmem:[%s1006 + $0xf0] sm:$0xff]
        %v1028 = vld [vmem:[%s1006 + $0xf8] sm:$0xff]
        %v1029 = vld [vmem:[%s1006 + $0x108] sm:$0xff]
        %v1030 = vld [vmem:[%s1006 + $0x110] sm:$0xff]
        %v1031 = vld [vmem:[%s1006 + $0x120] sm:$0xff]
        %v1032 = vld [vmem:[%s1006 + $0x128] sm:$0xff]
        %v1033 = vld [vmem:[%s1006 + $0x138] sm:$0xff]
        %v1034 = vld [vmem:[%s1006 + $0x140] sm:$0xff]
        %v1035 = vld [vmem:[%s1006 + $0x150] sm:$0xff]
        %v1036 = vld [vmem:[%s1006 + $0x158] sm:$0xff]
        %v1037 = vld [vmem:[%s1006 + $0x168] sm:$0xff]
        %v1038 = vld [vmem:[%s1006 + $0x170] sm:$0xff]
        %v1039 = vpack.c.bf16 %v1008, %v1007
        %v1040 = vpack.c.bf16 %v1010, %v1009
        %v1041 = vpack.c.bf16 %v1012, %v1011
        %v1042 = vpack.c.bf16 %v1014, %v1013
        %v1043 = vpack.c.bf16 %v1016, %v1015
        %v1044 = vpack.c.bf16 %v1018, %v1017
        %v1045 = vpack.c.bf16 %v1020, %v1019
        %v1046 = vpack.c.bf16 %v1022, %v1021
        %v1047 = vpack.c.bf16 %v1024, %v1023
        %v1048 = vpack.c.bf16 %v1026, %v1025
        %v1049 = vpack.c.bf16 %v1028, %v1027
        %v1050 = vpack.c.bf16 %v1030, %v1029
        %v1051 = vpack.c.bf16 %v1032, %v1031
        %v1052 = vpack.c.bf16 %v1034, %v1033
        %v1053 = vpack.c.bf16 %v1036, %v1035
        %v1054 = vpack.c.bf16 %v1038, %v1037
        %v1055 = vld [vmem:[#allocation11] sm:$0xf]
        %v1056 = vld [vmem:[#allocation11 + $0x4] sm:$0xf]
        %v1057 = vld [vmem:[#allocation11 + $0x8] sm:$0xf]
        %v1058 = vld [vmem:[#allocation11 + $0xc] sm:$0xf]
        %v1059 = vld [vmem:[#allocation11 + $0x10] sm:$0xf]
        %v1060 = vld [vmem:[#allocation11 + $0x14] sm:$0xf]
        %v1061 = vld [vmem:[#allocation11 + $0x18] sm:$0xf]
        %v1062 = vld [vmem:[#allocation11 + $0x1c] sm:$0xf]
        %v1063 = vld [vmem:[#allocation11 + $0x20] sm:$0xf]
        %v1064 = vld [vmem:[#allocation11 + $0x24] sm:$0xf]
        %v1065 = vld [vmem:[#allocation11 + $0x28] sm:$0xf]
        %v1066 = vld [vmem:[#allocation11 + $0x2c] sm:$0xf]
        %v1067 = vld [vmem:[#allocation11 + $0x30] sm:$0xf]
        %v1068 = vld [vmem:[#allocation11 + $0x34] sm:$0xf]
        %v1069 = vld [vmem:[#allocation11 + $0x38] sm:$0xf]
        %v1070 = vld [vmem:[#allocation11 + $0x3c] sm:$0xf]
        %s1071 = scalar_lea.vmem [#allocation2], 864
        %v1072 = vld [vmem:[%s1071 + $0x1] sm:$0xff]
        %v1073 = vld [vmem:[%s1071 + $0x9] sm:$0xff]
        %v1074 = vld [vmem:[%s1071 + $0x19] sm:$0xff]
        %v1075 = vld [vmem:[%s1071 + $0x21] sm:$0xff]
        %v1076 = vld [vmem:[%s1071 + $0x31] sm:$0xff]
        %v1077 = vld [vmem:[%s1071 + $0x39] sm:$0xff]
        %v1078 = vld [vmem:[%s1071 + $0x49] sm:$0xff]
        %v1079 = vld [vmem:[%s1071 + $0x51] sm:$0xff]
        %v1080 = vld [vmem:[%s1071 + $0x61] sm:$0xff]
        %v1081 = vld [vmem:[%s1071 + $0x69] sm:$0xff]
        %v1082 = vld [vmem:[%s1071 + $0x79] sm:$0xff]
        %v1083 = vld [vmem:[%s1071 + $0x81] sm:$0xff]
        %v1084 = vld [vmem:[%s1071 + $0x91] sm:$0xff]
        %v1085 = vld [vmem:[%s1071 + $0x99] sm:$0xff]
        %v1086 = vld [vmem:[%s1071 + $0xa9] sm:$0xff]
        %v1087 = vld [vmem:[%s1071 + $0xb1] sm:$0xff]
        %v1088 = vld [vmem:[%s1071 + $0xc1] sm:$0xff]
        %v1089 = vld [vmem:[%s1071 + $0xc9] sm:$0xff]
        %v1090 = vld [vmem:[%s1071 + $0xd9] sm:$0xff]
        %v1091 = vld [vmem:[%s1071 + $0xe1] sm:$0xff]
        %v1092 = vld [vmem:[%s1071 + $0xf1] sm:$0xff]
        %v1093 = vld [vmem:[%s1071 + $0xf9] sm:$0xff]
        %v1094 = vld [vmem:[%s1071 + $0x109] sm:$0xff]
        %v1095 = vld [vmem:[%s1071 + $0x111] sm:$0xff]
        %v1096 = vld [vmem:[%s1071 + $0x121] sm:$0xff]
        %v1097 = vld [vmem:[%s1071 + $0x129] sm:$0xff]
        %v1098 = vld [vmem:[%s1071 + $0x139] sm:$0xff]
        %v1099 = vld [vmem:[%s1071 + $0x141] sm:$0xff]
        %v1100 = vld [vmem:[%s1071 + $0x151] sm:$0xff]
        %v1101 = vld [vmem:[%s1071 + $0x159] sm:$0xff]
        %v1102 = vld [vmem:[%s1071 + $0x169] sm:$0xff]
        %v1103 = vld [vmem:[%s1071 + $0x171] sm:$0xff]
        %v1104 = vpack.c.bf16 %v1073, %v1072
        %v1105 = vpack.c.bf16 %v1075, %v1074
        %v1106 = vpack.c.bf16 %v1077, %v1076
        %v1107 = vpack.c.bf16 %v1079, %v1078
        %v1108 = vpack.c.bf16 %v1081, %v1080
        %v1109 = vpack.c.bf16 %v1083, %v1082
        %v1110 = vpack.c.bf16 %v1085, %v1084
        %v1111 = vpack.c.bf16 %v1087, %v1086
        %v1112 = vpack.c.bf16 %v1089, %v1088
        %v1113 = vpack.c.bf16 %v1091, %v1090
        %v1114 = vpack.c.bf16 %v1093, %v1092
        %v1115 = vpack.c.bf16 %v1095, %v1094
        %v1116 = vpack.c.bf16 %v1097, %v1096
        %v1117 = vpack.c.bf16 %v1099, %v1098
        %v1118 = vpack.c.bf16 %v1101, %v1100
        %v1119 = vpack.c.bf16 %v1103, %v1102
        %s1120 = scalar_lea.vmem [#allocation11], 64
        %v1121 = vld [vmem:[%s1120] sm:$0xf]
        %v1122 = vld [vmem:[%s1120 + $0x4] sm:$0xf]
        %v1123 = vld [vmem:[%s1120 + $0x8] sm:$0xf]
        %v1124 = vld [vmem:[%s1120 + $0xc] sm:$0xf]
        %v1125 = vld [vmem:[%s1120 + $0x10] sm:$0xf]
        %v1126 = vld [vmem:[%s1120 + $0x14] sm:$0xf]
        %v1127 = vld [vmem:[%s1120 + $0x18] sm:$0xf]
        %v1128 = vld [vmem:[%s1120 + $0x1c] sm:$0xf]
        %v1129 = vld [vmem:[%s1120 + $0x20] sm:$0xf]
        %v1130 = vld [vmem:[%s1120 + $0x24] sm:$0xf]
        %v1131 = vld [vmem:[%s1120 + $0x28] sm:$0xf]
        %v1132 = vld [vmem:[%s1120 + $0x2c] sm:$0xf]
        %v1133 = vld [vmem:[%s1120 + $0x30] sm:$0xf]
        %v1134 = vld [vmem:[%s1120 + $0x34] sm:$0xf]
        %v1135 = vld [vmem:[%s1120 + $0x38] sm:$0xf]
        %v1136 = vld [vmem:[%s1120 + $0x3c] sm:$0xf]
        %v1153 = vunpack.c.l.b16 %v1121
        %v1154 = vunpack.c.l.b16 %v1122
        %v1155 = vunpack.c.l.b16 %v1123
        %v1156 = vunpack.c.l.b16 %v1124
        %v1157 = vunpack.c.l.b16 %v1125
        %v1158 = vunpack.c.l.b16 %v1126
        %v1159 = vunpack.c.l.b16 %v1127
        %v1160 = vunpack.c.l.b16 %v1128
        %v1161 = vunpack.c.l.b16 %v1129
        %v1162 = vunpack.c.l.b16 %v1130
        %v1163 = vunpack.c.l.b16 %v1131
        %v1164 = vunpack.c.l.b16 %v1132
        %v1165 = vunpack.c.l.b16 %v1133
        %v1166 = vunpack.c.l.b16 %v1134
        %v1167 = vunpack.c.l.b16 %v1135
        %v1168 = vunpack.c.l.b16 %v1136
        %v1169 = vpack.c.b16 %v1154, %v1153
        %v1170 = vpack.c.b16 %v1156, %v1155
        %v1171 = vpack.c.b16 %v1158, %v1157
        %v1172 = vpack.c.b16 %v1160, %v1159
        %v1173 = vpack.c.b16 %v1162, %v1161
        %v1174 = vpack.c.b16 %v1164, %v1163
        %v1175 = vpack.c.b16 %v1166, %v1165
        %v1176 = vpack.c.b16 %v1168, %v1167
        %1185 = vmatprep.subr.bf16.mxu0 0
        %1186 = vmatpush1.bf16.msra.mxu0 %v1176
        %1187 = vmatprep.subr.bf16.mxu0 0
        %1188 = vmatpush1.bf16.msra.mxu0 %v1175
        %1189 = vmatprep.subr.bf16.mxu0 0
        %1190 = vmatpush1.bf16.msra.mxu0 %v1174
        %1191 = vmatprep.subr.bf16.mxu0 0
        %1192 = vmatpush1.bf16.msra.mxu0 %v1173
        %1193 = vmatprep.subr.bf16.mxu0 0
        %1194 = vmatpush1.bf16.msra.mxu0 %v1172
        %1195 = vmatprep.subr.bf16.mxu0 0
        %1196 = vmatpush1.bf16.msra.mxu0 %v1171
        %1197 = vmatprep.subr.bf16.mxu0 0
        %1198 = vmatpush1.bf16.msra.mxu0 %v1170
        %1199 = vmatprep.subr.bf16.mxu0 0
        %1200 = vmatpush1.bf16.msra.mxu0 %v1169
        %1201 = vmatprep.subr.bf16.mxu0 0
        %1202 = vmatpush2.bf16.msra.mxu0 0
        %1203 = vmatprep.subr.bf16.mxu0 0
        %1204 = vmatpush2.bf16.msra.mxu0 0
        %1205 = vmatprep.subr.bf16.mxu0 0
        %1206 = vmatpush2.bf16.msra.mxu0 0
        %1207 = vmatprep.subr.bf16.mxu0 0
        %1208 = vmatpush2.bf16.msra.mxu0 0
        %1209 = vmatprep.subr.bf16.mxu0 0
        %1210 = vmatpush2.bf16.msra.mxu0 0
        %1211 = vmatprep.subr.bf16.mxu0 0
        %1212 = vmatpush2.bf16.msra.mxu0 0
        %1213 = vmatprep.subr.bf16.mxu0 0
        %1214 = vmatpush2.bf16.msra.mxu0 0
        %1215 = vmatprep.subr.bf16.mxu0 0
        %1216 = vmatpush2.bf16.msra.mxu0 0
        %1217 = vmatprep.mubr.bf16.mxu0 0
        %1218 = vmatmul.mubr.bf16.gmra.mxu0 %v1104
        %v1219 = vpop.f32.mrf.mxu0
        %v1220 = vadd.f32 0.0, %v1219
        %v1221 = vpop.f32.mrf.mxu0
        %v1222 = vpop.f32.mrf.mxu0
        %v1223 = vadd.f32 0.0, %v1222
        %v1224 = vpop.f32.mrf.mxu0
        %1225 = vmatprep.mubr.bf16.mxu0 0
        %1226 = vmatmul.mubr.bf16.gmra.mxu0 %v1105
        %v1227 = vpop.f32.mrf.mxu0
        %v1228 = vadd.f32 0.0, %v1227
        %v1229 = vpop.f32.mrf.mxu0
        %v1230 = vpop.f32.mrf.mxu0
        %v1231 = vadd.f32 0.0, %v1230
        %v1232 = vpop.f32.mrf.mxu0
        %1233 = vmatprep.mubr.bf16.mxu0 0
        %1234 = vmatmul.mubr.bf16.gmra.mxu0 %v1106
        %v1235 = vpop.f32.mrf.mxu0
        %v1236 = vadd.f32 0.0, %v1235
        %v1237 = vpop.f32.mrf.mxu0
        %v1238 = vpop.f32.mrf.mxu0
        %v1239 = vadd.f32 0.0, %v1238
        %v1240 = vpop.f32.mrf.mxu0
        %1241 = vmatprep.mubr.bf16.mxu0 0
        %1242 = vmatmul.mubr.bf16.gmra.mxu0 %v1107
        %v1243 = vpop.f32.mrf.mxu0
        %v1244 = vadd.f32 0.0, %v1243
        %v1245 = vpop.f32.mrf.mxu0
        %v1246 = vpop.f32.mrf.mxu0
        %v1247 = vadd.f32 0.0, %v1246
        %v1248 = vpop.f32.mrf.mxu0
        %1249 = vmatprep.mubr.bf16.mxu0 0
        %1250 = vmatmul.mubr.bf16.gmra.mxu0 %v1108
        %v1251 = vpop.f32.mrf.mxu0
        %v1252 = vadd.f32 0.0, %v1251
        %v1253 = vpop.f32.mrf.mxu0
        %v1254 = vpop.f32.mrf.mxu0
        %v1255 = vadd.f32 0.0, %v1254
        %v1256 = vpop.f32.mrf.mxu0
        %1257 = vmatprep.mubr.bf16.mxu0 0
        %1258 = vmatmul.mubr.bf16.gmra.mxu0 %v1109
        %v1259 = vpop.f32.mrf.mxu0
        %v1260 = vadd.f32 0.0, %v1259
        %v1261 = vpop.f32.mrf.mxu0
        %v1262 = vpop.f32.mrf.mxu0
        %v1263 = vadd.f32 0.0, %v1262
        %v1264 = vpop.f32.mrf.mxu0
        %1265 = vmatprep.mubr.bf16.mxu0 0
        %1266 = vmatmul.mubr.bf16.gmra.mxu0 %v1110
        %v1267 = vpop.f32.mrf.mxu0
        %v1268 = vadd.f32 0.0, %v1267
        %v1269 = vpop.f32.mrf.mxu0
        %v1270 = vpop.f32.mrf.mxu0
        %v1271 = vadd.f32 0.0, %v1270
        %v1272 = vpop.f32.mrf.mxu0
        %1273 = vmatprep.mubr.bf16.mxu0 0
        %1274 = vmatmul.mubr.bf16.gmra.mxu0 %v1111
        %v1275 = vpop.f32.mrf.mxu0
        %v1276 = vadd.f32 0.0, %v1275
        %v1277 = vpop.f32.mrf.mxu0
        %v1278 = vpop.f32.mrf.mxu0
        %v1279 = vadd.f32 0.0, %v1278
        %v1280 = vpop.f32.mrf.mxu0
        %1281 = vmatprep.mubr.bf16.mxu0 0
        %1282 = vmatmul.mubr.bf16.gmra.mxu0 %v1112
        %v1283 = vpop.f32.mrf.mxu0
        %v1284 = vadd.f32 0.0, %v1283
        %v1285 = vpop.f32.mrf.mxu0
        %v1286 = vpop.f32.mrf.mxu0
        %v1287 = vadd.f32 0.0, %v1286
        %v1288 = vpop.f32.mrf.mxu0
        %1289 = vmatprep.mubr.bf16.mxu0 0
        %1290 = vmatmul.mubr.bf16.gmra.mxu0 %v1113
        %v1291 = vpop.f32.mrf.mxu0
        %v1292 = vadd.f32 0.0, %v1291
        %v1293 = vpop.f32.mrf.mxu0
        %v1294 = vpop.f32.mrf.mxu0
        %v1295 = vadd.f32 0.0, %v1294
        %v1296 = vpop.f32.mrf.mxu0
        %1297 = vmatprep.mubr.bf16.mxu0 0
        %1298 = vmatmul.mubr.bf16.gmra.mxu0 %v1114
        %v1299 = vpop.f32.mrf.mxu0
        %v1300 = vadd.f32 0.0, %v1299
        %v1301 = vpop.f32.mrf.mxu0
        %v1302 = vpop.f32.mrf.mxu0
        %v1303 = vadd.f32 0.0, %v1302
        %v1304 = vpop.f32.mrf.mxu0
        %1305 = vmatprep.mubr.bf16.mxu0 0
        %1306 = vmatmul.mubr.bf16.gmra.mxu0 %v1115
        %v1307 = vpop.f32.mrf.mxu0
        %v1308 = vadd.f32 0.0, %v1307
        %v1309 = vpop.f32.mrf.mxu0
        %v1310 = vpop.f32.mrf.mxu0
        %v1311 = vadd.f32 0.0, %v1310
        %v1312 = vpop.f32.mrf.mxu0
        %1313 = vmatprep.mubr.bf16.mxu0 0
        %1314 = vmatmul.mubr.bf16.gmra.mxu0 %v1116
        %v1315 = vpop.f32.mrf.mxu0
        %v1316 = vadd.f32 0.0, %v1315
        %v1317 = vpop.f32.mrf.mxu0
        %v1318 = vpop.f32.mrf.mxu0
        %v1319 = vadd.f32 0.0, %v1318
        %v1320 = vpop.f32.mrf.mxu0
        %1321 = vmatprep.mubr.bf16.mxu0 0
        %1322 = vmatmul.mubr.bf16.gmra.mxu0 %v1117
        %v1323 = vpop.f32.mrf.mxu0
        %v1324 = vadd.f32 0.0, %v1323
        %v1325 = vpop.f32.mrf.mxu0
        %v1326 = vpop.f32.mrf.mxu0
        %v1327 = vadd.f32 0.0, %v1326
        %v1328 = vpop.f32.mrf.mxu0
        %1329 = vmatprep.mubr.bf16.mxu0 0
        %1330 = vmatmul.mubr.bf16.gmra.mxu0 %v1118
        %v1331 = vpop.f32.mrf.mxu0
        %v1332 = vadd.f32 0.0, %v1331
        %v1333 = vpop.f32.mrf.mxu0
        %v1334 = vpop.f32.mrf.mxu0
        %v1335 = vadd.f32 0.0, %v1334
        %v1336 = vpop.f32.mrf.mxu0
        %1337 = vmatprep.mubr.bf16.mxu0 0
        %1338 = vmatmul.mubr.bf16.gmra.mxu0 %v1119
        %v1339 = vpop.f32.mrf.mxu0
        %v1340 = vadd.f32 0.0, %v1339
        %v1341 = vpop.f32.mrf.mxu0
        %v1342 = vpop.f32.mrf.mxu0
        %v1343 = vadd.f32 0.0, %v1342
        %v1344 = vpop.f32.mrf.mxu0
        %1345 = vdwg.mxu0
        %v1362 = vunpack.c.l.b16 %v1055
        %v1363 = vunpack.c.l.b16 %v1056
        %v1364 = vunpack.c.l.b16 %v1057
        %v1365 = vunpack.c.l.b16 %v1058
        %v1366 = vunpack.c.l.b16 %v1059
        %v1367 = vunpack.c.l.b16 %v1060
        %v1368 = vunpack.c.l.b16 %v1061
        %v1369 = vunpack.c.l.b16 %v1062
        %v1370 = vunpack.c.l.b16 %v1063
        %v1371 = vunpack.c.l.b16 %v1064
        %v1372 = vunpack.c.l.b16 %v1065
        %v1373 = vunpack.c.l.b16 %v1066
        %v1374 = vunpack.c.l.b16 %v1067
        %v1375 = vunpack.c.l.b16 %v1068
        %v1376 = vunpack.c.l.b16 %v1069
        %v1377 = vunpack.c.l.b16 %v1070
        %v1378 = vpack.c.b16 %v1363, %v1362
        %v1379 = vpack.c.b16 %v1365, %v1364
        %v1380 = vpack.c.b16 %v1367, %v1366
        %v1381 = vpack.c.b16 %v1369, %v1368
        %v1382 = vpack.c.b16 %v1371, %v1370
        %v1383 = vpack.c.b16 %v1373, %v1372
        %v1384 = vpack.c.b16 %v1375, %v1374
        %v1385 = vpack.c.b16 %v1377, %v1376
        %1394 = vmatprep.subr.bf16.mxu0 0
        %1395 = vmatpush1.bf16.msra.mxu0 %v1385
        %1396 = vmatprep.subr.bf16.mxu0 0
        %1397 = vmatpush1.bf16.msra.mxu0 %v1384
        %1398 = vmatprep.subr.bf16.mxu0 0
        %1399 = vmatpush1.bf16.msra.mxu0 %v1383
        %1400 = vmatprep.subr.bf16.mxu0 0
        %1401 = vmatpush1.bf16.msra.mxu0 %v1382
        %1402 = vmatprep.subr.bf16.mxu0 0
        %1403 = vmatpush1.bf16.msra.mxu0 %v1381
        %1404 = vmatprep.subr.bf16.mxu0 0
        %1405 = vmatpush1.bf16.msra.mxu0 %v1380
        %1406 = vmatprep.subr.bf16.mxu0 0
        %1407 = vmatpush1.bf16.msra.mxu0 %v1379
        %1408 = vmatprep.subr.bf16.mxu0 0
        %1409 = vmatpush1.bf16.msra.mxu0 %v1378
        %1410 = vmatprep.subr.bf16.mxu0 0
        %1411 = vmatpush2.bf16.msra.mxu0 0
        %1412 = vmatprep.subr.bf16.mxu0 0
        %1413 = vmatpush2.bf16.msra.mxu0 0
        %1414 = vmatprep.subr.bf16.mxu0 0
        %1415 = vmatpush2.bf16.msra.mxu0 0
        %1416 = vmatprep.subr.bf16.mxu0 0
        %1417 = vmatpush2.bf16.msra.mxu0 0
        %1418 = vmatprep.subr.bf16.mxu0 0
        %1419 = vmatpush2.bf16.msra.mxu0 0
        %1420 = vmatprep.subr.bf16.mxu0 0
        %1421 = vmatpush2.bf16.msra.mxu0 0
        %1422 = vmatprep.subr.bf16.mxu0 0
        %1423 = vmatpush2.bf16.msra.mxu0 0
        %1424 = vmatprep.subr.bf16.mxu0 0
        %1425 = vmatpush2.bf16.msra.mxu0 0
        %1426 = vmatprep.mubr.bf16.mxu0 0
        %1427 = vmatmul.mubr.bf16.gmra.mxu0 %v1039
        %v1428 = vpop.f32.mrf.mxu0
        %v1429 = vadd.f32 %v1220, %v1428
        %v1430 = vpop.f32.mrf.mxu0
        %v1431 = vpop.f32.mrf.mxu0
        %v1432 = vadd.f32 %v1223, %v1431
        %v1433 = vpop.f32.mrf.mxu0
        %1434 = vmatprep.mubr.bf16.mxu0 0
        %1435 = vmatmul.mubr.bf16.gmra.mxu0 %v1040
        %v1436 = vpop.f32.mrf.mxu0
        %v1437 = vadd.f32 %v1228, %v1436
        %v1438 = vpop.f32.mrf.mxu0
        %v1439 = vpop.f32.mrf.mxu0
        %v1440 = vadd.f32 %v1231, %v1439
        %v1441 = vpop.f32.mrf.mxu0
        %1442 = vmatprep.mubr.bf16.mxu0 0
        %1443 = vmatmul.mubr.bf16.gmra.mxu0 %v1041
        %v1444 = vpop.f32.mrf.mxu0
        %v1445 = vadd.f32 %v1236, %v1444
        %v1446 = vpop.f32.mrf.mxu0
        %v1447 = vpop.f32.mrf.mxu0
        %v1448 = vadd.f32 %v1239, %v1447
        %v1449 = vpop.f32.mrf.mxu0
        %1450 = vmatprep.mubr.bf16.mxu0 0
        %1451 = vmatmul.mubr.bf16.gmra.mxu0 %v1042
        %v1452 = vpop.f32.mrf.mxu0
        %v1453 = vadd.f32 %v1244, %v1452
        %v1454 = vpop.f32.mrf.mxu0
        %v1455 = vpop.f32.mrf.mxu0
        %v1456 = vadd.f32 %v1247, %v1455
        %v1457 = vpop.f32.mrf.mxu0
        %1458 = vmatprep.mubr.bf16.mxu0 0
        %1459 = vmatmul.mubr.bf16.gmra.mxu0 %v1043
        %v1460 = vpop.f32.mrf.mxu0
        %v1461 = vadd.f32 %v1252, %v1460
        %v1462 = vpop.f32.mrf.mxu0
        %v1463 = vpop.f32.mrf.mxu0
        %v1464 = vadd.f32 %v1255, %v1463
        %v1465 = vpop.f32.mrf.mxu0
        %1466 = vmatprep.mubr.bf16.mxu0 0
        %1467 = vmatmul.mubr.bf16.gmra.mxu0 %v1044
        %v1468 = vpop.f32.mrf.mxu0
        %v1469 = vadd.f32 %v1260, %v1468
        %v1470 = vpop.f32.mrf.mxu0
        %v1471 = vpop.f32.mrf.mxu0
        %v1472 = vadd.f32 %v1263, %v1471
        %v1473 = vpop.f32.mrf.mxu0
        %1474 = vmatprep.mubr.bf16.mxu0 0
        %1475 = vmatmul.mubr.bf16.gmra.mxu0 %v1045
        %v1476 = vpop.f32.mrf.mxu0
        %v1477 = vadd.f32 %v1268, %v1476
        %v1478 = vpop.f32.mrf.mxu0
        %v1479 = vpop.f32.mrf.mxu0
        %v1480 = vadd.f32 %v1271, %v1479
        %v1481 = vpop.f32.mrf.mxu0
        %1482 = vmatprep.mubr.bf16.mxu0 0
        %1483 = vmatmul.mubr.bf16.gmra.mxu0 %v1046
        %v1484 = vpop.f32.mrf.mxu0
        %v1485 = vadd.f32 %v1276, %v1484
        %v1486 = vpop.f32.mrf.mxu0
        %v1487 = vpop.f32.mrf.mxu0
        %v1488 = vadd.f32 %v1279, %v1487
        %v1489 = vpop.f32.mrf.mxu0
        %1490 = vmatprep.mubr.bf16.mxu0 0
        %1491 = vmatmul.mubr.bf16.gmra.mxu0 %v1047
        %v1492 = vpop.f32.mrf.mxu0
        %v1493 = vadd.f32 %v1284, %v1492
        %v1494 = vpop.f32.mrf.mxu0
        %v1495 = vpop.f32.mrf.mxu0
        %v1496 = vadd.f32 %v1287, %v1495
        %v1497 = vpop.f32.mrf.mxu0
        %1498 = vmatprep.mubr.bf16.mxu0 0
        %1499 = vmatmul.mubr.bf16.gmra.mxu0 %v1048
        %v1500 = vpop.f32.mrf.mxu0
        %v1501 = vadd.f32 %v1292, %v1500
        %v1502 = vpop.f32.mrf.mxu0
        %v1503 = vpop.f32.mrf.mxu0
        %v1504 = vadd.f32 %v1295, %v1503
        %v1505 = vpop.f32.mrf.mxu0
        %1506 = vmatprep.mubr.bf16.mxu0 0
        %1507 = vmatmul.mubr.bf16.gmra.mxu0 %v1049
        %v1508 = vpop.f32.mrf.mxu0
        %v1509 = vadd.f32 %v1300, %v1508
        %v1510 = vpop.f32.mrf.mxu0
        %v1511 = vpop.f32.mrf.mxu0
        %v1512 = vadd.f32 %v1303, %v1511
        %v1513 = vpop.f32.mrf.mxu0
        %1514 = vmatprep.mubr.bf16.mxu0 0
        %1515 = vmatmul.mubr.bf16.gmra.mxu0 %v1050
        %v1516 = vpop.f32.mrf.mxu0
        %v1517 = vadd.f32 %v1308, %v1516
        %v1518 = vpop.f32.mrf.mxu0
        %v1519 = vpop.f32.mrf.mxu0
        %v1520 = vadd.f32 %v1311, %v1519
        %v1521 = vpop.f32.mrf.mxu0
        %1522 = vmatprep.mubr.bf16.mxu0 0
        %1523 = vmatmul.mubr.bf16.gmra.mxu0 %v1051
        %v1524 = vpop.f32.mrf.mxu0
        %v1525 = vadd.f32 %v1316, %v1524
        %v1526 = vpop.f32.mrf.mxu0
        %v1527 = vpop.f32.mrf.mxu0
        %v1528 = vadd.f32 %v1319, %v1527
        %v1529 = vpop.f32.mrf.mxu0
        %1530 = vmatprep.mubr.bf16.mxu0 0
        %1531 = vmatmul.mubr.bf16.gmra.mxu0 %v1052
        %v1532 = vpop.f32.mrf.mxu0
        %v1533 = vadd.f32 %v1324, %v1532
        %v1534 = vpop.f32.mrf.mxu0
        %v1535 = vpop.f32.mrf.mxu0
        %v1536 = vadd.f32 %v1327, %v1535
        %v1537 = vpop.f32.mrf.mxu0
        %1538 = vmatprep.mubr.bf16.mxu0 0
        %1539 = vmatmul.mubr.bf16.gmra.mxu0 %v1053
        %v1540 = vpop.f32.mrf.mxu0
        %v1541 = vadd.f32 %v1332, %v1540
        %v1542 = vpop.f32.mrf.mxu0
        %v1543 = vpop.f32.mrf.mxu0
        %v1544 = vadd.f32 %v1335, %v1543
        %v1545 = vpop.f32.mrf.mxu0
        %1546 = vmatprep.mubr.bf16.mxu0 0
        %1547 = vmatmul.mubr.bf16.gmra.mxu0 %v1054
        %v1548 = vpop.f32.mrf.mxu0
        %v1549 = vadd.f32 %v1340, %v1548
        %v1550 = vpop.f32.mrf.mxu0
        %v1551 = vpop.f32.mrf.mxu0
        %v1552 = vadd.f32 %v1343, %v1551
        %v1553 = vpop.f32.mrf.mxu0
        %1554 = vdwg.mxu0
        %v1555 = vld [vmem:[%s1006 + $0x1] sm:$0xff]
        %v1556 = vld [vmem:[%s1006 + $0x9] sm:$0xff]
        %v1557 = vld [vmem:[%s1006 + $0x19] sm:$0xff]
        %v1558 = vld [vmem:[%s1006 + $0x21] sm:$0xff]
        %v1559 = vld [vmem:[%s1006 + $0x31] sm:$0xff]
        %v1560 = vld [vmem:[%s1006 + $0x39] sm:$0xff]
        %v1561 = vld [vmem:[%s1006 + $0x49] sm:$0xff]
        %v1562 = vld [vmem:[%s1006 + $0x51] sm:$0xff]
        %v1563 = vld [vmem:[%s1006 + $0x61] sm:$0xff]
        %v1564 = vld [vmem:[%s1006 + $0x69] sm:$0xff]
        %v1565 = vld [vmem:[%s1006 + $0x79] sm:$0xff]
        %v1566 = vld [vmem:[%s1006 + $0x81] sm:$0xff]
        %v1567 = vld [vmem:[%s1006 + $0x91] sm:$0xff]
        %v1568 = vld [vmem:[%s1006 + $0x99] sm:$0xff]
        %v1569 = vld [vmem:[%s1006 + $0xa9] sm:$0xff]
        %v1570 = vld [vmem:[%s1006 + $0xb1] sm:$0xff]
        %v1571 = vld [vmem:[%s1006 + $0xc1] sm:$0xff]
        %v1572 = vld [vmem:[%s1006 + $0xc9] sm:$0xff]
        %v1573 = vld [vmem:[%s1006 + $0xd9] sm:$0xff]
        %v1574 = vld [vmem:[%s1006 + $0xe1] sm:$0xff]
        %v1575 = vld [vmem:[%s1006 + $0xf1] sm:$0xff]
        %v1576 = vld [vmem:[%s1006 + $0xf9] sm:$0xff]
        %v1577 = vld [vmem:[%s1006 + $0x109] sm:$0xff]
        %v1578 = vld [vmem:[%s1006 + $0x111] sm:$0xff]
        %v1579 = vld [vmem:[%s1006 + $0x121] sm:$0xff]
        %v1580 = vld [vmem:[%s1006 + $0x129] sm:$0xff]
        %v1581 = vld [vmem:[%s1006 + $0x139] sm:$0xff]
        %v1582 = vld [vmem:[%s1006 + $0x141] sm:$0xff]
        %v1583 = vld [vmem:[%s1006 + $0x151] sm:$0xff]
        %v1584 = vld [vmem:[%s1006 + $0x159] sm:$0xff]
        %v1585 = vld [vmem:[%s1006 + $0x169] sm:$0xff]
        %v1586 = vld [vmem:[%s1006 + $0x171] sm:$0xff]
        %v1587 = vpack.c.bf16 %v1556, %v1555
        %v1588 = vpack.c.bf16 %v1558, %v1557
        %v1589 = vpack.c.bf16 %v1560, %v1559
        %v1590 = vpack.c.bf16 %v1562, %v1561
        %v1591 = vpack.c.bf16 %v1564, %v1563
        %v1592 = vpack.c.bf16 %v1566, %v1565
        %v1593 = vpack.c.bf16 %v1568, %v1567
        %v1594 = vpack.c.bf16 %v1570, %v1569
        %v1595 = vpack.c.bf16 %v1572, %v1571
        %v1596 = vpack.c.bf16 %v1574, %v1573
        %v1597 = vpack.c.bf16 %v1576, %v1575
        %v1598 = vpack.c.bf16 %v1578, %v1577
        %v1599 = vpack.c.bf16 %v1580, %v1579
        %v1600 = vpack.c.bf16 %v1582, %v1581
        %v1601 = vpack.c.bf16 %v1584, %v1583
        %v1602 = vpack.c.bf16 %v1586, %v1585
        %s1603 = scalar_lea.vmem [#allocation11], 128
        %v1604 = vld [vmem:[%s1603] sm:$0xf]
        %v1605 = vld [vmem:[%s1603 + $0x4] sm:$0xf]
        %v1606 = vld [vmem:[%s1603 + $0x8] sm:$0xf]
        %v1607 = vld [vmem:[%s1603 + $0xc] sm:$0xf]
        %v1608 = vld [vmem:[%s1603 + $0x10] sm:$0xf]
        %v1609 = vld [vmem:[%s1603 + $0x14] sm:$0xf]
        %v1610 = vld [vmem:[%s1603 + $0x18] sm:$0xf]
        %v1611 = vld [vmem:[%s1603 + $0x1c] sm:$0xf]
        %v1612 = vld [vmem:[%s1603 + $0x20] sm:$0xf]
        %v1613 = vld [vmem:[%s1603 + $0x24] sm:$0xf]
        %v1614 = vld [vmem:[%s1603 + $0x28] sm:$0xf]
        %v1615 = vld [vmem:[%s1603 + $0x2c] sm:$0xf]
        %v1616 = vld [vmem:[%s1603 + $0x30] sm:$0xf]
        %v1617 = vld [vmem:[%s1603 + $0x34] sm:$0xf]
        %v1618 = vld [vmem:[%s1603 + $0x38] sm:$0xf]
        %v1619 = vld [vmem:[%s1603 + $0x3c] sm:$0xf]
        %v1636 = vunpack.c.l.b16 %v1604
        %v1637 = vunpack.c.l.b16 %v1605
        %v1638 = vunpack.c.l.b16 %v1606
        %v1639 = vunpack.c.l.b16 %v1607
        %v1640 = vunpack.c.l.b16 %v1608
        %v1641 = vunpack.c.l.b16 %v1609
        %v1642 = vunpack.c.l.b16 %v1610
        %v1643 = vunpack.c.l.b16 %v1611
        %v1644 = vunpack.c.l.b16 %v1612
        %v1645 = vunpack.c.l.b16 %v1613
        %v1646 = vunpack.c.l.b16 %v1614
        %v1647 = vunpack.c.l.b16 %v1615
        %v1648 = vunpack.c.l.b16 %v1616
        %v1649 = vunpack.c.l.b16 %v1617
        %v1650 = vunpack.c.l.b16 %v1618
        %v1651 = vunpack.c.l.b16 %v1619
        %v1652 = vpack.c.b16 %v1637, %v1636
        %v1653 = vpack.c.b16 %v1639, %v1638
        %v1654 = vpack.c.b16 %v1641, %v1640
        %v1655 = vpack.c.b16 %v1643, %v1642
        %v1656 = vpack.c.b16 %v1645, %v1644
        %v1657 = vpack.c.b16 %v1647, %v1646
        %v1658 = vpack.c.b16 %v1649, %v1648
        %v1659 = vpack.c.b16 %v1651, %v1650
        %1668 = vmatprep.subr.bf16.mxu0 0
        %1669 = vmatpush1.bf16.msra.mxu0 %v1659
        %1670 = vmatprep.subr.bf16.mxu0 0
        %1671 = vmatpush1.bf16.msra.mxu0 %v1658
        %1672 = vmatprep.subr.bf16.mxu0 0
        %1673 = vmatpush1.bf16.msra.mxu0 %v1657
        %1674 = vmatprep.subr.bf16.mxu0 0
        %1675 = vmatpush1.bf16.msra.mxu0 %v1656
        %1676 = vmatprep.subr.bf16.mxu0 0
        %1677 = vmatpush1.bf16.msra.mxu0 %v1655
        %1678 = vmatprep.subr.bf16.mxu0 0
        %1679 = vmatpush1.bf16.msra.mxu0 %v1654
        %1680 = vmatprep.subr.bf16.mxu0 0
        %1681 = vmatpush1.bf16.msra.mxu0 %v1653
        %1682 = vmatprep.subr.bf16.mxu0 0
        %1683 = vmatpush1.bf16.msra.mxu0 %v1652
        %1684 = vmatprep.subr.bf16.mxu0 0
        %1685 = vmatpush2.bf16.msra.mxu0 0
        %1686 = vmatprep.subr.bf16.mxu0 0
        %1687 = vmatpush2.bf16.msra.mxu0 0
        %1688 = vmatprep.subr.bf16.mxu0 0
        %1689 = vmatpush2.bf16.msra.mxu0 0
        %1690 = vmatprep.subr.bf16.mxu0 0
        %1691 = vmatpush2.bf16.msra.mxu0 0
        %1692 = vmatprep.subr.bf16.mxu0 0
        %1693 = vmatpush2.bf16.msra.mxu0 0
        %1694 = vmatprep.subr.bf16.mxu0 0
        %1695 = vmatpush2.bf16.msra.mxu0 0
        %1696 = vmatprep.subr.bf16.mxu0 0
        %1697 = vmatpush2.bf16.msra.mxu0 0
        %1698 = vmatprep.subr.bf16.mxu0 0
        %1699 = vmatpush2.bf16.msra.mxu0 0
        %1700 = vmatprep.mubr.bf16.mxu0 0
        %1701 = vmatmul.mubr.bf16.gmra.mxu0 %v1587
        %v1702 = vpop.f32.mrf.mxu0
        %v1703 = vadd.f32 0.0, %v1702
        %v1704 = vpop.f32.mrf.mxu0
        %v1705 = vpop.f32.mrf.mxu0
        %v1706 = vadd.f32 0.0, %v1705
        %v1707 = vpop.f32.mrf.mxu0
        %1708 = vmatprep.mubr.bf16.mxu0 0
        %1709 = vmatmul.mubr.bf16.gmra.mxu0 %v1588
        %v1710 = vpop.f32.mrf.mxu0
        %v1711 = vadd.f32 0.0, %v1710
        %v1712 = vpop.f32.mrf.mxu0
        %v1713 = vpop.f32.mrf.mxu0
        %v1714 = vadd.f32 0.0, %v1713
        %v1715 = vpop.f32.mrf.mxu0
        %1716 = vmatprep.mubr.bf16.mxu0 0
        %1717 = vmatmul.mubr.bf16.gmra.mxu0 %v1589
        %v1718 = vpop.f32.mrf.mxu0
        %v1719 = vadd.f32 0.0, %v1718
        %v1720 = vpop.f32.mrf.mxu0
        %v1721 = vpop.f32.mrf.mxu0
        %v1722 = vadd.f32 0.0, %v1721
        %v1723 = vpop.f32.mrf.mxu0
        %1724 = vmatprep.mubr.bf16.mxu0 0
        %1725 = vmatmul.mubr.bf16.gmra.mxu0 %v1590
        %v1726 = vpop.f32.mrf.mxu0
        %v1727 = vadd.f32 0.0, %v1726
        %v1728 = vpop.f32.mrf.mxu0
        %v1729 = vpop.f32.mrf.mxu0
        %v1730 = vadd.f32 0.0, %v1729
        %v1731 = vpop.f32.mrf.mxu0
        %1732 = vmatprep.mubr.bf16.mxu0 0
        %1733 = vmatmul.mubr.bf16.gmra.mxu0 %v1591
        %v1734 = vpop.f32.mrf.mxu0
        %v1735 = vadd.f32 0.0, %v1734
        %v1736 = vpop.f32.mrf.mxu0
        %v1737 = vpop.f32.mrf.mxu0
        %v1738 = vadd.f32 0.0, %v1737
        %v1739 = vpop.f32.mrf.mxu0
        %1740 = vmatprep.mubr.bf16.mxu0 0
        %1741 = vmatmul.mubr.bf16.gmra.mxu0 %v1592
        %v1742 = vpop.f32.mrf.mxu0
        %v1743 = vadd.f32 0.0, %v1742
        %v1744 = vpop.f32.mrf.mxu0
        %v1745 = vpop.f32.mrf.mxu0
        %v1746 = vadd.f32 0.0, %v1745
        %v1747 = vpop.f32.mrf.mxu0
        %1748 = vmatprep.mubr.bf16.mxu0 0
        %1749 = vmatmul.mubr.bf16.gmra.mxu0 %v1593
        %v1750 = vpop.f32.mrf.mxu0
        %v1751 = vadd.f32 0.0, %v1750
        %v1752 = vpop.f32.mrf.mxu0
        %v1753 = vpop.f32.mrf.mxu0
        %v1754 = vadd.f32 0.0, %v1753
        %v1755 = vpop.f32.mrf.mxu0
        %1756 = vmatprep.mubr.bf16.mxu0 0
        %1757 = vmatmul.mubr.bf16.gmra.mxu0 %v1594
        %v1758 = vpop.f32.mrf.mxu0
        %v1759 = vadd.f32 0.0, %v1758
        %v1760 = vpop.f32.mrf.mxu0
        %v1761 = vpop.f32.mrf.mxu0
        %v1762 = vadd.f32 0.0, %v1761
        %v1763 = vpop.f32.mrf.mxu0
        %1764 = vmatprep.mubr.bf16.mxu0 0
        %1765 = vmatmul.mubr.bf16.gmra.mxu0 %v1595
        %v1766 = vpop.f32.mrf.mxu0
        %v1767 = vadd.f32 0.0, %v1766
        %v1768 = vpop.f32.mrf.mxu0
        %v1769 = vpop.f32.mrf.mxu0
        %v1770 = vadd.f32 0.0, %v1769
        %v1771 = vpop.f32.mrf.mxu0
        %1772 = vmatprep.mubr.bf16.mxu0 0
        %1773 = vmatmul.mubr.bf16.gmra.mxu0 %v1596
        %v1774 = vpop.f32.mrf.mxu0
        %v1775 = vadd.f32 0.0, %v1774
        %v1776 = vpop.f32.mrf.mxu0
        %v1777 = vpop.f32.mrf.mxu0
        %v1778 = vadd.f32 0.0, %v1777
        %v1779 = vpop.f32.mrf.mxu0
        %1780 = vmatprep.mubr.bf16.mxu0 0
        %1781 = vmatmul.mubr.bf16.gmra.mxu0 %v1597
        %v1782 = vpop.f32.mrf.mxu0
        %v1783 = vadd.f32 0.0, %v1782
        %v1784 = vpop.f32.mrf.mxu0
        %v1785 = vpop.f32.mrf.mxu0
        %v1786 = vadd.f32 0.0, %v1785
        %v1787 = vpop.f32.mrf.mxu0
        %1788 = vmatprep.mubr.bf16.mxu0 0
        %1789 = vmatmul.mubr.bf16.gmra.mxu0 %v1598
        %v1790 = vpop.f32.mrf.mxu0
        %v1791 = vadd.f32 0.0, %v1790
        %v1792 = vpop.f32.mrf.mxu0
        %v1793 = vpop.f32.mrf.mxu0
        %v1794 = vadd.f32 0.0, %v1793
        %v1795 = vpop.f32.mrf.mxu0
        %1796 = vmatprep.mubr.bf16.mxu0 0
        %1797 = vmatmul.mubr.bf16.gmra.mxu0 %v1599
        %v1798 = vpop.f32.mrf.mxu0
        %v1799 = vadd.f32 0.0, %v1798
        %v1800 = vpop.f32.mrf.mxu0
        %v1801 = vpop.f32.mrf.mxu0
        %v1802 = vadd.f32 0.0, %v1801
        %v1803 = vpop.f32.mrf.mxu0
        %1804 = vmatprep.mubr.bf16.mxu0 0
        %1805 = vmatmul.mubr.bf16.gmra.mxu0 %v1600
        %v1806 = vpop.f32.mrf.mxu0
        %v1807 = vadd.f32 0.0, %v1806
        %v1808 = vpop.f32.mrf.mxu0
        %v1809 = vpop.f32.mrf.mxu0
        %v1810 = vadd.f32 0.0, %v1809
        %v1811 = vpop.f32.mrf.mxu0
        %1812 = vmatprep.mubr.bf16.mxu0 0
        %1813 = vmatmul.mubr.bf16.gmra.mxu0 %v1601
        %v1814 = vpop.f32.mrf.mxu0
        %v1815 = vadd.f32 0.0, %v1814
        %v1816 = vpop.f32.mrf.mxu0
        %v1817 = vpop.f32.mrf.mxu0
        %v1818 = vadd.f32 0.0, %v1817
        %v1819 = vpop.f32.mrf.mxu0
        %1820 = vmatprep.mubr.bf16.mxu0 0
        %1821 = vmatmul.mubr.bf16.gmra.mxu0 %v1602
        %v1822 = vpop.f32.mrf.mxu0
        %v1823 = vadd.f32 0.0, %v1822
        %v1824 = vpop.f32.mrf.mxu0
        %v1825 = vpop.f32.mrf.mxu0
        %v1826 = vadd.f32 0.0, %v1825
        %v1827 = vpop.f32.mrf.mxu0
        %1828 = vdwg.mxu0
        %v1829 = vadd.f32 %v1429, %v1703
        %v1830 = vadd.f32 %v1432, %v1706
        %v1831 = vadd.f32 %v1437, %v1711
        %v1832 = vadd.f32 %v1440, %v1714
        %v1833 = vadd.f32 %v1445, %v1719
        %v1834 = vadd.f32 %v1448, %v1722
        %v1835 = vadd.f32 %v1453, %v1727
        %v1836 = vadd.f32 %v1456, %v1730
        %v1837 = vadd.f32 %v1461, %v1735
        %v1838 = vadd.f32 %v1464, %v1738
        %v1839 = vadd.f32 %v1469, %v1743
        %v1840 = vadd.f32 %v1472, %v1746
        %v1841 = vadd.f32 %v1477, %v1751
        %v1842 = vadd.f32 %v1480, %v1754
        %v1843 = vadd.f32 %v1485, %v1759
        %v1844 = vadd.f32 %v1488, %v1762
        %v1845 = vadd.f32 %v1493, %v1767
        %v1846 = vadd.f32 %v1496, %v1770
        %v1847 = vadd.f32 %v1501, %v1775
        %v1848 = vadd.f32 %v1504, %v1778
        %v1849 = vadd.f32 %v1509, %v1783
        %v1850 = vadd.f32 %v1512, %v1786
        %v1851 = vadd.f32 %v1517, %v1791
        %v1852 = vadd.f32 %v1520, %v1794
        %v1853 = vadd.f32 %v1525, %v1799
        %v1854 = vadd.f32 %v1528, %v1802
        %v1855 = vadd.f32 %v1533, %v1807
        %v1856 = vadd.f32 %v1536, %v1810
        %v1857 = vadd.f32 %v1541, %v1815
        %v1858 = vadd.f32 %v1544, %v1818
        %v1859 = vadd.f32 %v1549, %v1823
        %v1860 = vadd.f32 %v1552, %v1826
        %v1861 = vld [vmem:[%s779] sm:$0xff]
        %v1862 = vld [vmem:[%s779 + $0x8] sm:$0xff]
        %v1863 = vld [vmem:[%s779 + $0x18] sm:$0xff]
        %v1864 = vld [vmem:[%s779 + $0x20] sm:$0xff]
        %v1865 = vld [vmem:[%s779 + $0x30] sm:$0xff]
        %v1866 = vld [vmem:[%s779 + $0x38] sm:$0xff]
        %v1867 = vld [vmem:[%s779 + $0x48] sm:$0xff]
        %v1868 = vld [vmem:[%s779 + $0x50] sm:$0xff]
        %v1869 = vld [vmem:[%s779 + $0x60] sm:$0xff]
        %v1870 = vld [vmem:[%s779 + $0x68] sm:$0xff]
        %v1871 = vld [vmem:[%s779 + $0x78] sm:$0xff]
        %v1872 = vld [vmem:[%s779 + $0x80] sm:$0xff]
        %v1873 = vld [vmem:[%s779 + $0x90] sm:$0xff]
        %v1874 = vld [vmem:[%s779 + $0x98] sm:$0xff]
        %v1875 = vld [vmem:[%s779 + $0xa8] sm:$0xff]
        %v1876 = vld [vmem:[%s779 + $0xb0] sm:$0xff]
        %v1877 = vld [vmem:[%s779 + $0xc0] sm:$0xff]
        %v1878 = vld [vmem:[%s779 + $0xc8] sm:$0xff]
        %v1879 = vld [vmem:[%s779 + $0xd8] sm:$0xff]
        %v1880 = vld [vmem:[%s779 + $0xe0] sm:$0xff]
        %v1881 = vld [vmem:[%s779 + $0xf0] sm:$0xff]
        %v1882 = vld [vmem:[%s779 + $0xf8] sm:$0xff]
        %v1883 = vld [vmem:[%s779 + $0x108] sm:$0xff]
        %v1884 = vld [vmem:[%s779 + $0x110] sm:$0xff]
        %v1885 = vld [vmem:[%s779 + $0x120] sm:$0xff]
        %v1886 = vld [vmem:[%s779 + $0x128] sm:$0xff]
        %v1887 = vld [vmem:[%s779 + $0x138] sm:$0xff]
        %v1888 = vld [vmem:[%s779 + $0x140] sm:$0xff]
        %v1889 = vld [vmem:[%s779 + $0x150] sm:$0xff]
        %v1890 = vld [vmem:[%s779 + $0x158] sm:$0xff]
        %v1891 = vld [vmem:[%s779 + $0x168] sm:$0xff]
        %v1892 = vld [vmem:[%s779 + $0x170] sm:$0xff]
        %v1893 = vpack.c.bf16 %v1862, %v1861
        %v1894 = vpack.c.bf16 %v1864, %v1863
        %v1895 = vpack.c.bf16 %v1866, %v1865
        %v1896 = vpack.c.bf16 %v1868, %v1867
        %v1897 = vpack.c.bf16 %v1870, %v1869
        %v1898 = vpack.c.bf16 %v1872, %v1871
        %v1899 = vpack.c.bf16 %v1874, %v1873
        %v1900 = vpack.c.bf16 %v1876, %v1875
        %v1901 = vpack.c.bf16 %v1878, %v1877
        %v1902 = vpack.c.bf16 %v1880, %v1879
        %v1903 = vpack.c.bf16 %v1882, %v1881
        %v1904 = vpack.c.bf16 %v1884, %v1883
        %v1905 = vpack.c.bf16 %v1886, %v1885
        %v1906 = vpack.c.bf16 %v1888, %v1887
        %v1907 = vpack.c.bf16 %v1890, %v1889
        %v1908 = vpack.c.bf16 %v1892, %v1891
        %s1909 = scalar_lea.vmem [#allocation11], 192
        %v1910 = vld [vmem:[%s1909] sm:$0xf]
        %v1911 = vld [vmem:[%s1909 + $0x4] sm:$0xf]
        %v1912 = vld [vmem:[%s1909 + $0x8] sm:$0xf]
        %v1913 = vld [vmem:[%s1909 + $0xc] sm:$0xf]
        %v1914 = vld [vmem:[%s1909 + $0x10] sm:$0xf]
        %v1915 = vld [vmem:[%s1909 + $0x14] sm:$0xf]
        %v1916 = vld [vmem:[%s1909 + $0x18] sm:$0xf]
        %v1917 = vld [vmem:[%s1909 + $0x1c] sm:$0xf]
        %v1918 = vld [vmem:[%s1909 + $0x20] sm:$0xf]
        %v1919 = vld [vmem:[%s1909 + $0x24] sm:$0xf]
        %v1920 = vld [vmem:[%s1909 + $0x28] sm:$0xf]
        %v1921 = vld [vmem:[%s1909 + $0x2c] sm:$0xf]
        %v1922 = vld [vmem:[%s1909 + $0x30] sm:$0xf]
        %v1923 = vld [vmem:[%s1909 + $0x34] sm:$0xf]
        %v1924 = vld [vmem:[%s1909 + $0x38] sm:$0xf]
        %v1925 = vld [vmem:[%s1909 + $0x3c] sm:$0xf]
        %v1942 = vunpack.c.l.b16 %v1910
        %v1943 = vunpack.c.l.b16 %v1911
        %v1944 = vunpack.c.l.b16 %v1912
        %v1945 = vunpack.c.l.b16 %v1913
        %v1946 = vunpack.c.l.b16 %v1914
        %v1947 = vunpack.c.l.b16 %v1915
        %v1948 = vunpack.c.l.b16 %v1916
        %v1949 = vunpack.c.l.b16 %v1917
        %v1950 = vunpack.c.l.b16 %v1918
        %v1951 = vunpack.c.l.b16 %v1919
        %v1952 = vunpack.c.l.b16 %v1920
        %v1953 = vunpack.c.l.b16 %v1921
        %v1954 = vunpack.c.l.b16 %v1922
        %v1955 = vunpack.c.l.b16 %v1923
        %v1956 = vunpack.c.l.b16 %v1924
        %v1957 = vunpack.c.l.b16 %v1925
        %v1958 = vpack.c.b16 %v1943, %v1942
        %v1959 = vpack.c.b16 %v1945, %v1944
        %v1960 = vpack.c.b16 %v1947, %v1946
        %v1961 = vpack.c.b16 %v1949, %v1948
        %v1962 = vpack.c.b16 %v1951, %v1950
        %v1963 = vpack.c.b16 %v1953, %v1952
        %v1964 = vpack.c.b16 %v1955, %v1954
        %v1965 = vpack.c.b16 %v1957, %v1956
        %1974 = vmatprep.subr.bf16.mxu0 0
        %1975 = vmatpush1.bf16.msra.mxu0 %v1965
        %1976 = vmatprep.subr.bf16.mxu0 0
        %1977 = vmatpush1.bf16.msra.mxu0 %v1964
        %1978 = vmatprep.subr.bf16.mxu0 0
        %1979 = vmatpush1.bf16.msra.mxu0 %v1963
        %1980 = vmatprep.subr.bf16.mxu0 0
        %1981 = vmatpush1.bf16.msra.mxu0 %v1962
        %1982 = vmatprep.subr.bf16.mxu0 0
        %1983 = vmatpush1.bf16.msra.mxu0 %v1961
        %1984 = vmatprep.subr.bf16.mxu0 0
        %1985 = vmatpush1.bf16.msra.mxu0 %v1960
        %1986 = vmatprep.subr.bf16.mxu0 0
        %1987 = vmatpush1.bf16.msra.mxu0 %v1959
        %1988 = vmatprep.subr.bf16.mxu0 0
        %1989 = vmatpush1.bf16.msra.mxu0 %v1958
        %1990 = vmatprep.subr.bf16.mxu0 0
        %1991 = vmatpush2.bf16.msra.mxu0 0
        %1992 = vmatprep.subr.bf16.mxu0 0
        %1993 = vmatpush2.bf16.msra.mxu0 0
        %1994 = vmatprep.subr.bf16.mxu0 0
        %1995 = vmatpush2.bf16.msra.mxu0 0
        %1996 = vmatprep.subr.bf16.mxu0 0
        %1997 = vmatpush2.bf16.msra.mxu0 0
        %1998 = vmatprep.subr.bf16.mxu0 0
        %1999 = vmatpush2.bf16.msra.mxu0 0
        %2000 = vmatprep.subr.bf16.mxu0 0
        %2001 = vmatpush2.bf16.msra.mxu0 0
        %2002 = vmatprep.subr.bf16.mxu0 0
        %2003 = vmatpush2.bf16.msra.mxu0 0
        %2004 = vmatprep.subr.bf16.mxu0 0
        %2005 = vmatpush2.bf16.msra.mxu0 0
        %2006 = vmatprep.mubr.bf16.mxu0 0
        %2007 = vmatmul.mubr.bf16.gmra.mxu0 %v1893
        %v2008 = vpop.f32.mrf.mxu0
        %v2009 = vadd.f32 0.0, %v2008
        %v2010 = vpop.f32.mrf.mxu0
        %v2011 = vpop.f32.mrf.mxu0
        %v2012 = vadd.f32 0.0, %v2011
        %v2013 = vpop.f32.mrf.mxu0
        %2014 = vmatprep.mubr.bf16.mxu0 0
        %2015 = vmatmul.mubr.bf16.gmra.mxu0 %v1894
        %v2016 = vpop.f32.mrf.mxu0
        %v2017 = vadd.f32 0.0, %v2016
        %v2018 = vpop.f32.mrf.mxu0
        %v2019 = vpop.f32.mrf.mxu0
        %v2020 = vadd.f32 0.0, %v2019
        %v2021 = vpop.f32.mrf.mxu0
        %2022 = vmatprep.mubr.bf16.mxu0 0
        %2023 = vmatmul.mubr.bf16.gmra.mxu0 %v1895
        %v2024 = vpop.f32.mrf.mxu0
        %v2025 = vadd.f32 0.0, %v2024
        %v2026 = vpop.f32.mrf.mxu0
        %v2027 = vpop.f32.mrf.mxu0
        %v2028 = vadd.f32 0.0, %v2027
        %v2029 = vpop.f32.mrf.mxu0
        %2030 = vmatprep.mubr.bf16.mxu0 0
        %2031 = vmatmul.mubr.bf16.gmra.mxu0 %v1896
        %v2032 = vpop.f32.mrf.mxu0
        %v2033 = vadd.f32 0.0, %v2032
        %v2034 = vpop.f32.mrf.mxu0
        %v2035 = vpop.f32.mrf.mxu0
        %v2036 = vadd.f32 0.0, %v2035
        %v2037 = vpop.f32.mrf.mxu0
        %2038 = vmatprep.mubr.bf16.mxu0 0
        %2039 = vmatmul.mubr.bf16.gmra.mxu0 %v1897
        %v2040 = vpop.f32.mrf.mxu0
        %v2041 = vadd.f32 0.0, %v2040
        %v2042 = vpop.f32.mrf.mxu0
        %v2043 = vpop.f32.mrf.mxu0
        %v2044 = vadd.f32 0.0, %v2043
        %v2045 = vpop.f32.mrf.mxu0
        %2046 = vmatprep.mubr.bf16.mxu0 0
        %2047 = vmatmul.mubr.bf16.gmra.mxu0 %v1898
        %v2048 = vpop.f32.mrf.mxu0
        %v2049 = vadd.f32 0.0, %v2048
        %v2050 = vpop.f32.mrf.mxu0
        %v2051 = vpop.f32.mrf.mxu0
        %v2052 = vadd.f32 0.0, %v2051
        %v2053 = vpop.f32.mrf.mxu0
        %2054 = vmatprep.mubr.bf16.mxu0 0
        %2055 = vmatmul.mubr.bf16.gmra.mxu0 %v1899
        %v2056 = vpop.f32.mrf.mxu0
        %v2057 = vadd.f32 0.0, %v2056
        %v2058 = vpop.f32.mrf.mxu0
        %v2059 = vpop.f32.mrf.mxu0
        %v2060 = vadd.f32 0.0, %v2059
        %v2061 = vpop.f32.mrf.mxu0
        %2062 = vmatprep.mubr.bf16.mxu0 0
        %2063 = vmatmul.mubr.bf16.gmra.mxu0 %v1900
        %v2064 = vpop.f32.mrf.mxu0
        %v2065 = vadd.f32 0.0, %v2064
        %v2066 = vpop.f32.mrf.mxu0
        %v2067 = vpop.f32.mrf.mxu0
        %v2068 = vadd.f32 0.0, %v2067
        %v2069 = vpop.f32.mrf.mxu0
        %2070 = vmatprep.mubr.bf16.mxu0 0
        %2071 = vmatmul.mubr.bf16.gmra.mxu0 %v1901
        %v2072 = vpop.f32.mrf.mxu0
        %v2073 = vadd.f32 0.0, %v2072
        %v2074 = vpop.f32.mrf.mxu0
        %v2075 = vpop.f32.mrf.mxu0
        %v2076 = vadd.f32 0.0, %v2075
        %v2077 = vpop.f32.mrf.mxu0
        %2078 = vmatprep.mubr.bf16.mxu0 0
        %2079 = vmatmul.mubr.bf16.gmra.mxu0 %v1902
        %v2080 = vpop.f32.mrf.mxu0
        %v2081 = vadd.f32 0.0, %v2080
        %v2082 = vpop.f32.mrf.mxu0
        %v2083 = vpop.f32.mrf.mxu0
        %v2084 = vadd.f32 0.0, %v2083
        %v2085 = vpop.f32.mrf.mxu0
        %2086 = vmatprep.mubr.bf16.mxu0 0
        %2087 = vmatmul.mubr.bf16.gmra.mxu0 %v1903
        %v2088 = vpop.f32.mrf.mxu0
        %v2089 = vadd.f32 0.0, %v2088
        %v2090 = vpop.f32.mrf.mxu0
        %v2091 = vpop.f32.mrf.mxu0
        %v2092 = vadd.f32 0.0, %v2091
        %v2093 = vpop.f32.mrf.mxu0
        %2094 = vmatprep.mubr.bf16.mxu0 0
        %2095 = vmatmul.mubr.bf16.gmra.mxu0 %v1904
        %v2096 = vpop.f32.mrf.mxu0
        %v2097 = vadd.f32 0.0, %v2096
        %v2098 = vpop.f32.mrf.mxu0
        %v2099 = vpop.f32.mrf.mxu0
        %v2100 = vadd.f32 0.0, %v2099
        %v2101 = vpop.f32.mrf.mxu0
        %2102 = vmatprep.mubr.bf16.mxu0 0
        %2103 = vmatmul.mubr.bf16.gmra.mxu0 %v1905
        %v2104 = vpop.f32.mrf.mxu0
        %v2105 = vadd.f32 0.0, %v2104
        %v2106 = vpop.f32.mrf.mxu0
        %v2107 = vpop.f32.mrf.mxu0
        %v2108 = vadd.f32 0.0, %v2107
        %v2109 = vpop.f32.mrf.mxu0
        %2110 = vmatprep.mubr.bf16.mxu0 0
        %2111 = vmatmul.mubr.bf16.gmra.mxu0 %v1906
        %v2112 = vpop.f32.mrf.mxu0
        %v2113 = vadd.f32 0.0, %v2112
        %v2114 = vpop.f32.mrf.mxu0
        %v2115 = vpop.f32.mrf.mxu0
        %v2116 = vadd.f32 0.0, %v2115
        %v2117 = vpop.f32.mrf.mxu0
        %2118 = vmatprep.mubr.bf16.mxu0 0
        %2119 = vmatmul.mubr.bf16.gmra.mxu0 %v1907
        %v2120 = vpop.f32.mrf.mxu0
        %v2121 = vadd.f32 0.0, %v2120
        %v2122 = vpop.f32.mrf.mxu0
        %v2123 = vpop.f32.mrf.mxu0
        %v2124 = vadd.f32 0.0, %v2123
        %v2125 = vpop.f32.mrf.mxu0
        %2126 = vmatprep.mubr.bf16.mxu0 0
        %2127 = vmatmul.mubr.bf16.gmra.mxu0 %v1908
        %v2128 = vpop.f32.mrf.mxu0
        %v2129 = vadd.f32 0.0, %v2128
        %v2130 = vpop.f32.mrf.mxu0
        %v2131 = vpop.f32.mrf.mxu0
        %v2132 = vadd.f32 0.0, %v2131
        %v2133 = vpop.f32.mrf.mxu0
        %2134 = vdwg.mxu0
        %v2135 = vadd.f32 %v1829, %v2009
        %v2136 = vadd.f32 %v1830, %v2012
        %v2137 = vadd.f32 %v1831, %v2017
        %v2138 = vadd.f32 %v1832, %v2020
        %v2139 = vadd.f32 %v1833, %v2025
        %v2140 = vadd.f32 %v1834, %v2028
        %v2141 = vadd.f32 %v1835, %v2033
        %v2142 = vadd.f32 %v1836, %v2036
        %v2143 = vadd.f32 %v1837, %v2041
        %v2144 = vadd.f32 %v1838, %v2044
        %v2145 = vadd.f32 %v1839, %v2049
        %v2146 = vadd.f32 %v1840, %v2052
        %v2147 = vadd.f32 %v1841, %v2057
        %v2148 = vadd.f32 %v1842, %v2060
        %v2149 = vadd.f32 %v1843, %v2065
        %v2150 = vadd.f32 %v1844, %v2068
        %v2151 = vadd.f32 %v1845, %v2073
        %v2152 = vadd.f32 %v1846, %v2076
        %v2153 = vadd.f32 %v1847, %v2081
        %v2154 = vadd.f32 %v1848, %v2084
        %v2155 = vadd.f32 %v1849, %v2089
        %v2156 = vadd.f32 %v1850, %v2092
        %v2157 = vadd.f32 %v1851, %v2097
        %v2158 = vadd.f32 %v1852, %v2100
        %v2159 = vadd.f32 %v1853, %v2105
        %v2160 = vadd.f32 %v1854, %v2108
        %v2161 = vadd.f32 %v1855, %v2113
        %v2162 = vadd.f32 %v1856, %v2116
        %v2163 = vadd.f32 %v1857, %v2121
        %v2164 = vadd.f32 %v1858, %v2124
        %v2165 = vadd.f32 %v1859, %v2129
        %v2166 = vadd.f32 %v1860, %v2132
        %v2167 = vld [vmem:[%s682 + $0x1] sm:$0xff]
        %v2168 = vld [vmem:[%s682 + $0x9] sm:$0xff]
        %v2169 = vld [vmem:[%s682 + $0x19] sm:$0xff]
        %v2170 = vld [vmem:[%s682 + $0x21] sm:$0xff]
        %v2171 = vld [vmem:[%s682 + $0x31] sm:$0xff]
        %v2172 = vld [vmem:[%s682 + $0x39] sm:$0xff]
        %v2173 = vld [vmem:[%s682 + $0x49] sm:$0xff]
        %v2174 = vld [vmem:[%s682 + $0x51] sm:$0xff]
        %v2175 = vld [vmem:[%s682 + $0x61] sm:$0xff]
        %v2176 = vld [vmem:[%s682 + $0x69] sm:$0xff]
        %v2177 = vld [vmem:[%s682 + $0x79] sm:$0xff]
        %v2178 = vld [vmem:[%s682 + $0x81] sm:$0xff]
        %v2179 = vld [vmem:[%s682 + $0x91] sm:$0xff]
        %v2180 = vld [vmem:[%s682 + $0x99] sm:$0xff]
        %v2181 = vld [vmem:[%s682 + $0xa9] sm:$0xff]
        %v2182 = vld [vmem:[%s682 + $0xb1] sm:$0xff]
        %v2183 = vld [vmem:[%s682 + $0xc1] sm:$0xff]
        %v2184 = vld [vmem:[%s682 + $0xc9] sm:$0xff]
        %v2185 = vld [vmem:[%s682 + $0xd9] sm:$0xff]
        %v2186 = vld [vmem:[%s682 + $0xe1] sm:$0xff]
        %v2187 = vld [vmem:[%s682 + $0xf1] sm:$0xff]
        %v2188 = vld [vmem:[%s682 + $0xf9] sm:$0xff]
        %v2189 = vld [vmem:[%s682 + $0x109] sm:$0xff]
        %v2190 = vld [vmem:[%s682 + $0x111] sm:$0xff]
        %v2191 = vld [vmem:[%s682 + $0x121] sm:$0xff]
        %v2192 = vld [vmem:[%s682 + $0x129] sm:$0xff]
        %v2193 = vld [vmem:[%s682 + $0x139] sm:$0xff]
        %v2194 = vld [vmem:[%s682 + $0x141] sm:$0xff]
        %v2195 = vld [vmem:[%s682 + $0x151] sm:$0xff]
        %v2196 = vld [vmem:[%s682 + $0x159] sm:$0xff]
        %v2197 = vld [vmem:[%s682 + $0x169] sm:$0xff]
        %v2198 = vld [vmem:[%s682 + $0x171] sm:$0xff]
        %v2199 = vpack.c.bf16 %v2168, %v2167
        %v2200 = vpack.c.bf16 %v2170, %v2169
        %v2201 = vpack.c.bf16 %v2172, %v2171
        %v2202 = vpack.c.bf16 %v2174, %v2173
        %v2203 = vpack.c.bf16 %v2176, %v2175
        %v2204 = vpack.c.bf16 %v2178, %v2177
        %v2205 = vpack.c.bf16 %v2180, %v2179
        %v2206 = vpack.c.bf16 %v2182, %v2181
        %v2207 = vpack.c.bf16 %v2184, %v2183
        %v2208 = vpack.c.bf16 %v2186, %v2185
        %v2209 = vpack.c.bf16 %v2188, %v2187
        %v2210 = vpack.c.bf16 %v2190, %v2189
        %v2211 = vpack.c.bf16 %v2192, %v2191
        %v2212 = vpack.c.bf16 %v2194, %v2193
        %v2213 = vpack.c.bf16 %v2196, %v2195
        %v2214 = vpack.c.bf16 %v2198, %v2197
        %s2215 = scalar_lea.vmem [#allocation11], 256
        %v2216 = vld [vmem:[%s2215] sm:$0xf]
        %v2217 = vld [vmem:[%s2215 + $0x4] sm:$0xf]
        %v2218 = vld [vmem:[%s2215 + $0x8] sm:$0xf]
        %v2219 = vld [vmem:[%s2215 + $0xc] sm:$0xf]
        %v2220 = vld [vmem:[%s2215 + $0x10] sm:$0xf]
        %v2221 = vld [vmem:[%s2215 + $0x14] sm:$0xf]
        %v2222 = vld [vmem:[%s2215 + $0x18] sm:$0xf]
        %v2223 = vld [vmem:[%s2215 + $0x1c] sm:$0xf]
        %v2224 = vld [vmem:[%s2215 + $0x20] sm:$0xf]
        %v2225 = vld [vmem:[%s2215 + $0x24] sm:$0xf]
        %v2226 = vld [vmem:[%s2215 + $0x28] sm:$0xf]
        %v2227 = vld [vmem:[%s2215 + $0x2c] sm:$0xf]
        %v2228 = vld [vmem:[%s2215 + $0x30] sm:$0xf]
        %v2229 = vld [vmem:[%s2215 + $0x34] sm:$0xf]
        %v2230 = vld [vmem:[%s2215 + $0x38] sm:$0xf]
        %v2231 = vld [vmem:[%s2215 + $0x3c] sm:$0xf]
        %v2248 = vunpack.c.l.b16 %v2216
        %v2249 = vunpack.c.l.b16 %v2217
        %v2250 = vunpack.c.l.b16 %v2218
        %v2251 = vunpack.c.l.b16 %v2219
        %v2252 = vunpack.c.l.b16 %v2220
        %v2253 = vunpack.c.l.b16 %v2221
        %v2254 = vunpack.c.l.b16 %v2222
        %v2255 = vunpack.c.l.b16 %v2223
        %v2256 = vunpack.c.l.b16 %v2224
        %v2257 = vunpack.c.l.b16 %v2225
        %v2258 = vunpack.c.l.b16 %v2226
        %v2259 = vunpack.c.l.b16 %v2227
        %v2260 = vunpack.c.l.b16 %v2228
        %v2261 = vunpack.c.l.b16 %v2229
        %v2262 = vunpack.c.l.b16 %v2230
        %v2263 = vunpack.c.l.b16 %v2231
        %v2264 = vpack.c.b16 %v2249, %v2248
        %v2265 = vpack.c.b16 %v2251, %v2250
        %v2266 = vpack.c.b16 %v2253, %v2252
        %v2267 = vpack.c.b16 %v2255, %v2254
        %v2268 = vpack.c.b16 %v2257, %v2256
        %v2269 = vpack.c.b16 %v2259, %v2258
        %v2270 = vpack.c.b16 %v2261, %v2260
        %v2271 = vpack.c.b16 %v2263, %v2262
        %2280 = vmatprep.subr.bf16.mxu0 0
        %2281 = vmatpush1.bf16.msra.mxu0 %v2271
        %2282 = vmatprep.subr.bf16.mxu0 0
        %2283 = vmatpush1.bf16.msra.mxu0 %v2270
        %2284 = vmatprep.subr.bf16.mxu0 0
        %2285 = vmatpush1.bf16.msra.mxu0 %v2269
        %2286 = vmatprep.subr.bf16.mxu0 0
        %2287 = vmatpush1.bf16.msra.mxu0 %v2268
        %2288 = vmatprep.subr.bf16.mxu0 0
        %2289 = vmatpush1.bf16.msra.mxu0 %v2267
        %2290 = vmatprep.subr.bf16.mxu0 0
        %2291 = vmatpush1.bf16.msra.mxu0 %v2266
        %2292 = vmatprep.subr.bf16.mxu0 0
        %2293 = vmatpush1.bf16.msra.mxu0 %v2265
        %2294 = vmatprep.subr.bf16.mxu0 0
        %2295 = vmatpush1.bf16.msra.mxu0 %v2264
        %2296 = vmatprep.subr.bf16.mxu0 0
        %2297 = vmatpush2.bf16.msra.mxu0 0
        %2298 = vmatprep.subr.bf16.mxu0 0
        %2299 = vmatpush2.bf16.msra.mxu0 0
        %2300 = vmatprep.subr.bf16.mxu0 0
        %2301 = vmatpush2.bf16.msra.mxu0 0
        %2302 = vmatprep.subr.bf16.mxu0 0
        %2303 = vmatpush2.bf16.msra.mxu0 0
        %2304 = vmatprep.subr.bf16.mxu0 0
        %2305 = vmatpush2.bf16.msra.mxu0 0
        %2306 = vmatprep.subr.bf16.mxu0 0
        %2307 = vmatpush2.bf16.msra.mxu0 0
        %2308 = vmatprep.subr.bf16.mxu0 0
        %2309 = vmatpush2.bf16.msra.mxu0 0
        %2310 = vmatprep.subr.bf16.mxu0 0
        %2311 = vmatpush2.bf16.msra.mxu0 0
        %2312 = vmatprep.mubr.bf16.mxu0 0
        %2313 = vmatmul.mubr.bf16.gmra.mxu0 %v2199
        %v2314 = vpop.f32.mrf.mxu0
        %v2315 = vadd.f32 0.0, %v2314
        %v2316 = vpop.f32.mrf.mxu0
        %v2317 = vpop.f32.mrf.mxu0
        %v2318 = vadd.f32 0.0, %v2317
        %v2319 = vpop.f32.mrf.mxu0
        %2320 = vmatprep.mubr.bf16.mxu0 0
        %2321 = vmatmul.mubr.bf16.gmra.mxu0 %v2200
        %v2322 = vpop.f32.mrf.mxu0
        %v2323 = vadd.f32 0.0, %v2322
        %v2324 = vpop.f32.mrf.mxu0
        %v2325 = vpop.f32.mrf.mxu0
        %v2326 = vadd.f32 0.0, %v2325
        %v2327 = vpop.f32.mrf.mxu0
        %2328 = vmatprep.mubr.bf16.mxu0 0
        %2329 = vmatmul.mubr.bf16.gmra.mxu0 %v2201
        %v2330 = vpop.f32.mrf.mxu0
        %v2331 = vadd.f32 0.0, %v2330
        %v2332 = vpop.f32.mrf.mxu0
        %v2333 = vpop.f32.mrf.mxu0
        %v2334 = vadd.f32 0.0, %v2333
        %v2335 = vpop.f32.mrf.mxu0
        %2336 = vmatprep.mubr.bf16.mxu0 0
        %2337 = vmatmul.mubr.bf16.gmra.mxu0 %v2202
        %v2338 = vpop.f32.mrf.mxu0
        %v2339 = vadd.f32 0.0, %v2338
        %v2340 = vpop.f32.mrf.mxu0
        %v2341 = vpop.f32.mrf.mxu0
        %v2342 = vadd.f32 0.0, %v2341
        %v2343 = vpop.f32.mrf.mxu0
        %2344 = vmatprep.mubr.bf16.mxu0 0
        %2345 = vmatmul.mubr.bf16.gmra.mxu0 %v2203
        %v2346 = vpop.f32.mrf.mxu0
        %v2347 = vadd.f32 0.0, %v2346
        %v2348 = vpop.f32.mrf.mxu0
        %v2349 = vpop.f32.mrf.mxu0
        %v2350 = vadd.f32 0.0, %v2349
        %v2351 = vpop.f32.mrf.mxu0
        %2352 = vmatprep.mubr.bf16.mxu0 0
        %2353 = vmatmul.mubr.bf16.gmra.mxu0 %v2204
        %v2354 = vpop.f32.mrf.mxu0
        %v2355 = vadd.f32 0.0, %v2354
        %v2356 = vpop.f32.mrf.mxu0
        %v2357 = vpop.f32.mrf.mxu0
        %v2358 = vadd.f32 0.0, %v2357
        %v2359 = vpop.f32.mrf.mxu0
        %2360 = vmatprep.mubr.bf16.mxu0 0
        %2361 = vmatmul.mubr.bf16.gmra.mxu0 %v2205
        %v2362 = vpop.f32.mrf.mxu0
        %v2363 = vadd.f32 0.0, %v2362
        %v2364 = vpop.f32.mrf.mxu0
        %v2365 = vpop.f32.mrf.mxu0
        %v2366 = vadd.f32 0.0, %v2365
        %v2367 = vpop.f32.mrf.mxu0
        %2368 = vmatprep.mubr.bf16.mxu0 0
        %2369 = vmatmul.mubr.bf16.gmra.mxu0 %v2206
        %v2370 = vpop.f32.mrf.mxu0
        %v2371 = vadd.f32 0.0, %v2370
        %v2372 = vpop.f32.mrf.mxu0
        %v2373 = vpop.f32.mrf.mxu0
        %v2374 = vadd.f32 0.0, %v2373
        %v2375 = vpop.f32.mrf.mxu0
        %2376 = vmatprep.mubr.bf16.mxu0 0
        %2377 = vmatmul.mubr.bf16.gmra.mxu0 %v2207
        %v2378 = vpop.f32.mrf.mxu0
        %v2379 = vadd.f32 0.0, %v2378
        %v2380 = vpop.f32.mrf.mxu0
        %v2381 = vpop.f32.mrf.mxu0
        %v2382 = vadd.f32 0.0, %v2381
        %v2383 = vpop.f32.mrf.mxu0
        %2384 = vmatprep.mubr.bf16.mxu0 0
        %2385 = vmatmul.mubr.bf16.gmra.mxu0 %v2208
        %v2386 = vpop.f32.mrf.mxu0
        %v2387 = vadd.f32 0.0, %v2386
        %v2388 = vpop.f32.mrf.mxu0
        %v2389 = vpop.f32.mrf.mxu0
        %v2390 = vadd.f32 0.0, %v2389
        %v2391 = vpop.f32.mrf.mxu0
        %2392 = vmatprep.mubr.bf16.mxu0 0
        %2393 = vmatmul.mubr.bf16.gmra.mxu0 %v2209
        %v2394 = vpop.f32.mrf.mxu0
        %v2395 = vadd.f32 0.0, %v2394
        %v2396 = vpop.f32.mrf.mxu0
        %v2397 = vpop.f32.mrf.mxu0
        %v2398 = vadd.f32 0.0, %v2397
        %v2399 = vpop.f32.mrf.mxu0
        %2400 = vmatprep.mubr.bf16.mxu0 0
        %2401 = vmatmul.mubr.bf16.gmra.mxu0 %v2210
        %v2402 = vpop.f32.mrf.mxu0
        %v2403 = vadd.f32 0.0, %v2402
        %v2404 = vpop.f32.mrf.mxu0
        %v2405 = vpop.f32.mrf.mxu0
        %v2406 = vadd.f32 0.0, %v2405
        %v2407 = vpop.f32.mrf.mxu0
        %2408 = vmatprep.mubr.bf16.mxu0 0
        %2409 = vmatmul.mubr.bf16.gmra.mxu0 %v2211
        %v2410 = vpop.f32.mrf.mxu0
        %v2411 = vadd.f32 0.0, %v2410
        %v2412 = vpop.f32.mrf.mxu0
        %v2413 = vpop.f32.mrf.mxu0
        %v2414 = vadd.f32 0.0, %v2413
        %v2415 = vpop.f32.mrf.mxu0
        %2416 = vmatprep.mubr.bf16.mxu0 0
        %2417 = vmatmul.mubr.bf16.gmra.mxu0 %v2212
        %v2418 = vpop.f32.mrf.mxu0
        %v2419 = vadd.f32 0.0, %v2418
        %v2420 = vpop.f32.mrf.mxu0
        %v2421 = vpop.f32.mrf.mxu0
        %v2422 = vadd.f32 0.0, %v2421
        %v2423 = vpop.f32.mrf.mxu0
        %2424 = vmatprep.mubr.bf16.mxu0 0
        %2425 = vmatmul.mubr.bf16.gmra.mxu0 %v2213
        %v2426 = vpop.f32.mrf.mxu0
        %v2427 = vadd.f32 0.0, %v2426
        %v2428 = vpop.f32.mrf.mxu0
        %v2429 = vpop.f32.mrf.mxu0
        %v2430 = vadd.f32 0.0, %v2429
        %v2431 = vpop.f32.mrf.mxu0
        %2432 = vmatprep.mubr.bf16.mxu0 0
        %2433 = vmatmul.mubr.bf16.gmra.mxu0 %v2214
        %v2434 = vpop.f32.mrf.mxu0
        %v2435 = vadd.f32 0.0, %v2434
        %v2436 = vpop.f32.mrf.mxu0
        %v2437 = vpop.f32.mrf.mxu0
        %v2438 = vadd.f32 0.0, %v2437
        %v2439 = vpop.f32.mrf.mxu0
        %2440 = vdwg.mxu0
        %v2441 = vadd.f32 %v2135, %v2315
        %v2442 = vadd.f32 %v2136, %v2318
        %v2443 = vadd.f32 %v2137, %v2323
        %v2444 = vadd.f32 %v2138, %v2326
        %v2445 = vadd.f32 %v2139, %v2331
        %v2446 = vadd.f32 %v2140, %v2334
        %v2447 = vadd.f32 %v2141, %v2339
        %v2448 = vadd.f32 %v2142, %v2342
        %v2449 = vadd.f32 %v2143, %v2347
        %v2450 = vadd.f32 %v2144, %v2350
        %v2451 = vadd.f32 %v2145, %v2355
        %v2452 = vadd.f32 %v2146, %v2358
        %v2453 = vadd.f32 %v2147, %v2363
        %v2454 = vadd.f32 %v2148, %v2366
        %v2455 = vadd.f32 %v2149, %v2371
        %v2456 = vadd.f32 %v2150, %v2374
        %v2457 = vadd.f32 %v2151, %v2379
        %v2458 = vadd.f32 %v2152, %v2382
        %v2459 = vadd.f32 %v2153, %v2387
        %v2460 = vadd.f32 %v2154, %v2390
        %v2461 = vadd.f32 %v2155, %v2395
        %v2462 = vadd.f32 %v2156, %v2398
        %v2463 = vadd.f32 %v2157, %v2403
        %v2464 = vadd.f32 %v2158, %v2406
        %v2465 = vadd.f32 %v2159, %v2411
        %v2466 = vadd.f32 %v2160, %v2414
        %v2467 = vadd.f32 %v2161, %v2419
        %v2468 = vadd.f32 %v2162, %v2422
        %v2469 = vadd.f32 %v2163, %v2427
        %v2470 = vadd.f32 %v2164, %v2430
        %v2471 = vadd.f32 %v2165, %v2435
        %v2472 = vadd.f32 %v2166, %v2438
        %v2473 = vld [vmem:[%s779 + $0x1] sm:$0xff]
        %v2474 = vld [vmem:[%s779 + $0x9] sm:$0xff]
        %v2475 = vld [vmem:[%s779 + $0x19] sm:$0xff]
        %v2476 = vld [vmem:[%s779 + $0x21] sm:$0xff]
        %v2477 = vld [vmem:[%s779 + $0x31] sm:$0xff]
        %v2478 = vld [vmem:[%s779 + $0x39] sm:$0xff]
        %v2479 = vld [vmem:[%s779 + $0x49] sm:$0xff]
        %v2480 = vld [vmem:[%s779 + $0x51] sm:$0xff]
        %v2481 = vld [vmem:[%s779 + $0x61] sm:$0xff]
        %v2482 = vld [vmem:[%s779 + $0x69] sm:$0xff]
        %v2483 = vld [vmem:[%s779 + $0x79] sm:$0xff]
        %v2484 = vld [vmem:[%s779 + $0x81] sm:$0xff]
        %v2485 = vld [vmem:[%s779 + $0x91] sm:$0xff]
        %v2486 = vld [vmem:[%s779 + $0x99] sm:$0xff]
        %v2487 = vld [vmem:[%s779 + $0xa9] sm:$0xff]
        %v2488 = vld [vmem:[%s779 + $0xb1] sm:$0xff]
        %v2489 = vld [vmem:[%s779 + $0xc1] sm:$0xff]
        %v2490 = vld [vmem:[%s779 + $0xc9] sm:$0xff]
        %v2491 = vld [vmem:[%s779 + $0xd9] sm:$0xff]
        %v2492 = vld [vmem:[%s779 + $0xe1] sm:$0xff]
        %v2493 = vld [vmem:[%s779 + $0xf1] sm:$0xff]
        %v2494 = vld [vmem:[%s779 + $0xf9] sm:$0xff]
        %v2495 = vld [vmem:[%s779 + $0x109] sm:$0xff]
        %v2496 = vld [vmem:[%s779 + $0x111] sm:$0xff]
        %v2497 = vld [vmem:[%s779 + $0x121] sm:$0xff]
        %v2498 = vld [vmem:[%s779 + $0x129] sm:$0xff]
        %v2499 = vld [vmem:[%s779 + $0x139] sm:$0xff]
        %v2500 = vld [vmem:[%s779 + $0x141] sm:$0xff]
        %v2501 = vld [vmem:[%s779 + $0x151] sm:$0xff]
        %v2502 = vld [vmem:[%s779 + $0x159] sm:$0xff]
        %v2503 = vld [vmem:[%s779 + $0x169] sm:$0xff]
        %v2504 = vld [vmem:[%s779 + $0x171] sm:$0xff]
        %v2505 = vpack.c.bf16 %v2474, %v2473
        %v2506 = vpack.c.bf16 %v2476, %v2475
        %v2507 = vpack.c.bf16 %v2478, %v2477
        %v2508 = vpack.c.bf16 %v2480, %v2479
        %v2509 = vpack.c.bf16 %v2482, %v2481
        %v2510 = vpack.c.bf16 %v2484, %v2483
        %v2511 = vpack.c.bf16 %v2486, %v2485
        %v2512 = vpack.c.bf16 %v2488, %v2487
        %v2513 = vpack.c.bf16 %v2490, %v2489
        %v2514 = vpack.c.bf16 %v2492, %v2491
        %v2515 = vpack.c.bf16 %v2494, %v2493
        %v2516 = vpack.c.bf16 %v2496, %v2495
        %v2517 = vpack.c.bf16 %v2498, %v2497
        %v2518 = vpack.c.bf16 %v2500, %v2499
        %v2519 = vpack.c.bf16 %v2502, %v2501
        %v2520 = vpack.c.bf16 %v2504, %v2503
        %s2521 = scalar_lea.vmem [#allocation11], 320
        %v2522 = vld [vmem:[%s2521] sm:$0xf]
        %v2523 = vld [vmem:[%s2521 + $0x4] sm:$0xf]
        %v2524 = vld [vmem:[%s2521 + $0x8] sm:$0xf]
        %v2525 = vld [vmem:[%s2521 + $0xc] sm:$0xf]
        %v2526 = vld [vmem:[%s2521 + $0x10] sm:$0xf]
        %v2527 = vld [vmem:[%s2521 + $0x14] sm:$0xf]
        %v2528 = vld [vmem:[%s2521 + $0x18] sm:$0xf]
        %v2529 = vld [vmem:[%s2521 + $0x1c] sm:$0xf]
        %v2530 = vld [vmem:[%s2521 + $0x20] sm:$0xf]
        %v2531 = vld [vmem:[%s2521 + $0x24] sm:$0xf]
        %v2532 = vld [vmem:[%s2521 + $0x28] sm:$0xf]
        %v2533 = vld [vmem:[%s2521 + $0x2c] sm:$0xf]
        %v2534 = vld [vmem:[%s2521 + $0x30] sm:$0xf]
        %v2535 = vld [vmem:[%s2521 + $0x34] sm:$0xf]
        %v2536 = vld [vmem:[%s2521 + $0x38] sm:$0xf]
        %v2537 = vld [vmem:[%s2521 + $0x3c] sm:$0xf]
        %v2554 = vunpack.c.l.b16 %v2522
        %v2555 = vunpack.c.l.b16 %v2523
        %v2556 = vunpack.c.l.b16 %v2524
        %v2557 = vunpack.c.l.b16 %v2525
        %v2558 = vunpack.c.l.b16 %v2526
        %v2559 = vunpack.c.l.b16 %v2527
        %v2560 = vunpack.c.l.b16 %v2528
        %v2561 = vunpack.c.l.b16 %v2529
        %v2562 = vunpack.c.l.b16 %v2530
        %v2563 = vunpack.c.l.b16 %v2531
        %v2564 = vunpack.c.l.b16 %v2532
        %v2565 = vunpack.c.l.b16 %v2533
        %v2566 = vunpack.c.l.b16 %v2534
        %v2567 = vunpack.c.l.b16 %v2535
        %v2568 = vunpack.c.l.b16 %v2536
        %v2569 = vunpack.c.l.b16 %v2537
        %v2570 = vpack.c.b16 %v2555, %v2554
        %v2571 = vpack.c.b16 %v2557, %v2556
        %v2572 = vpack.c.b16 %v2559, %v2558
        %v2573 = vpack.c.b16 %v2561, %v2560
        %v2574 = vpack.c.b16 %v2563, %v2562
        %v2575 = vpack.c.b16 %v2565, %v2564
        %v2576 = vpack.c.b16 %v2567, %v2566
        %v2577 = vpack.c.b16 %v2569, %v2568
        %2586 = vmatprep.subr.bf16.mxu0 0
        %2587 = vmatpush1.bf16.msra.mxu0 %v2577
        %2588 = vmatprep.subr.bf16.mxu0 0
        %2589 = vmatpush1.bf16.msra.mxu0 %v2576
        %2590 = vmatprep.subr.bf16.mxu0 0
        %2591 = vmatpush1.bf16.msra.mxu0 %v2575
        %2592 = vmatprep.subr.bf16.mxu0 0
        %2593 = vmatpush1.bf16.msra.mxu0 %v2574
        %2594 = vmatprep.subr.bf16.mxu0 0
        %2595 = vmatpush1.bf16.msra.mxu0 %v2573
        %2596 = vmatprep.subr.bf16.mxu0 0
        %2597 = vmatpush1.bf16.msra.mxu0 %v2572
        %2598 = vmatprep.subr.bf16.mxu0 0
        %2599 = vmatpush1.bf16.msra.mxu0 %v2571
        %2600 = vmatprep.subr.bf16.mxu0 0
        %2601 = vmatpush1.bf16.msra.mxu0 %v2570
        %2602 = vmatprep.subr.bf16.mxu0 0
        %2603 = vmatpush2.bf16.msra.mxu0 0
        %2604 = vmatprep.subr.bf16.mxu0 0
        %2605 = vmatpush2.bf16.msra.mxu0 0
        %2606 = vmatprep.subr.bf16.mxu0 0
        %2607 = vmatpush2.bf16.msra.mxu0 0
        %2608 = vmatprep.subr.bf16.mxu0 0
        %2609 = vmatpush2.bf16.msra.mxu0 0
        %2610 = vmatprep.subr.bf16.mxu0 0
        %2611 = vmatpush2.bf16.msra.mxu0 0
        %2612 = vmatprep.subr.bf16.mxu0 0
        %2613 = vmatpush2.bf16.msra.mxu0 0
        %2614 = vmatprep.subr.bf16.mxu0 0
        %2615 = vmatpush2.bf16.msra.mxu0 0
        %2616 = vmatprep.subr.bf16.mxu0 0
        %2617 = vmatpush2.bf16.msra.mxu0 0
        %2618 = vmatprep.mubr.bf16.mxu0 0
        %2619 = vmatmul.mubr.bf16.gmra.mxu0 %v2505
        %v2620 = vpop.f32.mrf.mxu0
        %v2621 = vadd.f32 0.0, %v2620
        %v2622 = vpop.f32.mrf.mxu0
        %v2623 = vpop.f32.mrf.mxu0
        %v2624 = vadd.f32 0.0, %v2623
        %v2625 = vpop.f32.mrf.mxu0
        %2626 = vmatprep.mubr.bf16.mxu0 0
        %2627 = vmatmul.mubr.bf16.gmra.mxu0 %v2506
        %v2628 = vpop.f32.mrf.mxu0
        %v2629 = vadd.f32 0.0, %v2628
        %v2630 = vpop.f32.mrf.mxu0
        %v2631 = vpop.f32.mrf.mxu0
        %v2632 = vadd.f32 0.0, %v2631
        %v2633 = vpop.f32.mrf.mxu0
        %2634 = vmatprep.mubr.bf16.mxu0 0
        %2635 = vmatmul.mubr.bf16.gmra.mxu0 %v2507
        %v2636 = vpop.f32.mrf.mxu0
        %v2637 = vadd.f32 0.0, %v2636
        %v2638 = vpop.f32.mrf.mxu0
        %v2639 = vpop.f32.mrf.mxu0
        %v2640 = vadd.f32 0.0, %v2639
        %v2641 = vpop.f32.mrf.mxu0
        %2642 = vmatprep.mubr.bf16.mxu0 0
        %2643 = vmatmul.mubr.bf16.gmra.mxu0 %v2508
        %v2644 = vpop.f32.mrf.mxu0
        %v2645 = vadd.f32 0.0, %v2644
        %v2646 = vpop.f32.mrf.mxu0
        %v2647 = vpop.f32.mrf.mxu0
        %v2648 = vadd.f32 0.0, %v2647
        %v2649 = vpop.f32.mrf.mxu0
        %2650 = vmatprep.mubr.bf16.mxu0 0
        %2651 = vmatmul.mubr.bf16.gmra.mxu0 %v2509
        %v2652 = vpop.f32.mrf.mxu0
        %v2653 = vadd.f32 0.0, %v2652
        %v2654 = vpop.f32.mrf.mxu0
        %v2655 = vpop.f32.mrf.mxu0
        %v2656 = vadd.f32 0.0, %v2655
        %v2657 = vpop.f32.mrf.mxu0
        %2658 = vmatprep.mubr.bf16.mxu0 0
        %2659 = vmatmul.mubr.bf16.gmra.mxu0 %v2510
        %v2660 = vpop.f32.mrf.mxu0
        %v2661 = vadd.f32 0.0, %v2660
        %v2662 = vpop.f32.mrf.mxu0
        %v2663 = vpop.f32.mrf.mxu0
        %v2664 = vadd.f32 0.0, %v2663
        %v2665 = vpop.f32.mrf.mxu0
        %2666 = vmatprep.mubr.bf16.mxu0 0
        %2667 = vmatmul.mubr.bf16.gmra.mxu0 %v2511
        %v2668 = vpop.f32.mrf.mxu0
        %v2669 = vadd.f32 0.0, %v2668
        %v2670 = vpop.f32.mrf.mxu0
        %v2671 = vpop.f32.mrf.mxu0
        %v2672 = vadd.f32 0.0, %v2671
        %v2673 = vpop.f32.mrf.mxu0
        %2674 = vmatprep.mubr.bf16.mxu0 0
        %2675 = vmatmul.mubr.bf16.gmra.mxu0 %v2512
        %v2676 = vpop.f32.mrf.mxu0
        %v2677 = vadd.f32 0.0, %v2676
        %v2678 = vpop.f32.mrf.mxu0
        %v2679 = vpop.f32.mrf.mxu0
        %v2680 = vadd.f32 0.0, %v2679
        %v2681 = vpop.f32.mrf.mxu0
        %2682 = vmatprep.mubr.bf16.mxu0 0
        %2683 = vmatmul.mubr.bf16.gmra.mxu0 %v2513
        %v2684 = vpop.f32.mrf.mxu0
        %v2685 = vadd.f32 0.0, %v2684
        %v2686 = vpop.f32.mrf.mxu0
        %v2687 = vpop.f32.mrf.mxu0
        %v2688 = vadd.f32 0.0, %v2687
        %v2689 = vpop.f32.mrf.mxu0
        %2690 = vmatprep.mubr.bf16.mxu0 0
        %2691 = vmatmul.mubr.bf16.gmra.mxu0 %v2514
        %v2692 = vpop.f32.mrf.mxu0
        %v2693 = vadd.f32 0.0, %v2692
        %v2694 = vpop.f32.mrf.mxu0
        %v2695 = vpop.f32.mrf.mxu0
        %v2696 = vadd.f32 0.0, %v2695
        %v2697 = vpop.f32.mrf.mxu0
        %2698 = vmatprep.mubr.bf16.mxu0 0
        %2699 = vmatmul.mubr.bf16.gmra.mxu0 %v2515
        %v2700 = vpop.f32.mrf.mxu0
        %v2701 = vadd.f32 0.0, %v2700
        %v2702 = vpop.f32.mrf.mxu0
        %v2703 = vpop.f32.mrf.mxu0
        %v2704 = vadd.f32 0.0, %v2703
        %v2705 = vpop.f32.mrf.mxu0
        %2706 = vmatprep.mubr.bf16.mxu0 0
        %2707 = vmatmul.mubr.bf16.gmra.mxu0 %v2516
        %v2708 = vpop.f32.mrf.mxu0
        %v2709 = vadd.f32 0.0, %v2708
        %v2710 = vpop.f32.mrf.mxu0
        %v2711 = vpop.f32.mrf.mxu0
        %v2712 = vadd.f32 0.0, %v2711
        %v2713 = vpop.f32.mrf.mxu0
        %2714 = vmatprep.mubr.bf16.mxu0 0
        %2715 = vmatmul.mubr.bf16.gmra.mxu0 %v2517
        %v2716 = vpop.f32.mrf.mxu0
        %v2717 = vadd.f32 0.0, %v2716
        %v2718 = vpop.f32.mrf.mxu0
        %v2719 = vpop.f32.mrf.mxu0
        %v2720 = vadd.f32 0.0, %v2719
        %v2721 = vpop.f32.mrf.mxu0
        %2722 = vmatprep.mubr.bf16.mxu0 0
        %2723 = vmatmul.mubr.bf16.gmra.mxu0 %v2518
        %v2724 = vpop.f32.mrf.mxu0
        %v2725 = vadd.f32 0.0, %v2724
        %v2726 = vpop.f32.mrf.mxu0
        %v2727 = vpop.f32.mrf.mxu0
        %v2728 = vadd.f32 0.0, %v2727
        %v2729 = vpop.f32.mrf.mxu0
        %2730 = vmatprep.mubr.bf16.mxu0 0
        %2731 = vmatmul.mubr.bf16.gmra.mxu0 %v2519
        %v2732 = vpop.f32.mrf.mxu0
        %v2733 = vadd.f32 0.0, %v2732
        %v2734 = vpop.f32.mrf.mxu0
        %v2735 = vpop.f32.mrf.mxu0
        %v2736 = vadd.f32 0.0, %v2735
        %v2737 = vpop.f32.mrf.mxu0
        %2738 = vmatprep.mubr.bf16.mxu0 0
        %2739 = vmatmul.mubr.bf16.gmra.mxu0 %v2520
        %v2740 = vpop.f32.mrf.mxu0
        %v2741 = vadd.f32 0.0, %v2740
        %v2742 = vpop.f32.mrf.mxu0
        %v2743 = vpop.f32.mrf.mxu0
        %v2744 = vadd.f32 0.0, %v2743
        %v2745 = vpop.f32.mrf.mxu0
        %2746 = vdwg.mxu0
        %v2747 = vadd.f32 %v2441, %v2621
        %v2748 = vadd.f32 %v2442, %v2624
        %v2749 = vadd.f32 %v2443, %v2629
        %v2750 = vadd.f32 %v2444, %v2632
        %v2751 = vadd.f32 %v2445, %v2637
        %v2752 = vadd.f32 %v2446, %v2640
        %v2753 = vadd.f32 %v2447, %v2645
        %v2754 = vadd.f32 %v2448, %v2648
        %v2755 = vadd.f32 %v2449, %v2653
        %v2756 = vadd.f32 %v2450, %v2656
        %v2757 = vadd.f32 %v2451, %v2661
        %v2758 = vadd.f32 %v2452, %v2664
        %v2759 = vadd.f32 %v2453, %v2669
        %v2760 = vadd.f32 %v2454, %v2672
        %v2761 = vadd.f32 %v2455, %v2677
        %v2762 = vadd.f32 %v2456, %v2680
        %v2763 = vadd.f32 %v2457, %v2685
        %v2764 = vadd.f32 %v2458, %v2688
        %v2765 = vadd.f32 %v2459, %v2693
        %v2766 = vadd.f32 %v2460, %v2696
        %v2767 = vadd.f32 %v2461, %v2701
        %v2768 = vadd.f32 %v2462, %v2704
        %v2769 = vadd.f32 %v2463, %v2709
        %v2770 = vadd.f32 %v2464, %v2712
        %v2771 = vadd.f32 %v2465, %v2717
        %v2772 = vadd.f32 %v2466, %v2720
        %v2773 = vadd.f32 %v2467, %v2725
        %v2774 = vadd.f32 %v2468, %v2728
        %v2775 = vadd.f32 %v2469, %v2733
        %v2776 = vadd.f32 %v2470, %v2736
        %v2777 = vadd.f32 %v2471, %v2741
        %v2778 = vadd.f32 %v2472, %v2744
        %v2779 = vld [vmem:[%s973] sm:$0xff]
        %v2780 = vld [vmem:[%s973 + $0x8] sm:$0xff]
        %v2781 = vld [vmem:[%s973 + $0x18] sm:$0xff]
        %v2782 = vld [vmem:[%s973 + $0x20] sm:$0xff]
        %v2783 = vld [vmem:[%s973 + $0x30] sm:$0xff]
        %v2784 = vld [vmem:[%s973 + $0x38] sm:$0xff]
        %v2785 = vld [vmem:[%s973 + $0x48] sm:$0xff]
        %v2786 = vld [vmem:[%s973 + $0x50] sm:$0xff]
        %v2787 = vld [vmem:[%s973 + $0x60] sm:$0xff]
        %v2788 = vld [vmem:[%s973 + $0x68] sm:$0xff]
        %v2789 = vld [vmem:[%s973 + $0x78] sm:$0xff]
        %v2790 = vld [vmem:[%s973 + $0x80] sm:$0xff]
        %v2791 = vld [vmem:[%s973 + $0x90] sm:$0xff]
        %v2792 = vld [vmem:[%s973 + $0x98] sm:$0xff]
        %v2793 = vld [vmem:[%s973 + $0xa8] sm:$0xff]
        %v2794 = vld [vmem:[%s973 + $0xb0] sm:$0xff]
        %v2795 = vld [vmem:[%s973 + $0xc0] sm:$0xff]
        %v2796 = vld [vmem:[%s973 + $0xc8] sm:$0xff]
        %v2797 = vld [vmem:[%s973 + $0xd8] sm:$0xff]
        %v2798 = vld [vmem:[%s973 + $0xe0] sm:$0xff]
        %v2799 = vld [vmem:[%s973 + $0xf0] sm:$0xff]
        %v2800 = vld [vmem:[%s973 + $0xf8] sm:$0xff]
        %v2801 = vld [vmem:[%s973 + $0x108] sm:$0xff]
        %v2802 = vld [vmem:[%s973 + $0x110] sm:$0xff]
        %v2803 = vld [vmem:[%s973 + $0x120] sm:$0xff]
        %v2804 = vld [vmem:[%s973 + $0x128] sm:$0xff]
        %v2805 = vld [vmem:[%s973 + $0x138] sm:$0xff]
        %v2806 = vld [vmem:[%s973 + $0x140] sm:$0xff]
        %v2807 = vld [vmem:[%s973 + $0x150] sm:$0xff]
        %v2808 = vld [vmem:[%s973 + $0x158] sm:$0xff]
        %v2809 = vld [vmem:[%s973 + $0x168] sm:$0xff]
        %v2810 = vld [vmem:[%s973 + $0x170] sm:$0xff]
        %v2811 = vpack.c.bf16 %v2780, %v2779
        %v2812 = vpack.c.bf16 %v2782, %v2781
        %v2813 = vpack.c.bf16 %v2784, %v2783
        %v2814 = vpack.c.bf16 %v2786, %v2785
        %v2815 = vpack.c.bf16 %v2788, %v2787
        %v2816 = vpack.c.bf16 %v2790, %v2789
        %v2817 = vpack.c.bf16 %v2792, %v2791
        %v2818 = vpack.c.bf16 %v2794, %v2793
        %v2819 = vpack.c.bf16 %v2796, %v2795
        %v2820 = vpack.c.bf16 %v2798, %v2797
        %v2821 = vpack.c.bf16 %v2800, %v2799
        %v2822 = vpack.c.bf16 %v2802, %v2801
        %v2823 = vpack.c.bf16 %v2804, %v2803
        %v2824 = vpack.c.bf16 %v2806, %v2805
        %v2825 = vpack.c.bf16 %v2808, %v2807
        %v2826 = vpack.c.bf16 %v2810, %v2809
        %s2827 = scalar_lea.vmem [#allocation11], 384
        %v2828 = vld [vmem:[%s2827] sm:$0xf]
        %v2829 = vld [vmem:[%s2827 + $0x4] sm:$0xf]
        %v2830 = vld [vmem:[%s2827 + $0x8] sm:$0xf]
        %v2831 = vld [vmem:[%s2827 + $0xc] sm:$0xf]
        %v2832 = vld [vmem:[%s2827 + $0x10] sm:$0xf]
        %v2833 = vld [vmem:[%s2827 + $0x14] sm:$0xf]
        %v2834 = vld [vmem:[%s2827 + $0x18] sm:$0xf]
        %v2835 = vld [vmem:[%s2827 + $0x1c] sm:$0xf]
        %v2836 = vld [vmem:[%s2827 + $0x20] sm:$0xf]
        %v2837 = vld [vmem:[%s2827 + $0x24] sm:$0xf]
        %v2838 = vld [vmem:[%s2827 + $0x28] sm:$0xf]
        %v2839 = vld [vmem:[%s2827 + $0x2c] sm:$0xf]
        %v2840 = vld [vmem:[%s2827 + $0x30] sm:$0xf]
        %v2841 = vld [vmem:[%s2827 + $0x34] sm:$0xf]
        %v2842 = vld [vmem:[%s2827 + $0x38] sm:$0xf]
        %v2843 = vld [vmem:[%s2827 + $0x3c] sm:$0xf]
        %v2860 = vunpack.c.l.b16 %v2828
        %v2861 = vunpack.c.l.b16 %v2829
        %v2862 = vunpack.c.l.b16 %v2830
        %v2863 = vunpack.c.l.b16 %v2831
        %v2864 = vunpack.c.l.b16 %v2832
        %v2865 = vunpack.c.l.b16 %v2833
        %v2866 = vunpack.c.l.b16 %v2834
        %v2867 = vunpack.c.l.b16 %v2835
        %v2868 = vunpack.c.l.b16 %v2836
        %v2869 = vunpack.c.l.b16 %v2837
        %v2870 = vunpack.c.l.b16 %v2838
        %v2871 = vunpack.c.l.b16 %v2839
        %v2872 = vunpack.c.l.b16 %v2840
        %v2873 = vunpack.c.l.b16 %v2841
        %v2874 = vunpack.c.l.b16 %v2842
        %v2875 = vunpack.c.l.b16 %v2843
        %v2876 = vpack.c.b16 %v2861, %v2860
        %v2877 = vpack.c.b16 %v2863, %v2862
        %v2878 = vpack.c.b16 %v2865, %v2864
        %v2879 = vpack.c.b16 %v2867, %v2866
        %v2880 = vpack.c.b16 %v2869, %v2868
        %v2881 = vpack.c.b16 %v2871, %v2870
        %v2882 = vpack.c.b16 %v2873, %v2872
        %v2883 = vpack.c.b16 %v2875, %v2874
        %2892 = vmatprep.subr.bf16.mxu0 0
        %2893 = vmatpush1.bf16.msra.mxu0 %v2883
        %2894 = vmatprep.subr.bf16.mxu0 0
        %2895 = vmatpush1.bf16.msra.mxu0 %v2882
        %2896 = vmatprep.subr.bf16.mxu0 0
        %2897 = vmatpush1.bf16.msra.mxu0 %v2881
        %2898 = vmatprep.subr.bf16.mxu0 0
        %2899 = vmatpush1.bf16.msra.mxu0 %v2880
        %2900 = vmatprep.subr.bf16.mxu0 0
        %2901 = vmatpush1.bf16.msra.mxu0 %v2879
        %2902 = vmatprep.subr.bf16.mxu0 0
        %2903 = vmatpush1.bf16.msra.mxu0 %v2878
        %2904 = vmatprep.subr.bf16.mxu0 0
        %2905 = vmatpush1.bf16.msra.mxu0 %v2877
        %2906 = vmatprep.subr.bf16.mxu0 0
        %2907 = vmatpush1.bf16.msra.mxu0 %v2876
        %2908 = vmatprep.subr.bf16.mxu0 0
        %2909 = vmatpush2.bf16.msra.mxu0 0
        %2910 = vmatprep.subr.bf16.mxu0 0
        %2911 = vmatpush2.bf16.msra.mxu0 0
        %2912 = vmatprep.subr.bf16.mxu0 0
        %2913 = vmatpush2.bf16.msra.mxu0 0
        %2914 = vmatprep.subr.bf16.mxu0 0
        %2915 = vmatpush2.bf16.msra.mxu0 0
        %2916 = vmatprep.subr.bf16.mxu0 0
        %2917 = vmatpush2.bf16.msra.mxu0 0
        %2918 = vmatprep.subr.bf16.mxu0 0
        %2919 = vmatpush2.bf16.msra.mxu0 0
        %2920 = vmatprep.subr.bf16.mxu0 0
        %2921 = vmatpush2.bf16.msra.mxu0 0
        %2922 = vmatprep.subr.bf16.mxu0 0
        %2923 = vmatpush2.bf16.msra.mxu0 0
        %2924 = vmatprep.mubr.bf16.mxu0 0
        %2925 = vmatmul.mubr.bf16.gmra.mxu0 %v2811
        %v2926 = vpop.f32.mrf.mxu0
        %v2927 = vadd.f32 0.0, %v2926
        %v2928 = vpop.f32.mrf.mxu0
        %v2929 = vpop.f32.mrf.mxu0
        %v2930 = vadd.f32 0.0, %v2929
        %v2931 = vpop.f32.mrf.mxu0
        %2932 = vmatprep.mubr.bf16.mxu0 0
        %2933 = vmatmul.mubr.bf16.gmra.mxu0 %v2812
        %v2934 = vpop.f32.mrf.mxu0
        %v2935 = vadd.f32 0.0, %v2934
        %v2936 = vpop.f32.mrf.mxu0
        %v2937 = vpop.f32.mrf.mxu0
        %v2938 = vadd.f32 0.0, %v2937
        %v2939 = vpop.f32.mrf.mxu0
        %2940 = vmatprep.mubr.bf16.mxu0 0
        %2941 = vmatmul.mubr.bf16.gmra.mxu0 %v2813
        %v2942 = vpop.f32.mrf.mxu0
        %v2943 = vadd.f32 0.0, %v2942
        %v2944 = vpop.f32.mrf.mxu0
        %v2945 = vpop.f32.mrf.mxu0
        %v2946 = vadd.f32 0.0, %v2945
        %v2947 = vpop.f32.mrf.mxu0
        %2948 = vmatprep.mubr.bf16.mxu0 0
        %2949 = vmatmul.mubr.bf16.gmra.mxu0 %v2814
        %v2950 = vpop.f32.mrf.mxu0
        %v2951 = vadd.f32 0.0, %v2950
        %v2952 = vpop.f32.mrf.mxu0
        %v2953 = vpop.f32.mrf.mxu0
        %v2954 = vadd.f32 0.0, %v2953
        %v2955 = vpop.f32.mrf.mxu0
        %2956 = vmatprep.mubr.bf16.mxu0 0
        %2957 = vmatmul.mubr.bf16.gmra.mxu0 %v2815
        %v2958 = vpop.f32.mrf.mxu0
        %v2959 = vadd.f32 0.0, %v2958
        %v2960 = vpop.f32.mrf.mxu0
        %v2961 = vpop.f32.mrf.mxu0
        %v2962 = vadd.f32 0.0, %v2961
        %v2963 = vpop.f32.mrf.mxu0
        %2964 = vmatprep.mubr.bf16.mxu0 0
        %2965 = vmatmul.mubr.bf16.gmra.mxu0 %v2816
        %v2966 = vpop.f32.mrf.mxu0
        %v2967 = vadd.f32 0.0, %v2966
        %v2968 = vpop.f32.mrf.mxu0
        %v2969 = vpop.f32.mrf.mxu0
        %v2970 = vadd.f32 0.0, %v2969
        %v2971 = vpop.f32.mrf.mxu0
        %2972 = vmatprep.mubr.bf16.mxu0 0
        %2973 = vmatmul.mubr.bf16.gmra.mxu0 %v2817
        %v2974 = vpop.f32.mrf.mxu0
        %v2975 = vadd.f32 0.0, %v2974
        %v2976 = vpop.f32.mrf.mxu0
        %v2977 = vpop.f32.mrf.mxu0
        %v2978 = vadd.f32 0.0, %v2977
        %v2979 = vpop.f32.mrf.mxu0
        %2980 = vmatprep.mubr.bf16.mxu0 0
        %2981 = vmatmul.mubr.bf16.gmra.mxu0 %v2818
        %v2982 = vpop.f32.mrf.mxu0
        %v2983 = vadd.f32 0.0, %v2982
        %v2984 = vpop.f32.mrf.mxu0
        %v2985 = vpop.f32.mrf.mxu0
        %v2986 = vadd.f32 0.0, %v2985
        %v2987 = vpop.f32.mrf.mxu0
        %2988 = vmatprep.mubr.bf16.mxu0 0
        %2989 = vmatmul.mubr.bf16.gmra.mxu0 %v2819
        %v2990 = vpop.f32.mrf.mxu0
        %v2991 = vadd.f32 0.0, %v2990
        %v2992 = vpop.f32.mrf.mxu0
        %v2993 = vpop.f32.mrf.mxu0
        %v2994 = vadd.f32 0.0, %v2993
        %v2995 = vpop.f32.mrf.mxu0
        %2996 = vmatprep.mubr.bf16.mxu0 0
        %2997 = vmatmul.mubr.bf16.gmra.mxu0 %v2820
        %v2998 = vpop.f32.mrf.mxu0
        %v2999 = vadd.f32 0.0, %v2998
        %v3000 = vpop.f32.mrf.mxu0
        %v3001 = vpop.f32.mrf.mxu0
        %v3002 = vadd.f32 0.0, %v3001
        %v3003 = vpop.f32.mrf.mxu0
        %3004 = vmatprep.mubr.bf16.mxu0 0
        %3005 = vmatmul.mubr.bf16.gmra.mxu0 %v2821
        %v3006 = vpop.f32.mrf.mxu0
        %v3007 = vadd.f32 0.0, %v3006
        %v3008 = vpop.f32.mrf.mxu0
        %v3009 = vpop.f32.mrf.mxu0
        %v3010 = vadd.f32 0.0, %v3009
        %v3011 = vpop.f32.mrf.mxu0
        %3012 = vmatprep.mubr.bf16.mxu0 0
        %3013 = vmatmul.mubr.bf16.gmra.mxu0 %v2822
        %v3014 = vpop.f32.mrf.mxu0
        %v3015 = vadd.f32 0.0, %v3014
        %v3016 = vpop.f32.mrf.mxu0
        %v3017 = vpop.f32.mrf.mxu0
        %v3018 = vadd.f32 0.0, %v3017
        %v3019 = vpop.f32.mrf.mxu0
        %3020 = vmatprep.mubr.bf16.mxu0 0
        %3021 = vmatmul.mubr.bf16.gmra.mxu0 %v2823
        %v3022 = vpop.f32.mrf.mxu0
        %v3023 = vadd.f32 0.0, %v3022
        %v3024 = vpop.f32.mrf.mxu0
        %v3025 = vpop.f32.mrf.mxu0
        %v3026 = vadd.f32 0.0, %v3025
        %v3027 = vpop.f32.mrf.mxu0
        %3028 = vmatprep.mubr.bf16.mxu0 0
        %3029 = vmatmul.mubr.bf16.gmra.mxu0 %v2824
        %v3030 = vpop.f32.mrf.mxu0
        %v3031 = vadd.f32 0.0, %v3030
        %v3032 = vpop.f32.mrf.mxu0
        %v3033 = vpop.f32.mrf.mxu0
        %v3034 = vadd.f32 0.0, %v3033
        %v3035 = vpop.f32.mrf.mxu0
        %3036 = vmatprep.mubr.bf16.mxu0 0
        %3037 = vmatmul.mubr.bf16.gmra.mxu0 %v2825
        %v3038 = vpop.f32.mrf.mxu0
        %v3039 = vadd.f32 0.0, %v3038
        %v3040 = vpop.f32.mrf.mxu0
        %v3041 = vpop.f32.mrf.mxu0
        %v3042 = vadd.f32 0.0, %v3041
        %v3043 = vpop.f32.mrf.mxu0
        %3044 = vmatprep.mubr.bf16.mxu0 0
        %3045 = vmatmul.mubr.bf16.gmra.mxu0 %v2826
        %v3046 = vpop.f32.mrf.mxu0
        %v3047 = vadd.f32 0.0, %v3046
        %v3048 = vpop.f32.mrf.mxu0
        %v3049 = vpop.f32.mrf.mxu0
        %v3050 = vadd.f32 0.0, %v3049
        %v3051 = vpop.f32.mrf.mxu0
        %3052 = vdwg.mxu0
        %v3053 = vadd.f32 %v2747, %v2927
        %v3054 = vadd.f32 %v2748, %v2930
        %v3055 = vadd.f32 %v2749, %v2935
        %v3056 = vadd.f32 %v2750, %v2938
        %v3057 = vadd.f32 %v2751, %v2943
        %v3058 = vadd.f32 %v2752, %v2946
        %v3059 = vadd.f32 %v2753, %v2951
        %v3060 = vadd.f32 %v2754, %v2954
        %v3061 = vadd.f32 %v2755, %v2959
        %v3062 = vadd.f32 %v2756, %v2962
        %v3063 = vadd.f32 %v2757, %v2967
        %v3064 = vadd.f32 %v2758, %v2970
        %v3065 = vadd.f32 %v2759, %v2975
        %v3066 = vadd.f32 %v2760, %v2978
        %v3067 = vadd.f32 %v2761, %v2983
        %v3068 = vadd.f32 %v2762, %v2986
        %v3069 = vadd.f32 %v2763, %v2991
        %v3070 = vadd.f32 %v2764, %v2994
        %v3071 = vadd.f32 %v2765, %v2999
        %v3072 = vadd.f32 %v2766, %v3002
        %v3073 = vadd.f32 %v2767, %v3007
        %v3074 = vadd.f32 %v2768, %v3010
        %v3075 = vadd.f32 %v2769, %v3015
        %v3076 = vadd.f32 %v2770, %v3018
        %v3077 = vadd.f32 %v2771, %v3023
        %v3078 = vadd.f32 %v2772, %v3026
        %v3079 = vadd.f32 %v2773, %v3031
        %v3080 = vadd.f32 %v2774, %v3034
        %v3081 = vadd.f32 %v2775, %v3039
        %v3082 = vadd.f32 %v2776, %v3042
        %v3083 = vadd.f32 %v2777, %v3047
        %v3084 = vadd.f32 %v2778, %v3050
        %v3085 = vld [vmem:[%s876 + $0x1] sm:$0xff]
        %v3086 = vld [vmem:[%s876 + $0x9] sm:$0xff]
        %v3087 = vld [vmem:[%s876 + $0x19] sm:$0xff]
        %v3088 = vld [vmem:[%s876 + $0x21] sm:$0xff]
        %v3089 = vld [vmem:[%s876 + $0x31] sm:$0xff]
        %v3090 = vld [vmem:[%s876 + $0x39] sm:$0xff]
        %v3091 = vld [vmem:[%s876 + $0x49] sm:$0xff]
        %v3092 = vld [vmem:[%s876 + $0x51] sm:$0xff]
        %v3093 = vld [vmem:[%s876 + $0x61] sm:$0xff]
        %v3094 = vld [vmem:[%s876 + $0x69] sm:$0xff]
        %v3095 = vld [vmem:[%s876 + $0x79] sm:$0xff]
        %v3096 = vld [vmem:[%s876 + $0x81] sm:$0xff]
        %v3097 = vld [vmem:[%s876 + $0x91] sm:$0xff]
        %v3098 = vld [vmem:[%s876 + $0x99] sm:$0xff]
        %v3099 = vld [vmem:[%s876 + $0xa9] sm:$0xff]
        %v3100 = vld [vmem:[%s876 + $0xb1] sm:$0xff]
        %v3101 = vld [vmem:[%s876 + $0xc1] sm:$0xff]
        %v3102 = vld [vmem:[%s876 + $0xc9] sm:$0xff]
        %v3103 = vld [vmem:[%s876 + $0xd9] sm:$0xff]
        %v3104 = vld [vmem:[%s876 + $0xe1] sm:$0xff]
        %v3105 = vld [vmem:[%s876 + $0xf1] sm:$0xff]
        %v3106 = vld [vmem:[%s876 + $0xf9] sm:$0xff]
        %v3107 = vld [vmem:[%s876 + $0x109] sm:$0xff]
        %v3108 = vld [vmem:[%s876 + $0x111] sm:$0xff]
        %v3109 = vld [vmem:[%s876 + $0x121] sm:$0xff]
        %v3110 = vld [vmem:[%s876 + $0x129] sm:$0xff]
        %v3111 = vld [vmem:[%s876 + $0x139] sm:$0xff]
        %v3112 = vld [vmem:[%s876 + $0x141] sm:$0xff]
        %v3113 = vld [vmem:[%s876 + $0x151] sm:$0xff]
        %v3114 = vld [vmem:[%s876 + $0x159] sm:$0xff]
        %v3115 = vld [vmem:[%s876 + $0x169] sm:$0xff]
        %v3116 = vld [vmem:[%s876 + $0x171] sm:$0xff]
        %v3117 = vpack.c.bf16 %v3086, %v3085
        %v3118 = vpack.c.bf16 %v3088, %v3087
        %v3119 = vpack.c.bf16 %v3090, %v3089
        %v3120 = vpack.c.bf16 %v3092, %v3091
        %v3121 = vpack.c.bf16 %v3094, %v3093
        %v3122 = vpack.c.bf16 %v3096, %v3095
        %v3123 = vpack.c.bf16 %v3098, %v3097
        %v3124 = vpack.c.bf16 %v3100, %v3099
        %v3125 = vpack.c.bf16 %v3102, %v3101
        %v3126 = vpack.c.bf16 %v3104, %v3103
        %v3127 = vpack.c.bf16 %v3106, %v3105
        %v3128 = vpack.c.bf16 %v3108, %v3107
        %v3129 = vpack.c.bf16 %v3110, %v3109
        %v3130 = vpack.c.bf16 %v3112, %v3111
        %v3131 = vpack.c.bf16 %v3114, %v3113
        %v3132 = vpack.c.bf16 %v3116, %v3115
        %s3133 = scalar_lea.vmem [#allocation11], 448
        %v3134 = vld [vmem:[%s3133] sm:$0xf]
        %v3135 = vld [vmem:[%s3133 + $0x4] sm:$0xf]
        %v3136 = vld [vmem:[%s3133 + $0x8] sm:$0xf]
        %v3137 = vld [vmem:[%s3133 + $0xc] sm:$0xf]
        %v3138 = vld [vmem:[%s3133 + $0x10] sm:$0xf]
        %v3139 = vld [vmem:[%s3133 + $0x14] sm:$0xf]
        %v3140 = vld [vmem:[%s3133 + $0x18] sm:$0xf]
        %v3141 = vld [vmem:[%s3133 + $0x1c] sm:$0xf]
        %v3142 = vld [vmem:[%s3133 + $0x20] sm:$0xf]
        %v3143 = vld [vmem:[%s3133 + $0x24] sm:$0xf]
        %v3144 = vld [vmem:[%s3133 + $0x28] sm:$0xf]
        %v3145 = vld [vmem:[%s3133 + $0x2c] sm:$0xf]
        %v3146 = vld [vmem:[%s3133 + $0x30] sm:$0xf]
        %v3147 = vld [vmem:[%s3133 + $0x34] sm:$0xf]
        %v3148 = vld [vmem:[%s3133 + $0x38] sm:$0xf]
        %v3149 = vld [vmem:[%s3133 + $0x3c] sm:$0xf]
        %v3166 = vunpack.c.l.b16 %v3134
        %v3167 = vunpack.c.l.b16 %v3135
        %v3168 = vunpack.c.l.b16 %v3136
        %v3169 = vunpack.c.l.b16 %v3137
        %v3170 = vunpack.c.l.b16 %v3138
        %v3171 = vunpack.c.l.b16 %v3139
        %v3172 = vunpack.c.l.b16 %v3140
        %v3173 = vunpack.c.l.b16 %v3141
        %v3174 = vunpack.c.l.b16 %v3142
        %v3175 = vunpack.c.l.b16 %v3143
        %v3176 = vunpack.c.l.b16 %v3144
        %v3177 = vunpack.c.l.b16 %v3145
        %v3178 = vunpack.c.l.b16 %v3146
        %v3179 = vunpack.c.l.b16 %v3147
        %v3180 = vunpack.c.l.b16 %v3148
        %v3181 = vunpack.c.l.b16 %v3149
        %v3182 = vpack.c.b16 %v3167, %v3166
        %v3183 = vpack.c.b16 %v3169, %v3168
        %v3184 = vpack.c.b16 %v3171, %v3170
        %v3185 = vpack.c.b16 %v3173, %v3172
        %v3186 = vpack.c.b16 %v3175, %v3174
        %v3187 = vpack.c.b16 %v3177, %v3176
        %v3188 = vpack.c.b16 %v3179, %v3178
        %v3189 = vpack.c.b16 %v3181, %v3180
        %3198 = vmatprep.subr.bf16.mxu0 0
        %3199 = vmatpush1.bf16.msra.mxu0 %v3189
        %3200 = vmatprep.subr.bf16.mxu0 0
        %3201 = vmatpush1.bf16.msra.mxu0 %v3188
        %3202 = vmatprep.subr.bf16.mxu0 0
        %3203 = vmatpush1.bf16.msra.mxu0 %v3187
        %3204 = vmatprep.subr.bf16.mxu0 0
        %3205 = vmatpush1.bf16.msra.mxu0 %v3186
        %3206 = vmatprep.subr.bf16.mxu0 0
        %3207 = vmatpush1.bf16.msra.mxu0 %v3185
        %3208 = vmatprep.subr.bf16.mxu0 0
        %3209 = vmatpush1.bf16.msra.mxu0 %v3184
        %3210 = vmatprep.subr.bf16.mxu0 0
        %3211 = vmatpush1.bf16.msra.mxu0 %v3183
        %3212 = vmatprep.subr.bf16.mxu0 0
        %3213 = vmatpush1.bf16.msra.mxu0 %v3182
        %3214 = vmatprep.subr.bf16.mxu0 0
        %3215 = vmatpush2.bf16.msra.mxu0 0
        %3216 = vmatprep.subr.bf16.mxu0 0
        %3217 = vmatpush2.bf16.msra.mxu0 0
        %3218 = vmatprep.subr.bf16.mxu0 0
        %3219 = vmatpush2.bf16.msra.mxu0 0
        %3220 = vmatprep.subr.bf16.mxu0 0
        %3221 = vmatpush2.bf16.msra.mxu0 0
        %3222 = vmatprep.subr.bf16.mxu0 0
        %3223 = vmatpush2.bf16.msra.mxu0 0
        %3224 = vmatprep.subr.bf16.mxu0 0
        %3225 = vmatpush2.bf16.msra.mxu0 0
        %3226 = vmatprep.subr.bf16.mxu0 0
        %3227 = vmatpush2.bf16.msra.mxu0 0
        %3228 = vmatprep.subr.bf16.mxu0 0
        %3229 = vmatpush2.bf16.msra.mxu0 0
        %3230 = vmatprep.mubr.bf16.mxu0 0
        %3231 = vmatmul.mubr.bf16.gmra.mxu0 %v3117
        %v3232 = vpop.f32.mrf.mxu0
        %v3233 = vadd.f32 0.0, %v3232
        %v3234 = vpop.f32.mrf.mxu0
        %v3235 = vpop.f32.mrf.mxu0
        %v3236 = vadd.f32 0.0, %v3235
        %v3237 = vpop.f32.mrf.mxu0
        %3238 = vmatprep.mubr.bf16.mxu0 0
        %3239 = vmatmul.mubr.bf16.gmra.mxu0 %v3118
        %v3240 = vpop.f32.mrf.mxu0
        %v3241 = vadd.f32 0.0, %v3240
        %v3242 = vpop.f32.mrf.mxu0
        %v3243 = vpop.f32.mrf.mxu0
        %v3244 = vadd.f32 0.0, %v3243
        %v3245 = vpop.f32.mrf.mxu0
        %3246 = vmatprep.mubr.bf16.mxu0 0
        %3247 = vmatmul.mubr.bf16.gmra.mxu0 %v3119
        %v3248 = vpop.f32.mrf.mxu0
        %v3249 = vadd.f32 0.0, %v3248
        %v3250 = vpop.f32.mrf.mxu0
        %v3251 = vpop.f32.mrf.mxu0
        %v3252 = vadd.f32 0.0, %v3251
        %v3253 = vpop.f32.mrf.mxu0
        %3254 = vmatprep.mubr.bf16.mxu0 0
        %3255 = vmatmul.mubr.bf16.gmra.mxu0 %v3120
        %v3256 = vpop.f32.mrf.mxu0
        %v3257 = vadd.f32 0.0, %v3256
        %v3258 = vpop.f32.mrf.mxu0
        %v3259 = vpop.f32.mrf.mxu0
        %v3260 = vadd.f32 0.0, %v3259
        %v3261 = vpop.f32.mrf.mxu0
        %3262 = vmatprep.mubr.bf16.mxu0 0
        %3263 = vmatmul.mubr.bf16.gmra.mxu0 %v3121
        %v3264 = vpop.f32.mrf.mxu0
        %v3265 = vadd.f32 0.0, %v3264
        %v3266 = vpop.f32.mrf.mxu0
        %v3267 = vpop.f32.mrf.mxu0
        %v3268 = vadd.f32 0.0, %v3267
        %v3269 = vpop.f32.mrf.mxu0
        %3270 = vmatprep.mubr.bf16.mxu0 0
        %3271 = vmatmul.mubr.bf16.gmra.mxu0 %v3122
        %v3272 = vpop.f32.mrf.mxu0
        %v3273 = vadd.f32 0.0, %v3272
        %v3274 = vpop.f32.mrf.mxu0
        %v3275 = vpop.f32.mrf.mxu0
        %v3276 = vadd.f32 0.0, %v3275
        %v3277 = vpop.f32.mrf.mxu0
        %3278 = vmatprep.mubr.bf16.mxu0 0
        %3279 = vmatmul.mubr.bf16.gmra.mxu0 %v3123
        %v3280 = vpop.f32.mrf.mxu0
        %v3281 = vadd.f32 0.0, %v3280
        %v3282 = vpop.f32.mrf.mxu0
        %v3283 = vpop.f32.mrf.mxu0
        %v3284 = vadd.f32 0.0, %v3283
        %v3285 = vpop.f32.mrf.mxu0
        %3286 = vmatprep.mubr.bf16.mxu0 0
        %3287 = vmatmul.mubr.bf16.gmra.mxu0 %v3124
        %v3288 = vpop.f32.mrf.mxu0
        %v3289 = vadd.f32 0.0, %v3288
        %v3290 = vpop.f32.mrf.mxu0
        %v3291 = vpop.f32.mrf.mxu0
        %v3292 = vadd.f32 0.0, %v3291
        %v3293 = vpop.f32.mrf.mxu0
        %3294 = vmatprep.mubr.bf16.mxu0 0
        %3295 = vmatmul.mubr.bf16.gmra.mxu0 %v3125
        %v3296 = vpop.f32.mrf.mxu0
        %v3297 = vadd.f32 0.0, %v3296
        %v3298 = vpop.f32.mrf.mxu0
        %v3299 = vpop.f32.mrf.mxu0
        %v3300 = vadd.f32 0.0, %v3299
        %v3301 = vpop.f32.mrf.mxu0
        %3302 = vmatprep.mubr.bf16.mxu0 0
        %3303 = vmatmul.mubr.bf16.gmra.mxu0 %v3126
        %v3304 = vpop.f32.mrf.mxu0
        %v3305 = vadd.f32 0.0, %v3304
        %v3306 = vpop.f32.mrf.mxu0
        %v3307 = vpop.f32.mrf.mxu0
        %v3308 = vadd.f32 0.0, %v3307
        %v3309 = vpop.f32.mrf.mxu0
        %3310 = vmatprep.mubr.bf16.mxu0 0
        %3311 = vmatmul.mubr.bf16.gmra.mxu0 %v3127
        %v3312 = vpop.f32.mrf.mxu0
        %v3313 = vadd.f32 0.0, %v3312
        %v3314 = vpop.f32.mrf.mxu0
        %v3315 = vpop.f32.mrf.mxu0
        %v3316 = vadd.f32 0.0, %v3315
        %v3317 = vpop.f32.mrf.mxu0
        %3318 = vmatprep.mubr.bf16.mxu0 0
        %3319 = vmatmul.mubr.bf16.gmra.mxu0 %v3128
        %v3320 = vpop.f32.mrf.mxu0
        %v3321 = vadd.f32 0.0, %v3320
        %v3322 = vpop.f32.mrf.mxu0
        %v3323 = vpop.f32.mrf.mxu0
        %v3324 = vadd.f32 0.0, %v3323
        %v3325 = vpop.f32.mrf.mxu0
        %3326 = vmatprep.mubr.bf16.mxu0 0
        %3327 = vmatmul.mubr.bf16.gmra.mxu0 %v3129
        %v3328 = vpop.f32.mrf.mxu0
        %v3329 = vadd.f32 0.0, %v3328
        %v3330 = vpop.f32.mrf.mxu0
        %v3331 = vpop.f32.mrf.mxu0
        %v3332 = vadd.f32 0.0, %v3331
        %v3333 = vpop.f32.mrf.mxu0
        %3334 = vmatprep.mubr.bf16.mxu0 0
        %3335 = vmatmul.mubr.bf16.gmra.mxu0 %v3130
        %v3336 = vpop.f32.mrf.mxu0
        %v3337 = vadd.f32 0.0, %v3336
        %v3338 = vpop.f32.mrf.mxu0
        %v3339 = vpop.f32.mrf.mxu0
        %v3340 = vadd.f32 0.0, %v3339
        %v3341 = vpop.f32.mrf.mxu0
        %3342 = vmatprep.mubr.bf16.mxu0 0
        %3343 = vmatmul.mubr.bf16.gmra.mxu0 %v3131
        %v3344 = vpop.f32.mrf.mxu0
        %v3345 = vadd.f32 0.0, %v3344
        %v3346 = vpop.f32.mrf.mxu0
        %v3347 = vpop.f32.mrf.mxu0
        %v3348 = vadd.f32 0.0, %v3347
        %v3349 = vpop.f32.mrf.mxu0
        %3350 = vmatprep.mubr.bf16.mxu0 0
        %3351 = vmatmul.mubr.bf16.gmra.mxu0 %v3132
        %v3352 = vpop.f32.mrf.mxu0
        %v3353 = vadd.f32 0.0, %v3352
        %v3354 = vpop.f32.mrf.mxu0
        %v3355 = vpop.f32.mrf.mxu0
        %v3356 = vadd.f32 0.0, %v3355
        %v3357 = vpop.f32.mrf.mxu0
        %3358 = vdwg.mxu0
        %v3359 = vadd.f32 %v3053, %v3233
        %v3360 = vadd.f32 %v3054, %v3236
        %v3361 = vadd.f32 %v3055, %v3241
        %v3362 = vadd.f32 %v3056, %v3244
        %v3363 = vadd.f32 %v3057, %v3249
        %v3364 = vadd.f32 %v3058, %v3252
        %v3365 = vadd.f32 %v3059, %v3257
        %v3366 = vadd.f32 %v3060, %v3260
        %v3367 = vadd.f32 %v3061, %v3265
        %v3368 = vadd.f32 %v3062, %v3268
        %v3369 = vadd.f32 %v3063, %v3273
        %v3370 = vadd.f32 %v3064, %v3276
        %v3371 = vadd.f32 %v3065, %v3281
        %v3372 = vadd.f32 %v3066, %v3284
        %v3373 = vadd.f32 %v3067, %v3289
        %v3374 = vadd.f32 %v3068, %v3292
        %v3375 = vadd.f32 %v3069, %v3297
        %v3376 = vadd.f32 %v3070, %v3300
        %v3377 = vadd.f32 %v3071, %v3305
        %v3378 = vadd.f32 %v3072, %v3308
        %v3379 = vadd.f32 %v3073, %v3313
        %v3380 = vadd.f32 %v3074, %v3316
        %v3381 = vadd.f32 %v3075, %v3321
        %v3382 = vadd.f32 %v3076, %v3324
        %v3383 = vadd.f32 %v3077, %v3329
        %v3384 = vadd.f32 %v3078, %v3332
        %v3385 = vadd.f32 %v3079, %v3337
        %v3386 = vadd.f32 %v3080, %v3340
        %v3387 = vadd.f32 %v3081, %v3345
        %v3388 = vadd.f32 %v3082, %v3348
        %v3389 = vadd.f32 %v3083, %v3353
        %v3390 = vadd.f32 %v3084, %v3356
        %v3391 = vld [vmem:[%s973 + $0x1] sm:$0xff]
        %v3392 = vld [vmem:[%s973 + $0x9] sm:$0xff]
        %v3393 = vld [vmem:[%s973 + $0x19] sm:$0xff]
        %v3394 = vld [vmem:[%s973 + $0x21] sm:$0xff]
        %v3395 = vld [vmem:[%s973 + $0x31] sm:$0xff]
        %v3396 = vld [vmem:[%s973 + $0x39] sm:$0xff]
        %v3397 = vld [vmem:[%s973 + $0x49] sm:$0xff]
        %v3398 = vld [vmem:[%s973 + $0x51] sm:$0xff]
        %v3399 = vld [vmem:[%s973 + $0x61] sm:$0xff]
        %v3400 = vld [vmem:[%s973 + $0x69] sm:$0xff]
        %v3401 = vld [vmem:[%s973 + $0x79] sm:$0xff]
        %v3402 = vld [vmem:[%s973 + $0x81] sm:$0xff]
        %v3403 = vld [vmem:[%s973 + $0x91] sm:$0xff]
        %v3404 = vld [vmem:[%s973 + $0x99] sm:$0xff]
        %v3405 = vld [vmem:[%s973 + $0xa9] sm:$0xff]
        %v3406 = vld [vmem:[%s973 + $0xb1] sm:$0xff]
        %v3407 = vld [vmem:[%s973 + $0xc1] sm:$0xff]
        %v3408 = vld [vmem:[%s973 + $0xc9] sm:$0xff]
        %v3409 = vld [vmem:[%s973 + $0xd9] sm:$0xff]
        %v3410 = vld [vmem:[%s973 + $0xe1] sm:$0xff]
        %v3411 = vld [vmem:[%s973 + $0xf1] sm:$0xff]
        %v3412 = vld [vmem:[%s973 + $0xf9] sm:$0xff]
        %v3413 = vld [vmem:[%s973 + $0x109] sm:$0xff]
        %v3414 = vld [vmem:[%s973 + $0x111] sm:$0xff]
        %v3415 = vld [vmem:[%s973 + $0x121] sm:$0xff]
        %v3416 = vld [vmem:[%s973 + $0x129] sm:$0xff]
        %v3417 = vld [vmem:[%s973 + $0x139] sm:$0xff]
        %v3418 = vld [vmem:[%s973 + $0x141] sm:$0xff]
        %v3419 = vld [vmem:[%s973 + $0x151] sm:$0xff]
        %v3420 = vld [vmem:[%s973 + $0x159] sm:$0xff]
        %v3421 = vld [vmem:[%s973 + $0x169] sm:$0xff]
        %v3422 = vld [vmem:[%s973 + $0x171] sm:$0xff]
        %v3423 = vpack.c.bf16 %v3392, %v3391
        %v3424 = vpack.c.bf16 %v3394, %v3393
        %v3425 = vpack.c.bf16 %v3396, %v3395
        %v3426 = vpack.c.bf16 %v3398, %v3397
        %v3427 = vpack.c.bf16 %v3400, %v3399
        %v3428 = vpack.c.bf16 %v3402, %v3401
        %v3429 = vpack.c.bf16 %v3404, %v3403
        %v3430 = vpack.c.bf16 %v3406, %v3405
        %v3431 = vpack.c.bf16 %v3408, %v3407
        %v3432 = vpack.c.bf16 %v3410, %v3409
        %v3433 = vpack.c.bf16 %v3412, %v3411
        %v3434 = vpack.c.bf16 %v3414, %v3413
        %v3435 = vpack.c.bf16 %v3416, %v3415
        %v3436 = vpack.c.bf16 %v3418, %v3417
        %v3437 = vpack.c.bf16 %v3420, %v3419
        %v3438 = vpack.c.bf16 %v3422, %v3421
        %s3439 = scalar_lea.vmem [#allocation11], 512
        %v3440 = vld [vmem:[%s3439] sm:$0xf]
        %v3441 = vld [vmem:[%s3439 + $0x4] sm:$0xf]
        %v3442 = vld [vmem:[%s3439 + $0x8] sm:$0xf]
        %v3443 = vld [vmem:[%s3439 + $0xc] sm:$0xf]
        %v3444 = vld [vmem:[%s3439 + $0x10] sm:$0xf]
        %v3445 = vld [vmem:[%s3439 + $0x14] sm:$0xf]
        %v3446 = vld [vmem:[%s3439 + $0x18] sm:$0xf]
        %v3447 = vld [vmem:[%s3439 + $0x1c] sm:$0xf]
        %v3448 = vld [vmem:[%s3439 + $0x20] sm:$0xf]
        %v3449 = vld [vmem:[%s3439 + $0x24] sm:$0xf]
        %v3450 = vld [vmem:[%s3439 + $0x28] sm:$0xf]
        %v3451 = vld [vmem:[%s3439 + $0x2c] sm:$0xf]
        %v3452 = vld [vmem:[%s3439 + $0x30] sm:$0xf]
        %v3453 = vld [vmem:[%s3439 + $0x34] sm:$0xf]
        %v3454 = vld [vmem:[%s3439 + $0x38] sm:$0xf]
        %v3455 = vld [vmem:[%s3439 + $0x3c] sm:$0xf]
        %v3472 = vunpack.c.l.b16 %v3440
        %v3473 = vunpack.c.l.b16 %v3441
        %v3474 = vunpack.c.l.b16 %v3442
        %v3475 = vunpack.c.l.b16 %v3443
        %v3476 = vunpack.c.l.b16 %v3444
        %v3477 = vunpack.c.l.b16 %v3445
        %v3478 = vunpack.c.l.b16 %v3446
        %v3479 = vunpack.c.l.b16 %v3447
        %v3480 = vunpack.c.l.b16 %v3448
        %v3481 = vunpack.c.l.b16 %v3449
        %v3482 = vunpack.c.l.b16 %v3450
        %v3483 = vunpack.c.l.b16 %v3451
        %v3484 = vunpack.c.l.b16 %v3452
        %v3485 = vunpack.c.l.b16 %v3453
        %v3486 = vunpack.c.l.b16 %v3454
        %v3487 = vunpack.c.l.b16 %v3455
        %v3488 = vpack.c.b16 %v3473, %v3472
        %v3489 = vpack.c.b16 %v3475, %v3474
        %v3490 = vpack.c.b16 %v3477, %v3476
        %v3491 = vpack.c.b16 %v3479, %v3478
        %v3492 = vpack.c.b16 %v3481, %v3480
        %v3493 = vpack.c.b16 %v3483, %v3482
        %v3494 = vpack.c.b16 %v3485, %v3484
        %v3495 = vpack.c.b16 %v3487, %v3486
        %3504 = vmatprep.subr.bf16.mxu0 0
        %3505 = vmatpush1.bf16.msra.mxu0 %v3495
        %3506 = vmatprep.subr.bf16.mxu0 0
        %3507 = vmatpush1.bf16.msra.mxu0 %v3494
        %3508 = vmatprep.subr.bf16.mxu0 0
        %3509 = vmatpush1.bf16.msra.mxu0 %v3493
        %3510 = vmatprep.subr.bf16.mxu0 0
        %3511 = vmatpush1.bf16.msra.mxu0 %v3492
        %3512 = vmatprep.subr.bf16.mxu0 0
        %3513 = vmatpush1.bf16.msra.mxu0 %v3491
        %3514 = vmatprep.subr.bf16.mxu0 0
        %3515 = vmatpush1.bf16.msra.mxu0 %v3490
        %3516 = vmatprep.subr.bf16.mxu0 0
        %3517 = vmatpush1.bf16.msra.mxu0 %v3489
        %3518 = vmatprep.subr.bf16.mxu0 0
        %3519 = vmatpush1.bf16.msra.mxu0 %v3488
        %3520 = vmatprep.subr.bf16.mxu0 0
        %3521 = vmatpush2.bf16.msra.mxu0 0
        %3522 = vmatprep.subr.bf16.mxu0 0
        %3523 = vmatpush2.bf16.msra.mxu0 0
        %3524 = vmatprep.subr.bf16.mxu0 0
        %3525 = vmatpush2.bf16.msra.mxu0 0
        %3526 = vmatprep.subr.bf16.mxu0 0
        %3527 = vmatpush2.bf16.msra.mxu0 0
        %3528 = vmatprep.subr.bf16.mxu0 0
        %3529 = vmatpush2.bf16.msra.mxu0 0
        %3530 = vmatprep.subr.bf16.mxu0 0
        %3531 = vmatpush2.bf16.msra.mxu0 0
        %3532 = vmatprep.subr.bf16.mxu0 0
        %3533 = vmatpush2.bf16.msra.mxu0 0
        %3534 = vmatprep.subr.bf16.mxu0 0
        %3535 = vmatpush2.bf16.msra.mxu0 0
        %3536 = vmatprep.mubr.bf16.mxu0 0
        %3537 = vmatmul.mubr.bf16.gmra.mxu0 %v3423
        %v3538 = vpop.f32.mrf.mxu0
        %v3539 = vadd.f32 0.0, %v3538
        %v3540 = vpop.f32.mrf.mxu0
        %v3541 = vpop.f32.mrf.mxu0
        %v3542 = vadd.f32 0.0, %v3541
        %v3543 = vpop.f32.mrf.mxu0
        %3544 = vmatprep.mubr.bf16.mxu0 0
        %3545 = vmatmul.mubr.bf16.gmra.mxu0 %v3424
        %v3546 = vpop.f32.mrf.mxu0
        %v3547 = vadd.f32 0.0, %v3546
        %v3548 = vpop.f32.mrf.mxu0
        %v3549 = vpop.f32.mrf.mxu0
        %v3550 = vadd.f32 0.0, %v3549
        %v3551 = vpop.f32.mrf.mxu0
        %3552 = vmatprep.mubr.bf16.mxu0 0
        %3553 = vmatmul.mubr.bf16.gmra.mxu0 %v3425
        %v3554 = vpop.f32.mrf.mxu0
        %v3555 = vadd.f32 0.0, %v3554
        %v3556 = vpop.f32.mrf.mxu0
        %v3557 = vpop.f32.mrf.mxu0
        %v3558 = vadd.f32 0.0, %v3557
        %v3559 = vpop.f32.mrf.mxu0
        %3560 = vmatprep.mubr.bf16.mxu0 0
        %3561 = vmatmul.mubr.bf16.gmra.mxu0 %v3426
        %v3562 = vpop.f32.mrf.mxu0
        %v3563 = vadd.f32 0.0, %v3562
        %v3564 = vpop.f32.mrf.mxu0
        %v3565 = vpop.f32.mrf.mxu0
        %v3566 = vadd.f32 0.0, %v3565
        %v3567 = vpop.f32.mrf.mxu0
        %3568 = vmatprep.mubr.bf16.mxu0 0
        %3569 = vmatmul.mubr.bf16.gmra.mxu0 %v3427
        %v3570 = vpop.f32.mrf.mxu0
        %v3571 = vadd.f32 0.0, %v3570
        %v3572 = vpop.f32.mrf.mxu0
        %v3573 = vpop.f32.mrf.mxu0
        %v3574 = vadd.f32 0.0, %v3573
        %v3575 = vpop.f32.mrf.mxu0
        %3576 = vmatprep.mubr.bf16.mxu0 0
        %3577 = vmatmul.mubr.bf16.gmra.mxu0 %v3428
        %v3578 = vpop.f32.mrf.mxu0
        %v3579 = vadd.f32 0.0, %v3578
        %v3580 = vpop.f32.mrf.mxu0
        %v3581 = vpop.f32.mrf.mxu0
        %v3582 = vadd.f32 0.0, %v3581
        %v3583 = vpop.f32.mrf.mxu0
        %3584 = vmatprep.mubr.bf16.mxu0 0
        %3585 = vmatmul.mubr.bf16.gmra.mxu0 %v3429
        %v3586 = vpop.f32.mrf.mxu0
        %v3587 = vadd.f32 0.0, %v3586
        %v3588 = vpop.f32.mrf.mxu0
        %v3589 = vpop.f32.mrf.mxu0
        %v3590 = vadd.f32 0.0, %v3589
        %v3591 = vpop.f32.mrf.mxu0
        %3592 = vmatprep.mubr.bf16.mxu0 0
        %3593 = vmatmul.mubr.bf16.gmra.mxu0 %v3430
        %v3594 = vpop.f32.mrf.mxu0
        %v3595 = vadd.f32 0.0, %v3594
        %v3596 = vpop.f32.mrf.mxu0
        %v3597 = vpop.f32.mrf.mxu0
        %v3598 = vadd.f32 0.0, %v3597
        %v3599 = vpop.f32.mrf.mxu0
        %3600 = vmatprep.mubr.bf16.mxu0 0
        %3601 = vmatmul.mubr.bf16.gmra.mxu0 %v3431
        %v3602 = vpop.f32.mrf.mxu0
        %v3603 = vadd.f32 0.0, %v3602
        %v3604 = vpop.f32.mrf.mxu0
        %v3605 = vpop.f32.mrf.mxu0
        %v3606 = vadd.f32 0.0, %v3605
        %v3607 = vpop.f32.mrf.mxu0
        %3608 = vmatprep.mubr.bf16.mxu0 0
        %3609 = vmatmul.mubr.bf16.gmra.mxu0 %v3432
        %v3610 = vpop.f32.mrf.mxu0
        %v3611 = vadd.f32 0.0, %v3610
        %v3612 = vpop.f32.mrf.mxu0
        %v3613 = vpop.f32.mrf.mxu0
        %v3614 = vadd.f32 0.0, %v3613
        %v3615 = vpop.f32.mrf.mxu0
        %3616 = vmatprep.mubr.bf16.mxu0 0
        %3617 = vmatmul.mubr.bf16.gmra.mxu0 %v3433
        %v3618 = vpop.f32.mrf.mxu0
        %v3619 = vadd.f32 0.0, %v3618
        %v3620 = vpop.f32.mrf.mxu0
        %v3621 = vpop.f32.mrf.mxu0
        %v3622 = vadd.f32 0.0, %v3621
        %v3623 = vpop.f32.mrf.mxu0
        %3624 = vmatprep.mubr.bf16.mxu0 0
        %3625 = vmatmul.mubr.bf16.gmra.mxu0 %v3434
        %v3626 = vpop.f32.mrf.mxu0
        %v3627 = vadd.f32 0.0, %v3626
        %v3628 = vpop.f32.mrf.mxu0
        %v3629 = vpop.f32.mrf.mxu0
        %v3630 = vadd.f32 0.0, %v3629
        %v3631 = vpop.f32.mrf.mxu0
        %3632 = vmatprep.mubr.bf16.mxu0 0
        %3633 = vmatmul.mubr.bf16.gmra.mxu0 %v3435
        %v3634 = vpop.f32.mrf.mxu0
        %v3635 = vadd.f32 0.0, %v3634
        %v3636 = vpop.f32.mrf.mxu0
        %v3637 = vpop.f32.mrf.mxu0
        %v3638 = vadd.f32 0.0, %v3637
        %v3639 = vpop.f32.mrf.mxu0
        %3640 = vmatprep.mubr.bf16.mxu0 0
        %3641 = vmatmul.mubr.bf16.gmra.mxu0 %v3436
        %v3642 = vpop.f32.mrf.mxu0
        %v3643 = vadd.f32 0.0, %v3642
        %v3644 = vpop.f32.mrf.mxu0
        %v3645 = vpop.f32.mrf.mxu0
        %v3646 = vadd.f32 0.0, %v3645
        %v3647 = vpop.f32.mrf.mxu0
        %3648 = vmatprep.mubr.bf16.mxu0 0
        %3649 = vmatmul.mubr.bf16.gmra.mxu0 %v3437
        %v3650 = vpop.f32.mrf.mxu0
        %v3651 = vadd.f32 0.0, %v3650
        %v3652 = vpop.f32.mrf.mxu0
        %v3653 = vpop.f32.mrf.mxu0
        %v3654 = vadd.f32 0.0, %v3653
        %v3655 = vpop.f32.mrf.mxu0
        %3656 = vmatprep.mubr.bf16.mxu0 0
        %3657 = vmatmul.mubr.bf16.gmra.mxu0 %v3438
        %v3658 = vpop.f32.mrf.mxu0
        %v3659 = vadd.f32 0.0, %v3658
        %v3660 = vpop.f32.mrf.mxu0
        %v3661 = vpop.f32.mrf.mxu0
        %v3662 = vadd.f32 0.0, %v3661
        %v3663 = vpop.f32.mrf.mxu0
        %3664 = vdwg.mxu0
        %v3665 = vadd.f32 %v3359, %v3539
        %v3666 = vadd.f32 %v3360, %v3542
        %v3667 = vadd.f32 %v3361, %v3547
        %v3668 = vadd.f32 %v3362, %v3550
        %v3669 = vadd.f32 %v3363, %v3555
        %v3670 = vadd.f32 %v3364, %v3558
        %v3671 = vadd.f32 %v3365, %v3563
        %v3672 = vadd.f32 %v3366, %v3566
        %v3673 = vadd.f32 %v3367, %v3571
        %v3674 = vadd.f32 %v3368, %v3574
        %v3675 = vadd.f32 %v3369, %v3579
        %v3676 = vadd.f32 %v3370, %v3582
        %v3677 = vadd.f32 %v3371, %v3587
        %v3678 = vadd.f32 %v3372, %v3590
        %v3679 = vadd.f32 %v3373, %v3595
        %v3680 = vadd.f32 %v3374, %v3598
        %v3681 = vadd.f32 %v3375, %v3603
        %v3682 = vadd.f32 %v3376, %v3606
        %v3683 = vadd.f32 %v3377, %v3611
        %v3684 = vadd.f32 %v3378, %v3614
        %v3685 = vadd.f32 %v3379, %v3619
        %v3686 = vadd.f32 %v3380, %v3622
        %v3687 = vadd.f32 %v3381, %v3627
        %v3688 = vadd.f32 %v3382, %v3630
        %v3689 = vadd.f32 %v3383, %v3635
        %v3690 = vadd.f32 %v3384, %v3638
        %v3691 = vadd.f32 %v3385, %v3643
        %v3692 = vadd.f32 %v3386, %v3646
        %v3693 = vadd.f32 %v3387, %v3651
        %v3694 = vadd.f32 %v3388, %v3654
        %v3695 = vadd.f32 %v3389, %v3659
        %v3696 = vadd.f32 %v3390, %v3662
        %v3697 = vld [vmem:[%s5] sm:$0x1]
        %v3699 = vlaneseq
        %v3700 = vshrl.u32 %v3699, 7
        %v3701 = vsub.s32 0, %v3700
        %v3702 = vrot.slane %v3697, %v3701
        %v3704 = vadd.f32 %v3665, %v3702
        %v3705 = vadd.f32 %v3666, %v3702
        %v3706 = vadd.f32 %v3667, %v3702
        %v3707 = vadd.f32 %v3668, %v3702
        %v3708 = vadd.f32 %v3669, %v3702
        %v3709 = vadd.f32 %v3670, %v3702
        %v3710 = vadd.f32 %v3671, %v3702
        %v3711 = vadd.f32 %v3672, %v3702
        %v3712 = vadd.f32 %v3673, %v3702
        %v3713 = vadd.f32 %v3674, %v3702
        %v3714 = vadd.f32 %v3675, %v3702
        %v3715 = vadd.f32 %v3676, %v3702
        %v3716 = vadd.f32 %v3677, %v3702
        %v3717 = vadd.f32 %v3678, %v3702
        %v3718 = vadd.f32 %v3679, %v3702
        %v3719 = vadd.f32 %v3680, %v3702
        %v3720 = vadd.f32 %v3681, %v3702
        %v3721 = vadd.f32 %v3682, %v3702
        %v3722 = vadd.f32 %v3683, %v3702
        %v3723 = vadd.f32 %v3684, %v3702
        %v3724 = vadd.f32 %v3685, %v3702
        %v3725 = vadd.f32 %v3686, %v3702
        %v3726 = vadd.f32 %v3687, %v3702
        %v3727 = vadd.f32 %v3688, %v3702
        %v3728 = vadd.f32 %v3689, %v3702
        %v3729 = vadd.f32 %v3690, %v3702
        %v3730 = vadd.f32 %v3691, %v3702
        %v3731 = vadd.f32 %v3692, %v3702
        %v3732 = vadd.f32 %v3693, %v3702
        %v3733 = vadd.f32 %v3694, %v3702
        %v3734 = vadd.f32 %v3695, %v3702
        %v3735 = vadd.f32 %v3696, %v3702
        %v3736 = vadd.f32 %v3704, 3.0
        %v3737 = vadd.f32 %v3705, 3.0
        %v3738 = vadd.f32 %v3706, 3.0
        %v3739 = vadd.f32 %v3707, 3.0
        %v3740 = vadd.f32 %v3708, 3.0
        %v3741 = vadd.f32 %v3709, 3.0
        %v3742 = vadd.f32 %v3710, 3.0
        %v3743 = vadd.f32 %v3711, 3.0
        %v3744 = vadd.f32 %v3712, 3.0
        %v3745 = vadd.f32 %v3713, 3.0
        %v3746 = vadd.f32 %v3714, 3.0
        %v3747 = vadd.f32 %v3715, 3.0
        %v3748 = vadd.f32 %v3716, 3.0
        %v3749 = vadd.f32 %v3717, 3.0
        %v3750 = vadd.f32 %v3718, 3.0
        %v3751 = vadd.f32 %v3719, 3.0
        %v3752 = vadd.f32 %v3720, 3.0
        %v3753 = vadd.f32 %v3721, 3.0
        %v3754 = vadd.f32 %v3722, 3.0
        %v3755 = vadd.f32 %v3723, 3.0
        %v3756 = vadd.f32 %v3724, 3.0
        %v3757 = vadd.f32 %v3725, 3.0
        %v3758 = vadd.f32 %v3726, 3.0
        %v3759 = vadd.f32 %v3727, 3.0
        %v3760 = vadd.f32 %v3728, 3.0
        %v3761 = vadd.f32 %v3729, 3.0
        %v3762 = vadd.f32 %v3730, 3.0
        %v3763 = vadd.f32 %v3731, 3.0
        %v3764 = vadd.f32 %v3732, 3.0
        %v3765 = vadd.f32 %v3733, 3.0
        %v3766 = vadd.f32 %v3734, 3.0
        %v3767 = vadd.f32 %v3735, 3.0
        %v3768 = vmax.f32 %v3736, 0.0
        %v3769 = vmax.f32 %v3737, 0.0
        %v3770 = vmax.f32 %v3738, 0.0
        %v3771 = vmax.f32 %v3739, 0.0
        %v3772 = vmax.f32 %v3740, 0.0
        %v3773 = vmax.f32 %v3741, 0.0
        %v3774 = vmax.f32 %v3742, 0.0
        %v3775 = vmax.f32 %v3743, 0.0
        %v3776 = vmax.f32 %v3744, 0.0
        %v3777 = vmax.f32 %v3745, 0.0
        %v3778 = vmax.f32 %v3746, 0.0
        %v3779 = vmax.f32 %v3747, 0.0
        %v3780 = vmax.f32 %v3748, 0.0
        %v3781 = vmax.f32 %v3749, 0.0
        %v3782 = vmax.f32 %v3750, 0.0
        %v3783 = vmax.f32 %v3751, 0.0
        %v3784 = vmax.f32 %v3752, 0.0
        %v3785 = vmax.f32 %v3753, 0.0
        %v3786 = vmax.f32 %v3754, 0.0
        %v3787 = vmax.f32 %v3755, 0.0
        %v3788 = vmax.f32 %v3756, 0.0
        %v3789 = vmax.f32 %v3757, 0.0
        %v3790 = vmax.f32 %v3758, 0.0
        %v3791 = vmax.f32 %v3759, 0.0
        %v3792 = vmax.f32 %v3760, 0.0
        %v3793 = vmax.f32 %v3761, 0.0
        %v3794 = vmax.f32 %v3762, 0.0
        %v3795 = vmax.f32 %v3763, 0.0
        %v3796 = vmax.f32 %v3764, 0.0
        %v3797 = vmax.f32 %v3765, 0.0
        %v3798 = vmax.f32 %v3766, 0.0
        %v3799 = vmax.f32 %v3767, 0.0
        %v3800 = vmin.f32 %v3768, 6.0
        %v3801 = vmin.f32 %v3769, 6.0
        %v3802 = vmin.f32 %v3770, 6.0
        %v3803 = vmin.f32 %v3771, 6.0
        %v3804 = vmin.f32 %v3772, 6.0
        %v3805 = vmin.f32 %v3773, 6.0
        %v3806 = vmin.f32 %v3774, 6.0
        %v3807 = vmin.f32 %v3775, 6.0
        %v3808 = vmin.f32 %v3776, 6.0
        %v3809 = vmin.f32 %v3777, 6.0
        %v3810 = vmin.f32 %v3778, 6.0
        %v3811 = vmin.f32 %v3779, 6.0
        %v3812 = vmin.f32 %v3780, 6.0
        %v3813 = vmin.f32 %v3781, 6.0
        %v3814 = vmin.f32 %v3782, 6.0
        %v3815 = vmin.f32 %v3783, 6.0
        %v3816 = vmin.f32 %v3784, 6.0
        %v3817 = vmin.f32 %v3785, 6.0
        %v3818 = vmin.f32 %v3786, 6.0
        %v3819 = vmin.f32 %v3787, 6.0
        %v3820 = vmin.f32 %v3788, 6.0
        %v3821 = vmin.f32 %v3789, 6.0
        %v3822 = vmin.f32 %v3790, 6.0
        %v3823 = vmin.f32 %v3791, 6.0
        %v3824 = vmin.f32 %v3792, 6.0
        %v3825 = vmin.f32 %v3793, 6.0
        %v3826 = vmin.f32 %v3794, 6.0
        %v3827 = vmin.f32 %v3795, 6.0
        %v3828 = vmin.f32 %v3796, 6.0
        %v3829 = vmin.f32 %v3797, 6.0
        %v3830 = vmin.f32 %v3798, 6.0
        %v3831 = vmin.f32 %v3799, 6.0
        %v3832 = vmul.f32 %v3704, %v3800
        %v3833 = vmul.f32 %v3705, %v3801
        %v3834 = vmul.f32 %v3706, %v3802
        %v3835 = vmul.f32 %v3707, %v3803
        %v3836 = vmul.f32 %v3708, %v3804
        %v3837 = vmul.f32 %v3709, %v3805
        %v3838 = vmul.f32 %v3710, %v3806
        %v3839 = vmul.f32 %v3711, %v3807
        %v3840 = vmul.f32 %v3712, %v3808
        %v3841 = vmul.f32 %v3713, %v3809
        %v3842 = vmul.f32 %v3714, %v3810
        %v3843 = vmul.f32 %v3715, %v3811
        %v3844 = vmul.f32 %v3716, %v3812
        %v3845 = vmul.f32 %v3717, %v3813
        %v3846 = vmul.f32 %v3718, %v3814
        %v3847 = vmul.f32 %v3719, %v3815
        %v3848 = vmul.f32 %v3720, %v3816
        %v3849 = vmul.f32 %v3721, %v3817
        %v3850 = vmul.f32 %v3722, %v3818
        %v3851 = vmul.f32 %v3723, %v3819
        %v3852 = vmul.f32 %v3724, %v3820
        %v3853 = vmul.f32 %v3725, %v3821
        %v3854 = vmul.f32 %v3726, %v3822
        %v3855 = vmul.f32 %v3727, %v3823
        %v3856 = vmul.f32 %v3728, %v3824
        %v3857 = vmul.f32 %v3729, %v3825
        %v3858 = vmul.f32 %v3730, %v3826
        %v3859 = vmul.f32 %v3731, %v3827
        %v3860 = vmul.f32 %v3732, %v3828
        %v3861 = vmul.f32 %v3733, %v3829
        %v3862 = vmul.f32 %v3734, %v3830
        %v3863 = vmul.f32 %v3735, %v3831
        %v3864 = vmul.f32 %v3832, 0.16666667
        %v3865 = vmul.f32 %v3833, 0.16666667
        %v3866 = vmul.f32 %v3834, 0.16666667
        %v3867 = vmul.f32 %v3835, 0.16666667
        %v3868 = vmul.f32 %v3836, 0.16666667
        %v3869 = vmul.f32 %v3837, 0.16666667
        %v3870 = vmul.f32 %v3838, 0.16666667
        %v3871 = vmul.f32 %v3839, 0.16666667
        %v3872 = vmul.f32 %v3840, 0.16666667
        %v3873 = vmul.f32 %v3841, 0.16666667
        %v3874 = vmul.f32 %v3842, 0.16666667
        %v3875 = vmul.f32 %v3843, 0.16666667
        %v3876 = vmul.f32 %v3844, 0.16666667
        %v3877 = vmul.f32 %v3845, 0.16666667
        %v3878 = vmul.f32 %v3846, 0.16666667
        %v3879 = vmul.f32 %v3847, 0.16666667
        %v3880 = vmul.f32 %v3848, 0.16666667
        %v3881 = vmul.f32 %v3849, 0.16666667
        %v3882 = vmul.f32 %v3850, 0.16666667
        %v3883 = vmul.f32 %v3851, 0.16666667
        %v3884 = vmul.f32 %v3852, 0.16666667
        %v3885 = vmul.f32 %v3853, 0.16666667
        %v3886 = vmul.f32 %v3854, 0.16666667
        %v3887 = vmul.f32 %v3855, 0.16666667
        %v3888 = vmul.f32 %v3856, 0.16666667
        %v3889 = vmul.f32 %v3857, 0.16666667
        %v3890 = vmul.f32 %v3858, 0.16666667
        %v3891 = vmul.f32 %v3859, 0.16666667
        %v3892 = vmul.f32 %v3860, 0.16666667
        %v3893 = vmul.f32 %v3861, 0.16666667
        %v3894 = vmul.f32 %v3862, 0.16666667
        %v3895 = vmul.f32 %v3863, 0.16666667
        %v3896 = vpack.c.bf16 %v3865, %v3864
        %v3897 = vpack.c.bf16 %v3867, %v3866
        %v3898 = vpack.c.bf16 %v3869, %v3868
        %v3899 = vpack.c.bf16 %v3871, %v3870
        %v3900 = vpack.c.bf16 %v3873, %v3872
        %v3901 = vpack.c.bf16 %v3875, %v3874
        %v3902 = vpack.c.bf16 %v3877, %v3876
        %v3903 = vpack.c.bf16 %v3879, %v3878
        %v3904 = vpack.c.bf16 %v3881, %v3880
        %v3905 = vpack.c.bf16 %v3883, %v3882
        %v3906 = vpack.c.bf16 %v3885, %v3884
        %v3907 = vpack.c.bf16 %v3887, %v3886
        %v3908 = vpack.c.bf16 %v3889, %v3888
        %v3909 = vpack.c.bf16 %v3891, %v3890
        %v3910 = vpack.c.bf16 %v3893, %v3892
        %v3911 = vpack.c.bf16 %v3895, %v3894
        %v3928 = vunpack.c.l.b16 %v3896
        %v3929 = vunpack.c.h.b16 %v3896
        %v3930 = vunpack.c.l.b16 %v3897
        %v3931 = vunpack.c.h.b16 %v3897
        %v3932 = vunpack.c.l.b16 %v3898
        %v3933 = vunpack.c.h.b16 %v3898
        %v3934 = vunpack.c.l.b16 %v3899
        %v3935 = vunpack.c.h.b16 %v3899
        %v3936 = vunpack.c.l.b16 %v3900
        %v3937 = vunpack.c.h.b16 %v3900
        %v3938 = vunpack.c.l.b16 %v3901
        %v3939 = vunpack.c.h.b16 %v3901
        %v3940 = vunpack.c.l.b16 %v3902
        %v3941 = vunpack.c.h.b16 %v3902
        %v3942 = vunpack.c.l.b16 %v3903
        %v3943 = vunpack.c.h.b16 %v3903
        %v3944 = vunpack.c.l.b16 %v3904
        %v3945 = vunpack.c.h.b16 %v3904
        %v3946 = vunpack.c.l.b16 %v3905
        %v3947 = vunpack.c.h.b16 %v3905
        %v3948 = vunpack.c.l.b16 %v3906
        %v3949 = vunpack.c.h.b16 %v3906
        %v3950 = vunpack.c.l.b16 %v3907
        %v3951 = vunpack.c.h.b16 %v3907
        %v3952 = vunpack.c.l.b16 %v3908
        %v3953 = vunpack.c.h.b16 %v3908
        %v3954 = vunpack.c.l.b16 %v3909
        %v3955 = vunpack.c.h.b16 %v3909
        %v3956 = vunpack.c.l.b16 %v3910
        %v3957 = vunpack.c.h.b16 %v3910
        %v3958 = vunpack.c.l.b16 %v3911
        %v3959 = vunpack.c.h.b16 %v3911
        %v3960 = vpack.c.b16 %v3928, %v3928
        %v3961 = vpack.c.b16 %v3929, %v3929
        %v3962 = vpack.c.b16 %v3930, %v3930
        %v3963 = vpack.c.b16 %v3931, %v3931
        %v3964 = vpack.c.b16 %v3932, %v3932
        %v3965 = vpack.c.b16 %v3933, %v3933
        %v3966 = vpack.c.b16 %v3934, %v3934
        %v3967 = vpack.c.b16 %v3935, %v3935
        %v3968 = vpack.c.b16 %v3936, %v3936
        %v3969 = vpack.c.b16 %v3937, %v3937
        %v3970 = vpack.c.b16 %v3938, %v3938
        %v3971 = vpack.c.b16 %v3939, %v3939
        %v3972 = vpack.c.b16 %v3940, %v3940
        %v3973 = vpack.c.b16 %v3941, %v3941
        %v3974 = vpack.c.b16 %v3942, %v3942
        %v3975 = vpack.c.b16 %v3943, %v3943
        %v3976 = vpack.c.b16 %v3944, %v3944
        %v3977 = vpack.c.b16 %v3945, %v3945
        %v3978 = vpack.c.b16 %v3946, %v3946
        %v3979 = vpack.c.b16 %v3947, %v3947
        %v3980 = vpack.c.b16 %v3948, %v3948
        %v3981 = vpack.c.b16 %v3949, %v3949
        %v3982 = vpack.c.b16 %v3950, %v3950
        %v3983 = vpack.c.b16 %v3951, %v3951
        %v3984 = vpack.c.b16 %v3952, %v3952
        %v3985 = vpack.c.b16 %v3953, %v3953
        %v3986 = vpack.c.b16 %v3954, %v3954
        %v3987 = vpack.c.b16 %v3955, %v3955
        %v3988 = vpack.c.b16 %v3956, %v3956
        %v3989 = vpack.c.b16 %v3957, %v3957
        %v3990 = vpack.c.b16 %v3958, %v3958
        %v3991 = vpack.c.b16 %v3959, %v3959
        %4024 = vst [vmem:[%s400] sm:$0xf] %v3960
        %4025 = vst [vmem:[%s400 + $0x4] sm:$0xf] %v3961
        %4026 = vst [vmem:[%s400 + $0x8] sm:$0xf] %v3962
        %4027 = vst [vmem:[%s400 + $0xc] sm:$0xf] %v3963
        %4028 = vst [vmem:[%s400 + $0x10] sm:$0xf] %v3964
        %4029 = vst [vmem:[%s400 + $0x14] sm:$0xf] %v3965
        %4030 = vst [vmem:[%s400 + $0x18] sm:$0xf] %v3966
        %4031 = vst [vmem:[%s400 + $0x1c] sm:$0xf] %v3967
        %4032 = vst [vmem:[%s400 + $0x20] sm:$0xf] %v3968
        %4033 = vst [vmem:[%s400 + $0x24] sm:$0xf] %v3969
        %4034 = vst [vmem:[%s400 + $0x28] sm:$0xf] %v3970
        %4035 = vst [vmem:[%s400 + $0x2c] sm:$0xf] %v3971
        %4036 = vst [vmem:[%s400 + $0x30] sm:$0xf] %v3972
        %4037 = vst [vmem:[%s400 + $0x34] sm:$0xf] %v3973
        %4038 = vst [vmem:[%s400 + $0x38] sm:$0xf] %v3974
        %4039 = vst [vmem:[%s400 + $0x3c] sm:$0xf] %v3975
        %4040 = vst [vmem:[%s400 + $0x40] sm:$0xf] %v3976
        %4041 = vst [vmem:[%s400 + $0x44] sm:$0xf] %v3977
        %4042 = vst [vmem:[%s400 + $0x48] sm:$0xf] %v3978
        %4043 = vst [vmem:[%s400 + $0x4c] sm:$0xf] %v3979
        %4044 = vst [vmem:[%s400 + $0x50] sm:$0xf] %v3980
        %4045 = vst [vmem:[%s400 + $0x54] sm:$0xf] %v3981
        %4046 = vst [vmem:[%s400 + $0x58] sm:$0xf] %v3982
        %4047 = vst [vmem:[%s400 + $0x5c] sm:$0xf] %v3983
        %4048 = vst [vmem:[%s400 + $0x60] sm:$0xf] %v3984
        %4049 = vst [vmem:[%s400 + $0x64] sm:$0xf] %v3985
        %4050 = vst [vmem:[%s400 + $0x68] sm:$0xf] %v3986
        %4051 = vst [vmem:[%s400 + $0x6c] sm:$0xf] %v3987
        %4052 = vst [vmem:[%s400 + $0x70] sm:$0xf] %v3988
        %4053 = vst [vmem:[%s400 + $0x74] sm:$0xf] %v3989
        %4054 = vst [vmem:[%s400 + $0x78] sm:$0xf] %v3990
        %4055 = vst [vmem:[%s400 + $0x7c] sm:$0xf] %v3991
        %s4056 = sand.u32 %s183, 1
        %s4057 = scalar_lea.sflag [#allocation5], %s4056
        %s4058 = sand.u32 %s183, 1
        %s4059 = smul.addr %s4058, 128
        %s4060 = scalar_lea.vmem [#allocation12], %s4059
        // Predicated region
        $region65: #{tpu_custom_call.1} parent=43 // pred_check
          %p4061 = pneg %p193
        $region66: #{tpu_custom_call.1} parent=43 // pred_check_branch
          %4063 = sbr.rel (%p4061) target = $region68
        $region67: #{tpu_custom_call.1} parent=43 // pred_region
          %s4065 = ssub.s32 2048, 2048
          %4066 = vsyncadd %s4057, %s4065
          %s4067 = smul.addr %s29, 32
          %s4068 = smul.addr %s4067, 64
          %s4069 = scalar_lea.hbm %s6, %s4068
          %s4070 = sshll.u32 %s4060, 4
          %s4071 = int_to_ptr.vmem [resolvable:$true] %s4070
          %4076 = dma.vmem_to_hbm [thread:$0]  %s4071, 2048, %s4069, %s4057, 64, 64, 4
        $region68: #{tpu_custom_call.1} parent=43 // pred_fallthru
          _
      $region44: #{tpu_custom_call.1} parent=5 // pred_fallthru
        _
      %p4077 = scmp.le.s32.totalorder 2, %s24
      // Predicated region
      $region69: #{tpu_custom_call.1} parent=5 // pred_check
        %p4078 = pneg %p4077
      $region70: #{tpu_custom_call.1} parent=5 // pred_check_branch
        %4080 = sbr.rel (%p4078) target = $region72
      $region71: #{tpu_custom_call.1} parent=5 // pred_region
        %s4081 = ssub.s32 %s24, 2
        // Predicated region
        $region73: #{tpu_custom_call.1} parent=71 // pred_check
          %p4082 = pneg %p199
        $region74: #{tpu_custom_call.1} parent=71 // pred_check_branch
          %4084 = sbr.rel (%p4082) target = $region76
        $region75: #{tpu_custom_call.1} parent=71 // pred_region
          %s4085 = sand.u32 %s184, 1
          %s4086 = scalar_lea.sflag [#allocation5], %s4085
          %s4087 = sand.u32 %s184, 1
          %s4088 = smul.addr %s4087, 128
          %s4089 = scalar_lea.vmem [#allocation12], %s4088
          %4090 = dma.done %s4086, 2048
        $region76: #{tpu_custom_call.1} parent=71 // pred_fallthru
          _
      $region72: #{tpu_custom_call.1} parent=5 // pred_fallthru
        _
    $region6: #{tpu_custom_call.1} parent=1 // loop_footer
      %s28 = sadd.s32 1, %s24
    $region7: #{tpu_custom_call.1} parent=1 // loop_footer_branch
      %23 = sbr.rel target = $region3
    $region8: #{tpu_custom_call.1} parent=1 // loop_exit
      _
    %4091 = vsyncpa [#allocation4], 1
    %s4092 = scalar_lea.sflag [#allocation4], 1
    %4093 = vsyncpa %s4092, 1
    %4094 = vsyncpa [#allocation7], 1
    %s4095 = scalar_lea.sflag [#allocation7], 1
    %4096 = vsyncpa %s4095, 1
    %4097 = vsyncpa [#allocation10], 1
    %s4098 = scalar_lea.sflag [#allocation10], 1
    %4099 = vsyncpa %s4098, 1
    %4100 = vsyncpa [#allocation5], 1
    %s4101 = scalar_lea.sflag [#allocation5], 1
    %4102 = vsyncpa %s4101, 1

</llo_original>
